<compile_context>
chip_gen: v7x
topology: tpu7x:2x2x1
jax: 0.10.0
libtpu: 0.0.40
codegen_flags: <defaults>
</compile_context>

<pallas_src>
import jax
import jax.numpy as jnp
from jax import lax
from jax.experimental import pallas as pl
from jax.experimental.pallas import tpu as pltpu

# Matmul-operand dtype.  Set to jnp.bfloat16 on v6e/v7x for ~2x DMA bytes and much higher
# MXU throughput; accumulation stays float32 either way.
COMPUTE_DTYPE = jnp.float32
ACC_DTYPE = jnp.float32


# ----------------------------------------------------------------------------- kernels

def _stage1_kernel(pat_ref, xf_ref, w3_ref, b3_ref, w1_ref, b1_ref,
                   br3_ref, d1_ref, pool_ref):
    """Fused: branch3x3 (3x3/s2 conv), branch3x3dbl_1 (1x1 conv), 3x3/s2 max-pool.

    pat_ref : (1, P, 9*Cin)  im2col of x for the 3x3 stride-2 window (P = Ho*Wo)
    xf_ref  : (1, H*W, Cin)  x with spatial flattened (for the 1x1 conv)
    """
    cin = pool_ref.shape[-1]

    # branch3x3: one big matmul + bias + ReLU, dense whole-block store.
    pat = pat_ref[0]                                               # (P, 9*Cin)
    y3 = jnp.dot(pat, w3_ref[...], preferred_element_type=ACC_DTYPE)
    br3_ref[0] = jnp.maximum(y3 + b3_ref[...], 0.0).astype(br3_ref.dtype)

    # branch3x3dbl_1: 1x1 conv == one matmul over all H*W pixels.
    xf = xf_ref[0]                                                 # (H*W, Cin)
    y1 = jnp.dot(xf, w1_ref[...], preferred_element_type=ACC_DTYPE)
    d1_ref[0] = jnp.maximum(y1 + b1_ref[...], 0.0).astype(d1_ref.dtype)

    # branch_pool: 3x3/s2 max-pool == max over the 9 taps already in the im2col block.
    m = pat[:, 0:cin].astype(ACC_DTYPE)
    for t in range(1, 9):
        m = jnp.maximum(m, pat[:, t * cin:(t + 1) * cin].astype(ACC_DTYPE))
    pool_ref[0] = m.astype(pool_ref.dtype)


def _make_conv3x3_s1_kernel(hb, wd, cin, cout):
    """3x3 stride-1 conv (input pre-padded) + bias + ReLU over one band of hb output rows."""
    def kernel(x_ref, w_ref, b_ref, o_ref):
        # x_ref: (1, H+2, W+2, cin) full padded image (stays resident across row tiles)
        # w_ref: (9, cin, cout), b_ref: (1, cout), o_ref: (1, hb, wd, cout)
        r = pl.program_id(1)
        row0 = pl.multiple_of(r * hb, hb)
        xt = x_ref[0, pl.ds(row0, hb + 2)]                         # (hb+2, W+2, cin)
        acc = jnp.zeros((hb * wd, cout), ACC_DTYPE)
        for kh in range(3):
            for kw in range(3):
                patch = xt[kh:kh + hb, kw:kw + wd, :].reshape(hb * wd, cin)
                acc = acc + jnp.dot(patch, w_ref[kh * 3 + kw],
                                    preferred_element_type=ACC_DTYPE)
        y = jnp.maximum(acc + b_ref[...], 0.0)
        o_ref[0] = y.reshape(hb, wd, cout).astype(o_ref.dtype)
    return kernel


def _make_final_kernel(c3, c2, cpool):
    """branch3x3dbl_3 (3x3/s2 conv, single matmul) + direct write of all three branches
    into their channel slices of the concatenated NHWC output slab."""
    def kernel(pat_ref, w_ref, b_ref, br3_ref, pool_ref, o_ref):
        y = jnp.dot(pat_ref[0], w_ref[...], preferred_element_type=ACC_DTYPE)
        d3 = jnp.maximum(y + b_ref[...], 0.0)
        o_ref[0, :, 0:c3] = br3_ref[0].astype(o_ref.dtype)
        o_ref[0, :, c3:c3 + c2] = d3.astype(o_ref.dtype)
        o_ref[0, :, c3 + c2:c3 + c2 + cpool] = pool_ref[0].astype(o_ref.dtype)
    return kernel


# ----------------------------------------------------------------------------- wrappers

def _im2col_3x3(x_nhwc, stride):
    """(N,H,W,C) -> (N, Ho*Wo, 9*C); tap order (kh, kw) row-major, channel fastest.

    Matches w_hwio.reshape(9*C, Cout).
    # TODO(synk): move this stride-2 patch extraction in-kernel (space-to-depth layout)
    # to drop the trace-time im2col materialization once Mosaic strided slices are safe.
    """
    n, h, w, c = x_nhwc.shape
    ho = (h - 3) // stride + 1
    wo = (w - 3) // stride + 1
    taps = []
    for kh in range(3):
        for kw in range(3):
            taps.append(x_nhwc[:, kh:kh + stride * (ho - 1) + 1:stride,
                               kw:kw + stride * (wo - 1) + 1:stride, :])
    pat = jnp.concatenate(taps, axis=-1)                           # (N, Ho, Wo, 9*C)
    return pat.reshape(n, ho * wo, 9 * c), ho, wo


def _stage1(x_nhwc, w3, b3, w1, b1):
    """Fused pallas_call consuming x once: branch3x3, branch3x3dbl_1, branch_pool."""
    n, h, w, cin = x_nhwc.shape
    pat, ho, wo = _im2col_3x3(x_nhwc, stride=2)
    p = ho * wo
    xf = x_nhwc.reshape(n, h * w, cin)
    c3 = w3.shape[-1]
    c1 = w1.shape[-1]

    br3, d1, pool = pl.pallas_call(
        _stage1_kernel,
        out_shape=(
            jax.ShapeDtypeStruct((n, p, c3), jnp.float32),
            jax.ShapeDtypeStruct((n, h * w, c1), jnp.float32),
            jax.ShapeDtypeStruct((n, p, cin), jnp.float32),
        ),
        grid=(n,),
        in_specs=[
            pl.BlockSpec((1, p, 9 * cin), lambda i: (i, 0, 0)),
            pl.BlockSpec((1, h * w, cin), lambda i: (i, 0, 0)),
            pl.BlockSpec((9 * cin, c3), lambda i: (0, 0)),
            pl.BlockSpec((1, c3), lambda i: (0, 0)),
            pl.BlockSpec((cin, c1), lambda i: (0, 0)),
            pl.BlockSpec((1, c1), lambda i: (0, 0)),
        ],
        out_specs=(
            pl.BlockSpec((1, p, c3), lambda i: (i, 0, 0)),
            pl.BlockSpec((1, h * w, c1), lambda i: (i, 0, 0)),
            pl.BlockSpec((1, p, cin), lambda i: (i, 0, 0)),
        ),
        compiler_params=pltpu.CompilerParams(dimension_semantics=("parallel",)),
    )(pat.astype(COMPUTE_DTYPE), xf.astype(COMPUTE_DTYPE),
      w3.astype(COMPUTE_DTYPE), b3.reshape(1, c3).astype(jnp.float32),
      w1.astype(COMPUTE_DTYPE), b1.reshape(1, c1).astype(jnp.float32))
    return br3, d1, pool, ho, wo


def _conv3x3_s1_p1(x_nhwc, w9, b):
    """branch3x3dbl_2: 3x3 conv, stride 1, padding 1 (+BN folded bias + ReLU)."""
    n, h, wd, cin = x_nhwc.shape
    cout = w9.shape[-1]
    xp = jnp.pad(x_nhwc, ((0, 0), (1, 1), (1, 1), (0, 0)))
    hb = 8 if (h % 8 == 0) else h          # row-tile height (extra grid axis for v7x)
    rt = h // hb
    kernel = _make_conv3x3_s1_kernel(hb, wd, cin, cout)
    return pl.pallas_call(
        kernel,
        out_shape=jax.ShapeDtypeStruct((n, h, wd, cout), jnp.float32),
        grid=(n, rt),
        in_specs=[
            pl.BlockSpec((1, h + 2, wd + 2, cin), lambda i, r: (i, 0, 0, 0)),
            pl.BlockSpec((9, cin, cout), lambda i, r: (0, 0, 0)),
            pl.BlockSpec((1, cout), lambda i, r: (0, 0)),
        ],
        out_specs=pl.BlockSpec((1, hb, wd, cout), lambda i, r: (i, r, 0, 0)),
        compiler_params=pltpu.CompilerParams(
            dimension_semantics=("parallel", "parallel")),
    )(xp.astype(COMPUTE_DTYPE), w9.astype(COMPUTE_DTYPE),
      b.reshape(1, cout).astype(jnp.float32))


def _final_stage(d2_nhwc, w23, b23, br3, pool, ho, wo):
    """branch3x3dbl_3 conv + assembly of the concatenated output slab."""
    n = d2_nhwc.shape[0]
    cpool = pool.shape[-1]
    c3 = br3.shape[-1]
    c2 = w23.shape[-1]
    ctot = c3 + c2 + cpool
    pat, ho2, wo2 = _im2col_3x3(d2_nhwc, stride=2)
    assert (ho2, wo2) == (ho, wo)
    p = ho * wo
    kpat = pat.shape[-1]
    kernel = _make_final_kernel(c3, c2, cpool)
    out = pl.pallas_call(
        kernel,
        out_shape=jax.ShapeDtypeStruct((n, p, ctot), jnp.float32),
        grid=(n,),
        in_specs=[
            pl.BlockSpec((1, p, kpat), lambda i: (i, 0, 0)),
            pl.BlockSpec((kpat, c2), lambda i: (0, 0)),
            pl.BlockSpec((1, c2), lambda i: (0, 0)),
            pl.BlockSpec((1, p, c3), lambda i: (i, 0, 0)),
            pl.BlockSpec((1, p, cpool), lambda i: (i, 0, 0)),
        ],
        out_specs=pl.BlockSpec((1, p, ctot), lambda i: (i, 0, 0)),
        compiler_params=pltpu.CompilerParams(dimension_semantics=("parallel",)),
    )(pat.astype(COMPUTE_DTYPE), w23.astype(COMPUTE_DTYPE),
      b23.reshape(1, c2).astype(jnp.float32),
      br3.astype(jnp.float32), pool.astype(jnp.float32))
    return out.reshape(n, ho, wo, ctot)


# ----------------------------------------------------------------------------- params

def init_basic_conv_params(key, cin, cout, k):
    """Deterministic BasicConv2d params with BatchNorm (eval, eps=1e-3) folded into conv.

    Returns (w_hwio, bias): w_hwio has shape (k, k, cin, cout)."""
    kw_, kg, kb, km, kv = jax.random.split(key, 5)
    w = 0.1 * jax.random.normal(kw_, (cout, cin, k, k), jnp.float32)   # OIHW (torch)
    gamma = 1.0 + 0.1 * jax.random.normal(kg, (cout,), jnp.float32)
    beta = 0.1 * jax.random.normal(kb, (cout,), jnp.float32)
    run_mean = 0.1 * jax.random.normal(km, (cout,), jnp.float32)
    run_var = jax.random.uniform(kv, (cout,), jnp.float32, 0.5, 1.5)
    eps = 1e-3
    scale = gamma / jnp.sqrt(run_var + eps)
    w_folded = w * scale[:, None, None, None]
    b_folded = beta - run_mean * scale
    w_hwio = jnp.transpose(w_folded, (2, 3, 1, 0))                     # OIHW -> HWIO
    return w_hwio, b_folded


# ----------------------------------------------------------------------------- forward

def inception_b_forward(x_nchw, params):
    x = jnp.transpose(x_nchw, (0, 2, 3, 1)).astype(jnp.float32)        # NCHW -> NHWC
    n, h, w, cin = x.shape

    w3_hwio, b3 = params["branch3x3"]            # (3,3,Cin,384)
    w1_hwio, b1 = params["branch3x3dbl_1"]       # (1,1,Cin,64)
    w22_hwio, b22 = params["branch3x3dbl_2"]     # (3,3,64,96)
    w23_hwio, b23 = params["branch3x3dbl_3"]     # (3,3,96,96)

    # 2D / tap-major weights prepared at trace time (matches im2col ordering).
    w3 = w3_hwio.reshape(9 * cin, w3_hwio.shape[-1])
    w1 = w1_hwio.reshape(cin, w1_hwio.shape[-1])
    w22 = w22_hwio.reshape(9, w22_hwio.shape[2], w22_hwio.shape[3])
    w23 = w23_hwio.reshape(9 * w23_hwio.shape[2], w23_hwio.shape[3])

    # Stage 1 (fused): branch3x3, branch3x3dbl_1, branch_pool from a single read of x.
    br3, d1, pool, ho, wo = _stage1(x, w3, b3, w1, b1)

    # branch3x3dbl_2: 3x3 s1 p1 conv (NHWC kept throughout).
    d1 = d1.reshape(n, h, w, d1.shape[-1])
    d2 = _conv3x3_s1_p1(d1, w22, b22)

    # branch3x3dbl_3 + direct write of all branches into the concatenated slab.
    out_nhwc = _final_stage(d2, w23, b23, br3, pool, ho, wo)
    return jnp.transpose(out_nhwc, (0, 3, 1, 2))                        # NHWC -> NCHW


# ----------------------------------------------------------------------------- reference

def _conv_ref(x, w, b, stride, padding):
    y = lax.conv_general_dilated(
        x, w, (stride, stride), [(padding, padding), (padding, padding)],
        dimension_numbers=("NHWC", "HWIO", "NHWC"),
        precision=lax.Precision.HIGHEST)
    return jnp.maximum(y + b, 0.0)


def inception_b_reference(x_nchw, params):
    x = jnp.transpose(x_nchw, (0, 2, 3, 1)).astype(jnp.float32)
    w1, b1 = params["branch3x3"]
    w21, b21 = params["branch3x3dbl_1"]
    w22, b22 = params["branch3x3dbl_2"]
    w23, b23 = params["branch3x3dbl_3"]

    branch3x3 = _conv_ref(x, w1, b1, 2, 0)
    d = _conv_ref(x, w21, b21, 1, 0)
    d = _conv_ref(d, w22, b22, 1, 1)
    d = _conv_ref(d, w23, b23, 2, 0)
    bp = lax.reduce_window(x, -jnp.inf, lax.max, (1, 3, 3, 1), (1, 2, 2, 1), "VALID")

    out_nhwc = jnp.concatenate([branch3x3, d, bp], axis=-1)
    return jnp.transpose(out_nhwc, (0, 3, 1, 2))


# ----------------------------------------------------------------------------- main

if __name__ == "__main__":
    key = jax.random.PRNGKey(0)
    kx, k1, k2, k3, k4 = jax.random.split(key, 5)

    N, Cin, H, W = 2, 4, 16, 16
    x = jax.random.normal(kx, (N, Cin, H, W), jnp.float32)

    params = {
        "branch3x3": init_basic_conv_params(k1, Cin, 384, 3),
        "branch3x3dbl_1": init_basic_conv_params(k2, Cin, 64, 1),
        "branch3x3dbl_2": init_basic_conv_params(k3, 64, 96, 3),
        "branch3x3dbl_3": init_basic_conv_params(k4, 96, 96, 3),
    }

    fwd = jax.jit(inception_b_forward)
    out = jax.block_until_ready(fwd(x, params))

    Ho = (H - 3) // 2 + 1
    expected_shape = (N, 384 + 96 + Cin, Ho, Ho)
    assert out.shape == expected_shape, (out.shape, expected_shape)

    ref = jax.block_until_ready(inception_b_reference(x, params))
    max_err = float(jnp.max(jnp.abs(out - ref)))
    assert jnp.allclose(out, ref, rtol=2e-2, atol=2e-2), f"max_err={max_err}"

    print("KERNEL_OK")
</pallas_src>

<mosaic_0001>
module attributes {stable_mosaic.version = 11 : i64} {
  func.func @_stage1_kernel(%arg0: i32, %arg1: memref<1x49x36xf32, #tpu.memory_space<vmem>>, %arg2: memref<1x256x4xf32, #tpu.memory_space<vmem>>, %arg3: memref<36x384xf32, #tpu.memory_space<vmem>>, %arg4: memref<1x384xf32, #tpu.memory_space<vmem>>, %arg5: memref<4x64xf32, #tpu.memory_space<vmem>>, %arg6: memref<1x64xf32, #tpu.memory_space<vmem>>, %arg7: memref<1x49x384xf32, #tpu.memory_space<vmem>>, %arg8: memref<1x256x64xf32, #tpu.memory_space<vmem>>, %arg9: memref<1x49x4xf32, #tpu.memory_space<vmem>>) attributes {dimension_semantics = [#tpu.dimension_semantics<parallel>], iteration_bounds = array<i64: 2>, scalar_prefetch = 0 : i64, scratch_operands = 0 : i64, tpu.core_type = #tpu.core_type<tc>, window_params = [{transform_indices = @transform_0, window_bounds = array<i64: 1, 49, 36>}, {transform_indices = @transform_1, window_bounds = array<i64: 1, 256, 4>}, {pipeline_mode = #tpu.pipeline_mode<synchronous>, transform_indices = @transform_2, window_bounds = array<i64: 36, 384>}, {pipeline_mode = #tpu.pipeline_mode<synchronous>, transform_indices = @transform_3, window_bounds = array<i64: 1, 384>}, {pipeline_mode = #tpu.pipeline_mode<synchronous>, transform_indices = @transform_4, window_bounds = array<i64: 4, 64>}, {pipeline_mode = #tpu.pipeline_mode<synchronous>, transform_indices = @transform_5, window_bounds = array<i64: 1, 64>}, {transform_indices = @transform_6, window_bounds = array<i64: 1, 49, 384>}, {transform_indices = @transform_7, window_bounds = array<i64: 1, 256, 64>}, {transform_indices = @transform_8, window_bounds = array<i64: 1, 49, 4>}]} {
    %c0 = arith.constant 0 : index
    %c0_0 = arith.constant 0 : index
    %c0_1 = arith.constant 0 : index
    %0 = vector.load %arg1[%c0, %c0_0, %c0_1] : memref<1x49x36xf32, #tpu.memory_space<vmem>>, vector<1x49x36xf32>
    %1 = vector.shape_cast %0 : vector<1x49x36xf32> to vector<49x36xf32>
    %c0_2 = arith.constant 0 : index
    %c0_3 = arith.constant 0 : index
    %2 = vector.load %arg3[%c0_2, %c0_3] : memref<36x384xf32, #tpu.memory_space<vmem>>, vector<36x384xf32>
    %cst = arith.constant dense<0.000000e+00> : vector<49x384xf32>
    %3 = tpu.matmul %1, %2, %cst {dimension_numbers = #tpu.dot_dimension_numbers<[1], [0], [0], [1], [0, 0, 1, 1], [], []>} : vector<49x36xf32>, vector<36x384xf32>, vector<49x384xf32> -> vector<49x384xf32>
    %c0_4 = arith.constant 0 : index
    %c0_5 = arith.constant 0 : index
    %4 = vector.load %arg4[%c0_4, %c0_5] : memref<1x384xf32, #tpu.memory_space<vmem>>, vector<1x384xf32>
    %5 = vector.broadcast %4 : vector<1x384xf32> to vector<49x384xf32>
    %6 = arith.addf %3, %5 : vector<49x384xf32>
    %cst_6 = arith.constant 0.000000e+00 : f32
    %7 = vector.broadcast %cst_6 : f32 to vector<49x384xf32>
    %8 = arith.maximumf %6, %7 : vector<49x384xf32>
    %c0_7 = arith.constant 0 : index
    %c0_8 = arith.constant 0 : index
    %c0_9 = arith.constant 0 : index
    %9 = vector.load %arg7[%c0_7, %c0_8, %c0_9] : memref<1x49x384xf32, #tpu.memory_space<vmem>>, vector<1x49x384xf32>
    %10 = vector.shape_cast %9 : vector<1x49x384xf32> to vector<49x384xf32>
    %11 = vector.shape_cast %8 : vector<49x384xf32> to vector<1x49x384xf32>
    tpu.vector_store %arg7[%c0_7, %c0_8, %c0_9], %11 {strides = array<i32>} : memref<1x49x384xf32, #tpu.memory_space<vmem>>, vector<1x49x384xf32>,
    %c0_10 = arith.constant 0 : index
    %c0_11 = arith.constant 0 : index
    %c0_12 = arith.constant 0 : index
    %12 = vector.load %arg2[%c0_10, %c0_11, %c0_12] : memref<1x256x4xf32, #tpu.memory_space<vmem>>, vector<1x256x4xf32>
    %13 = vector.shape_cast %12 : vector<1x256x4xf32> to vector<256x4xf32>
    %c0_13 = arith.constant 0 : index
    %c0_14 = arith.constant 0 : index
    %14 = vector.load %arg5[%c0_13, %c0_14] : memref<4x64xf32, #tpu.memory_space<vmem>>, vector<4x64xf32>
    %cst_15 = arith.constant dense<0.000000e+00> : vector<256x64xf32>
    %15 = tpu.matmul %13, %14, %cst_15 {dimension_numbers = #tpu.dot_dimension_numbers<[1], [0], [0], [1], [0, 0, 1, 1], [], []>} : vector<256x4xf32>, vector<4x64xf32>, vector<256x64xf32> -> vector<256x64xf32>
    %c0_16 = arith.constant 0 : index
    %c0_17 = arith.constant 0 : index
    %16 = vector.load %arg6[%c0_16, %c0_17] : memref<1x64xf32, #tpu.memory_space<vmem>>, vector<1x64xf32>
    %17 = vector.broadcast %16 : vector<1x64xf32> to vector<256x64xf32>
    %18 = arith.addf %15, %17 : vector<256x64xf32>
    %cst_18 = arith.constant 0.000000e+00 : f32
    %19 = vector.broadcast %cst_18 : f32 to vector<256x64xf32>
    %20 = arith.maximumf %18, %19 : vector<256x64xf32>
    %c0_19 = arith.constant 0 : index
    %c0_20 = arith.constant 0 : index
    %c0_21 = arith.constant 0 : index
    %21 = vector.load %arg8[%c0_19, %c0_20, %c0_21] : memref<1x256x64xf32, #tpu.memory_space<vmem>>, vector<1x256x64xf32>
    %22 = vector.shape_cast %21 : vector<1x256x64xf32> to vector<256x64xf32>
    %23 = vector.shape_cast %20 : vector<256x64xf32> to vector<1x256x64xf32>
    tpu.vector_store %arg8[%c0_19, %c0_20, %c0_21], %23 {strides = array<i32>} : memref<1x256x64xf32, #tpu.memory_space<vmem>>, vector<1x256x64xf32>,
    %24 = vector.extract_strided_slice %1 {offsets = [0, 0], sizes = [49, 4], strides = [1, 1]} : vector<49x36xf32> to vector<49x4xf32>
    %25 = vector.extract_strided_slice %1 {offsets = [0, 4], sizes = [49, 4], strides = [1, 1]} : vector<49x36xf32> to vector<49x4xf32>
    %26 = arith.maximumf %24, %25 : vector<49x4xf32>
    %27 = vector.extract_strided_slice %1 {offsets = [0, 8], sizes = [49, 4], strides = [1, 1]} : vector<49x36xf32> to vector<49x4xf32>
    %28 = arith.maximumf %26, %27 : vector<49x4xf32>
    %29 = vector.extract_strided_slice %1 {offsets = [0, 12], sizes = [49, 4], strides = [1, 1]} : vector<49x36xf32> to vector<49x4xf32>
    %30 = arith.maximumf %28, %29 : vector<49x4xf32>
    %31 = vector.extract_strided_slice %1 {offsets = [0, 16], sizes = [49, 4], strides = [1, 1]} : vector<49x36xf32> to vector<49x4xf32>
    %32 = arith.maximumf %30, %31 : vector<49x4xf32>
    %33 = vector.extract_strided_slice %1 {offsets = [0, 20], sizes = [49, 4], strides = [1, 1]} : vector<49x36xf32> to vector<49x4xf32>
    %34 = arith.maximumf %32, %33 : vector<49x4xf32>
    %35 = vector.extract_strided_slice %1 {offsets = [0, 24], sizes = [49, 4], strides = [1, 1]} : vector<49x36xf32> to vector<49x4xf32>
    %36 = arith.maximumf %34, %35 : vector<49x4xf32>
    %37 = vector.extract_strided_slice %1 {offsets = [0, 28], sizes = [49, 4], strides = [1, 1]} : vector<49x36xf32> to vector<49x4xf32>
    %38 = arith.maximumf %36, %37 : vector<49x4xf32>
    %39 = vector.extract_strided_slice %1 {offsets = [0, 32], sizes = [49, 4], strides = [1, 1]} : vector<49x36xf32> to vector<49x4xf32>
    %40 = arith.maximumf %38, %39 : vector<49x4xf32>
    %c0_22 = arith.constant 0 : index
    %c0_23 = arith.constant 0 : index
    %c0_24 = arith.constant 0 : index
    %41 = vector.load %arg9[%c0_22, %c0_23, %c0_24] : memref<1x49x4xf32, #tpu.memory_space<vmem>>, vector<1x49x4xf32>
    %42 = vector.shape_cast %41 : vector<1x49x4xf32> to vector<49x4xf32>
    %43 = vector.shape_cast %40 : vector<49x4xf32> to vector<1x49x4xf32>
    tpu.vector_store %arg9[%c0_22, %c0_23, %c0_24], %43 {strides = array<i32>} : memref<1x49x4xf32, #tpu.memory_space<vmem>>, vector<1x49x4xf32>,
    return
  }
  func.func @transform_0(%arg0: i32) -> (i32, i32, i32) {
    %c0_i32 = arith.constant 0 : i32
    %c0_i32_0 = arith.constant 0 : i32
    %c0_i32_1 = arith.constant 0 : i32
    return %arg0, %c0_i32, %c0_i32_0 : i32, i32, i32
  }
  func.func @transform_1(%arg0: i32) -> (i32, i32, i32) {
    %c0_i32 = arith.constant 0 : i32
    %c0_i32_0 = arith.constant 0 : i32
    %c0_i32_1 = arith.constant 0 : i32
    return %arg0, %c0_i32, %c0_i32_0 : i32, i32, i32
  }
  func.func @transform_2(%arg0: i32) -> (i32, i32) {
    %c0_i32 = arith.constant 0 : i32
    %c0_i32_0 = arith.constant 0 : i32
    %c0_i32_1 = arith.constant 0 : i32
    return %c0_i32, %c0_i32_0 : i32, i32
  }
  func.func @transform_3(%arg0: i32) -> (i32, i32) {
    %c0_i32 = arith.constant 0 : i32
    %c0_i32_0 = arith.constant 0 : i32
    %c0_i32_1 = arith.constant 0 : i32
    return %c0_i32, %c0_i32_0 : i32, i32
  }
  func.func @transform_4(%arg0: i32) -> (i32, i32) {
    %c0_i32 = arith.constant 0 : i32
    %c0_i32_0 = arith.constant 0 : i32
    %c0_i32_1 = arith.constant 0 : i32
    return %c0_i32, %c0_i32_0 : i32, i32
  }
  func.func @transform_5(%arg0: i32) -> (i32, i32) {
    %c0_i32 = arith.constant 0 : i32
    %c0_i32_0 = arith.constant 0 : i32
    %c0_i32_1 = arith.constant 0 : i32
    return %c0_i32, %c0_i32_0 : i32, i32
  }
  func.func @transform_6(%arg0: i32) -> (i32, i32, i32) {
    %c0_i32 = arith.constant 0 : i32
    %c0_i32_0 = arith.constant 0 : i32
    %c0_i32_1 = arith.constant 0 : i32
    return %arg0, %c0_i32, %c0_i32_0 : i32, i32, i32
  }
  func.func @transform_7(%arg0: i32) -> (i32, i32, i32) {
    %c0_i32 = arith.constant 0 : i32
    %c0_i32_0 = arith.constant 0 : i32
    %c0_i32_1 = arith.constant 0 : i32
    return %arg0, %c0_i32, %c0_i32_0 : i32, i32, i32
  }
  func.func @transform_8(%arg0: i32) -> (i32, i32, i32) {
    %c0_i32 = arith.constant 0 : i32
    %c0_i32_0 = arith.constant 0 : i32
    %c0_i32_1 = arith.constant 0 : i32
    return %arg0, %c0_i32, %c0_i32_0 : i32, i32, i32
  }
}

module attributes {stable_mosaic.version = 11 : i64} {
  func.func @kernel(%arg0: i32, %arg1: i32, %arg2: memref<1x18x18x64xf32, #tpu.memory_space<vmem>>, %arg3: memref<9x64x96xf32, #tpu.memory_space<vmem>>, %arg4: memref<1x96xf32, #tpu.memory_space<vmem>>, %arg5: memref<1x8x16x96xf32, #tpu.memory_space<vmem>>) attributes {dimension_semantics = [#tpu.dimension_semantics<parallel>, #tpu.dimension_semantics<parallel>], iteration_bounds = array<i64: 2, 2>, scalar_prefetch = 0 : i64, scratch_operands = 0 : i64, tpu.core_type = #tpu.core_type<tc>, window_params = [{transform_indices = @transform_0, window_bounds = array<i64: 1, 18, 18, 64>}, {pipeline_mode = #tpu.pipeline_mode<synchronous>, transform_indices = @transform_1, window_bounds = array<i64: 9, 64, 96>}, {pipeline_mode = #tpu.pipeline_mode<synchronous>, transform_indices = @transform_2, window_bounds = array<i64: 1, 96>}, {transform_indices = @transform_3, window_bounds = array<i64: 1, 8, 16, 96>}]} {
    %c8_i32 = arith.constant 8 : i32
    %0 = arith.muli %arg1, %c8_i32 : i32
    %1 = tpu.assume_multiple %0, 8 : i32
    %c0 = arith.constant 0 : index
    %2 = arith.index_cast %1 : i32 to index
    %c0_0 = arith.constant 0 : index
    %c0_1 = arith.constant 0 : index
    %3 = vector.load %arg2[%c0, %2, %c0_0, %c0_1] : memref<1x18x18x64xf32, #tpu.memory_space<vmem>>, vector<1x10x18x64xf32>
    %4 = vector.shape_cast %3 : vector<1x10x18x64xf32> to vector<10x18x64xf32>
    %cst = arith.constant 0.000000e+00 : f32
    %5 = vector.broadcast %cst : f32 to vector<128x96xf32>
    %6 = vector.extract_strided_slice %4 {offsets = [0, 0, 0], sizes = [8, 16, 64], strides = [1, 1, 1]} : vector<10x18x64xf32> to vector<8x16x64xf32>
    %7 = vector.shape_cast %6 : vector<8x16x64xf32> to vector<128x64xf32>
    %c0_2 = arith.constant 0 : index
    %c0_3 = arith.constant 0 : index
    %c0_4 = arith.constant 0 : index
    %8 = vector.load %arg3[%c0_2, %c0_3, %c0_4] : memref<9x64x96xf32, #tpu.memory_space<vmem>>, vector<1x64x96xf32>
    %9 = vector.shape_cast %8 : vector<1x64x96xf32> to vector<64x96xf32>
    %cst_5 = arith.constant dense<0.000000e+00> : vector<128x96xf32>
    %10 = tpu.matmul %7, %9, %cst_5 {dimension_numbers = #tpu.dot_dimension_numbers<[1], [0], [0], [1], [0, 0, 1, 1], [], []>} : vector<128x64xf32>, vector<64x96xf32>, vector<128x96xf32> -> vector<128x96xf32>
    %11 = arith.addf %5, %10 : vector<128x96xf32>
    %12 = vector.extract_strided_slice %4 {offsets = [0, 1, 0], sizes = [8, 16, 64], strides = [1, 1, 1]} : vector<10x18x64xf32> to vector<8x16x64xf32>
    %13 = vector.shape_cast %12 : vector<8x16x64xf32> to vector<128x64xf32>
    %c1 = arith.constant 1 : index
    %c0_6 = arith.constant 0 : index
    %c0_7 = arith.constant 0 : index
    %14 = vector.load %arg3[%c1, %c0_6, %c0_7] : memref<9x64x96xf32, #tpu.memory_space<vmem>>, vector<1x64x96xf32>
    %15 = vector.shape_cast %14 : vector<1x64x96xf32> to vector<64x96xf32>
    %cst_8 = arith.constant dense<0.000000e+00> : vector<128x96xf32>
    %16 = tpu.matmul %13, %15, %cst_8 {dimension_numbers = #tpu.dot_dimension_numbers<[1], [0], [0], [1], [0, 0, 1, 1], [], []>} : vector<128x64xf32>, vector<64x96xf32>, vector<128x96xf32> -> vector<128x96xf32>
    %17 = arith.addf %11, %16 : vector<128x96xf32>
    %18 = vector.extract_strided_slice %4 {offsets = [0, 2, 0], sizes = [8, 16, 64], strides = [1, 1, 1]} : vector<10x18x64xf32> to vector<8x16x64xf32>
    %19 = vector.shape_cast %18 : vector<8x16x64xf32> to vector<128x64xf32>
    %c2 = arith.constant 2 : index
    %c0_9 = arith.constant 0 : index
    %c0_10 = arith.constant 0 : index
    %20 = vector.load %arg3[%c2, %c0_9, %c0_10] : memref<9x64x96xf32, #tpu.memory_space<vmem>>, vector<1x64x96xf32>
    %21 = vector.shape_cast %20 : vector<1x64x96xf32> to vector<64x96xf32>
    %cst_11 = arith.constant dense<0.000000e+00> : vector<128x96xf32>
    %22 = tpu.matmul %19, %21, %cst_11 {dimension_numbers = #tpu.dot_dimension_numbers<[1], [0], [0], [1], [0, 0, 1, 1], [], []>} : vector<128x64xf32>, vector<64x96xf32>, vector<128x96xf32> -> vector<128x96xf32>
    %23 = arith.addf %17, %22 : vector<128x96xf32>
    %24 = vector.extract_strided_slice %4 {offsets = [1, 0, 0], sizes = [8, 16, 64], strides = [1, 1, 1]} : vector<10x18x64xf32> to vector<8x16x64xf32>
    %25 = vector.shape_cast %24 : vector<8x16x64xf32> to vector<128x64xf32>
    %c3 = arith.constant 3 : index
    %c0_12 = arith.constant 0 : index
    %c0_13 = arith.constant 0 : index
    %26 = vector.load %arg3[%c3, %c0_12, %c0_13] : memref<9x64x96xf32, #tpu.memory_space<vmem>>, vector<1x64x96xf32>
    %27 = vector.shape_cast %26 : vector<1x64x96xf32> to vector<64x96xf32>
    %cst_14 = arith.constant dense<0.000000e+00> : vector<128x96xf32>
    %28 = tpu.matmul %25, %27, %cst_14 {dimension_numbers = #tpu.dot_dimension_numbers<[1], [0], [0], [1], [0, 0, 1, 1], [], []>} : vector<128x64xf32>, vector<64x96xf32>, vector<128x96xf32> -> vector<128x96xf32>
    %29 = arith.addf %23, %28 : vector<128x96xf32>
    %30 = vector.extract_strided_slice %4 {offsets = [1, 1, 0], sizes = [8, 16, 64], strides = [1, 1, 1]} : vector<10x18x64xf32> to vector<8x16x64xf32>
    %31 = vector.shape_cast %30 : vector<8x16x64xf32> to vector<128x64xf32>
    %c4 = arith.constant 4 : index
    %c0_15 = arith.constant 0 : index
    %c0_16 = arith.constant 0 : index
    %32 = vector.load %arg3[%c4, %c0_15, %c0_16] : memref<9x64x96xf32, #tpu.memory_space<vmem>>, vector<1x64x96xf32>
    %33 = vector.shape_cast %32 : vector<1x64x96xf32> to vector<64x96xf32>
    %cst_17 = arith.constant dense<0.000000e+00> : vector<128x96xf32>
    %34 = tpu.matmul %31, %33, %cst_17 {dimension_numbers = #tpu.dot_dimension_numbers<[1], [0], [0], [1], [0, 0, 1, 1], [], []>} : vector<128x64xf32>, vector<64x96xf32>, vector<128x96xf32> -> vector<128x96xf32>
    %35 = arith.addf %29, %34 : vector<128x96xf32>
    %36 = vector.extract_strided_slice %4 {offsets = [1, 2, 0], sizes = [8, 16, 64], strides = [1, 1, 1]} : vector<10x18x64xf32> to vector<8x16x64xf32>
    %37 = vector.shape_cast %36 : vector<8x16x64xf32> to vector<128x64xf32>
    %c5 = arith.constant 5 : index
    %c0_18 = arith.constant 0 : index
    %c0_19 = arith.constant 0 : index
    %38 = vector.load %arg3[%c5, %c0_18, %c0_19] : memref<9x64x96xf32, #tpu.memory_space<vmem>>, vector<1x64x96xf32>
    %39 = vector.shape_cast %38 : vector<1x64x96xf32> to vector<64x96xf32>
    %cst_20 = arith.constant dense<0.000000e+00> : vector<128x96xf32>
    %40 = tpu.matmul %37, %39, %cst_20 {dimension_numbers = #tpu.dot_dimension_numbers<[1], [0], [0], [1], [0, 0, 1, 1], [], []>} : vector<128x64xf32>, vector<64x96xf32>, vector<128x96xf32> -> vector<128x96xf32>
    %41 = arith.addf %35, %40 : vector<128x96xf32>
    %42 = vector.extract_strided_slice %4 {offsets = [2, 0, 0], sizes = [8, 16, 64], strides = [1, 1, 1]} : vector<10x18x64xf32> to vector<8x16x64xf32>
    %43 = vector.shape_cast %42 : vector<8x16x64xf32> to vector<128x64xf32>
    %c6 = arith.constant 6 : index
    %c0_21 = arith.constant 0 : index
    %c0_22 = arith.constant 0 : index
    %44 = vector.load %arg3[%c6, %c0_21, %c0_22] : memref<9x64x96xf32, #tpu.memory_space<vmem>>, vector<1x64x96xf32>
    %45 = vector.shape_cast %44 : vector<1x64x96xf32> to vector<64x96xf32>
    %cst_23 = arith.constant dense<0.000000e+00> : vector<128x96xf32>
    %46 = tpu.matmul %43, %45, %cst_23 {dimension_numbers = #tpu.dot_dimension_numbers<[1], [0], [0], [1], [0, 0, 1, 1], [], []>} : vector<128x64xf32>, vector<64x96xf32>, vector<128x96xf32> -> vector<128x96xf32>
    %47 = arith.addf %41, %46 : vector<128x96xf32>
    %48 = vector.extract_strided_slice %4 {offsets = [2, 1, 0], sizes = [8, 16, 64], strides = [1, 1, 1]} : vector<10x18x64xf32> to vector<8x16x64xf32>
    %49 = vector.shape_cast %48 : vector<8x16x64xf32> to vector<128x64xf32>
    %c7 = arith.constant 7 : index
    %c0_24 = arith.constant 0 : index
    %c0_25 = arith.constant 0 : index
    %50 = vector.load %arg3[%c7, %c0_24, %c0_25] : memref<9x64x96xf32, #tpu.memory_space<vmem>>, vector<1x64x96xf32>
    %51 = vector.shape_cast %50 : vector<1x64x96xf32> to vector<64x96xf32>
    %cst_26 = arith.constant dense<0.000000e+00> : vector<128x96xf32>
    %52 = tpu.matmul %49, %51, %cst_26 {dimension_numbers = #tpu.dot_dimension_numbers<[1], [0], [0], [1], [0, 0, 1, 1], [], []>} : vector<128x64xf32>, vector<64x96xf32>, vector<128x96xf32> -> vector<128x96xf32>
    %53 = arith.addf %47, %52 : vector<128x96xf32>
    %54 = vector.extract_strided_slice %4 {offsets = [2, 2, 0], sizes = [8, 16, 64], strides = [1, 1, 1]} : vector<10x18x64xf32> to vector<8x16x64xf32>
    %55 = vector.shape_cast %54 : vector<8x16x64xf32> to vector<128x64xf32>
    %c8 = arith.constant 8 : index
    %c0_27 = arith.constant 0 : index
    %c0_28 = arith.constant 0 : index
    %56 = vector.load %arg3[%c8, %c0_27, %c0_28] : memref<9x64x96xf32, #tpu.memory_space<vmem>>, vector<1x64x96xf32>
    %57 = vector.shape_cast %56 : vector<1x64x96xf32> to vector<64x96xf32>
    %cst_29 = arith.constant dense<0.000000e+00> : vector<128x96xf32>
    %58 = tpu.matmul %55, %57, %cst_29 {dimension_numbers = #tpu.dot_dimension_numbers<[1], [0], [0], [1], [0, 0, 1, 1], [], []>} : vector<128x64xf32>, vector<64x96xf32>, vector<128x96xf32> -> vector<128x96xf32>
    %59 = arith.addf %53, %58 : vector<128x96xf32>
    %c0_30 = arith.constant 0 : index
    %c0_31 = arith.constant 0 : index
    %60 = vector.load %arg4[%c0_30, %c0_31] : memref<1x96xf32, #tpu.memory_space<vmem>>, vector<1x96xf32>
    %61 = vector.broadcast %60 : vector<1x96xf32> to vector<128x96xf32>
    %62 = arith.addf %59, %61 : vector<128x96xf32>
    %cst_32 = arith.constant 0.000000e+00 : f32
    %63 = vector.broadcast %cst_32 : f32 to vector<128x96xf32>
    %64 = arith.maximumf %62, %63 : vector<128x96xf32>
    %65 = vector.shape_cast %64 : vector<128x96xf32> to vector<8x16x96xf32>
    %c0_33 = arith.constant 0 : index
    %c0_34 = arith.constant 0 : index
    %c0_35 = arith.constant 0 : index
    %c0_36 = arith.constant 0 : index
    %66 = vector.load %arg5[%c0_33, %c0_34, %c0_35, %c0_36] : memref<1x8x16x96xf32, #tpu.memory_space<vmem>>, vector<1x8x16x96xf32>
    %67 = vector.shape_cast %66 : vector<1x8x16x96xf32> to vector<8x16x96xf32>
    %68 = vector.shape_cast %65 : vector<8x16x96xf32> to vector<1x8x16x96xf32>
    tpu.vector_store %arg5[%c0_33, %c0_34, %c0_35, %c0_36], %68 {strides = array<i32>} : memref<1x8x16x96xf32, #tpu.memory_space<vmem>>, vector<1x8x16x96xf32>,
    return
  }
  func.func @transform_0(%arg0: i32, %arg1: i32) -> (i32, i32, i32, i32) {
    %c0_i32 = arith.constant 0 : i32
    %c0_i32_0 = arith.constant 0 : i32
    %c0_i32_1 = arith.constant 0 : i32
    %c0_i32_2 = arith.constant 0 : i32
    return %arg0, %c0_i32, %c0_i32_0, %c0_i32_1 : i32, i32, i32, i32
  }
  func.func @transform_1(%arg0: i32, %arg1: i32) -> (i32, i32, i32) {
    %c0_i32 = arith.constant 0 : i32
    %c0_i32_0 = arith.constant 0 : i32
    %c0_i32_1 = arith.constant 0 : i32
    %c0_i32_2 = arith.constant 0 : i32
    return %c0_i32, %c0_i32_0, %c0_i32_1 : i32, i32, i32
  }
  func.func @transform_2(%arg0: i32, %arg1: i32) -> (i32, i32) {
    %c0_i32 = arith.constant 0 : i32
    %c0_i32_0 = arith.constant 0 : i32
    %c0_i32_1 = arith.constant 0 : i32
    return %c0_i32, %c0_i32_0 : i32, i32
  }
  func.func @transform_3(%arg0: i32, %arg1: i32) -> (i32, i32, i32, i32) {
    %c0_i32 = arith.constant 0 : i32
    %c0_i32_0 = arith.constant 0 : i32
    %c0_i32_1 = arith.constant 0 : i32
    return %arg0, %arg1, %c0_i32, %c0_i32_0 : i32, i32, i32, i32
  }
}

module attributes {stable_mosaic.version = 11 : i64} {
  func.func @kernel(%arg0: i32, %arg1: memref<1x49x864xf32, #tpu.memory_space<vmem>>, %arg2: memref<864x96xf32, #tpu.memory_space<vmem>>, %arg3: memref<1x96xf32, #tpu.memory_space<vmem>>, %arg4: memref<1x49x384xf32, #tpu.memory_space<vmem>>, %arg5: memref<1x49x4xf32, #tpu.memory_space<vmem>>, %arg6: memref<1x49x484xf32, #tpu.memory_space<vmem>>) attributes {dimension_semantics = [#tpu.dimension_semantics<parallel>], iteration_bounds = array<i64: 2>, scalar_prefetch = 0 : i64, scratch_operands = 0 : i64, tpu.core_type = #tpu.core_type<tc>, window_params = [{transform_indices = @transform_0, window_bounds = array<i64: 1, 49, 864>}, {pipeline_mode = #tpu.pipeline_mode<synchronous>, transform_indices = @transform_1, window_bounds = array<i64: 864, 96>}, {pipeline_mode = #tpu.pipeline_mode<synchronous>, transform_indices = @transform_2, window_bounds = array<i64: 1, 96>}, {transform_indices = @transform_3, window_bounds = array<i64: 1, 49, 384>}, {transform_indices = @transform_4, window_bounds = array<i64: 1, 49, 4>}, {transform_indices = @transform_5, window_bounds = array<i64: 1, 49, 484>}]} {
    %c0 = arith.constant 0 : index
    %c0_0 = arith.constant 0 : index
    %c0_1 = arith.constant 0 : index
    %0 = vector.load %arg1[%c0, %c0_0, %c0_1] : memref<1x49x864xf32, #tpu.memory_space<vmem>>, vector<1x49x864xf32>
    %1 = vector.shape_cast %0 : vector<1x49x864xf32> to vector<49x864xf32>
    %c0_2 = arith.constant 0 : index
    %c0_3 = arith.constant 0 : index
    %2 = vector.load %arg2[%c0_2, %c0_3] : memref<864x96xf32, #tpu.memory_space<vmem>>, vector<864x96xf32>
    %cst = arith.constant dense<0.000000e+00> : vector<49x96xf32>
    %3 = tpu.matmul %1, %2, %cst {dimension_numbers = #tpu.dot_dimension_numbers<[1], [0], [0], [1], [0, 0, 1, 1], [], []>} : vector<49x864xf32>, vector<864x96xf32>, vector<49x96xf32> -> vector<49x96xf32>
    %c0_4 = arith.constant 0 : index
    %c0_5 = arith.constant 0 : index
    %4 = vector.load %arg3[%c0_4, %c0_5] : memref<1x96xf32, #tpu.memory_space<vmem>>, vector<1x96xf32>
    %5 = vector.broadcast %4 : vector<1x96xf32> to vector<49x96xf32>
    %6 = arith.addf %3, %5 : vector<49x96xf32>
    %cst_6 = arith.constant 0.000000e+00 : f32
    %7 = vector.broadcast %cst_6 : f32 to vector<49x96xf32>
    %8 = arith.maximumf %6, %7 : vector<49x96xf32>
    %c0_7 = arith.constant 0 : index
    %c0_8 = arith.constant 0 : index
    %c0_9 = arith.constant 0 : index
    %9 = vector.load %arg4[%c0_7, %c0_8, %c0_9] : memref<1x49x384xf32, #tpu.memory_space<vmem>>, vector<1x49x384xf32>
    %10 = vector.shape_cast %9 : vector<1x49x384xf32> to vector<49x384xf32>
    %c0_10 = arith.constant 0 : index
    %c0_11 = arith.constant 0 : index
    %c0_12 = arith.constant 0 : index
    %11 = vector.load %arg6[%c0_10, %c0_11, %c0_12] : memref<1x49x484xf32, #tpu.memory_space<vmem>>, vector<1x49x384xf32>
    %12 = vector.shape_cast %11 : vector<1x49x384xf32> to vector<49x384xf32>
    %13 = vector.shape_cast %10 : vector<49x384xf32> to vector<1x49x384xf32>
    tpu.vector_store %arg6[%c0_10, %c0_11, %c0_12], %13 {strides = array<i32>} : memref<1x49x484xf32, #tpu.memory_space<vmem>>, vector<1x49x384xf32>,
    %c0_13 = arith.constant 0 : index
    %c0_14 = arith.constant 0 : index
    %c384 = arith.constant 384 : index
    %14 = vector.load %arg6[%c0_13, %c0_14, %c384] : memref<1x49x484xf32, #tpu.memory_space<vmem>>, vector<1x49x96xf32>
    %15 = vector.shape_cast %14 : vector<1x49x96xf32> to vector<49x96xf32>
    %16 = vector.shape_cast %8 : vector<49x96xf32> to vector<1x49x96xf32>
    tpu.vector_store %arg6[%c0_13, %c0_14, %c384], %16 {strides = array<i32>} : memref<1x49x484xf32, #tpu.memory_space<vmem>>, vector<1x49x96xf32>,
    %c0_15 = arith.constant 0 : index
    %c0_16 = arith.constant 0 : index
    %c0_17 = arith.constant 0 : index
    %17 = vector.load %arg5[%c0_15, %c0_16, %c0_17] : memref<1x49x4xf32, #tpu.memory_space<vmem>>, vector<1x49x4xf32>
    %18 = vector.shape_cast %17 : vector<1x49x4xf32> to vector<49x4xf32>
    %c0_18 = arith.constant 0 : index
    %c0_19 = arith.constant 0 : index
    %c480 = arith.constant 480 : index
    %19 = vector.load %arg6[%c0_18, %c0_19, %c480] : memref<1x49x484xf32, #tpu.memory_space<vmem>>, vector<1x49x4xf32>
    %20 = vector.shape_cast %19 : vector<1x49x4xf32> to vector<49x4xf32>
    %21 = vector.shape_cast %18 : vector<49x4xf32> to vector<1x49x4xf32>
    tpu.vector_store %arg6[%c0_18, %c0_19, %c480], %21 {strides = array<i32>} : memref<1x49x484xf32, #tpu.memory_space<vmem>>, vector<1x49x4xf32>,
    return
  }
  func.func @transform_0(%arg0: i32) -> (i32, i32, i32) {
    %c0_i32 = arith.constant 0 : i32
    %c0_i32_0 = arith.constant 0 : i32
    %c0_i32_1 = arith.constant 0 : i32
    return %arg0, %c0_i32, %c0_i32_0 : i32, i32, i32
  }
  func.func @transform_1(%arg0: i32) -> (i32, i32) {
    %c0_i32 = arith.constant 0 : i32
    %c0_i32_0 = arith.constant 0 : i32
    %c0_i32_1 = arith.constant 0 : i32
    return %c0_i32, %c0_i32_0 : i32, i32
  }
  func.func @transform_2(%arg0: i32) -> (i32, i32) {
    %c0_i32 = arith.constant 0 : i32
    %c0_i32_0 = arith.constant 0 : i32
    %c0_i32_1 = arith.constant 0 : i32
    return %c0_i32, %c0_i32_0 : i32, i32
  }
  func.func @transform_3(%arg0: i32) -> (i32, i32, i32) {
    %c0_i32 = arith.constant 0 : i32
    %c0_i32_0 = arith.constant 0 : i32
    %c0_i32_1 = arith.constant 0 : i32
    return %arg0, %c0_i32, %c0_i32_0 : i32, i32, i32
  }
  func.func @transform_4(%arg0: i32) -> (i32, i32, i32) {
    %c0_i32 = arith.constant 0 : i32
    %c0_i32_0 = arith.constant 0 : i32
    %c0_i32_1 = arith.constant 0 : i32
    return %arg0, %c0_i32, %c0_i32_0 : i32, i32, i32
  }
  func.func @transform_5(%arg0: i32) -> (i32, i32, i32) {
    %c0_i32 = arith.constant 0 : i32
    %c0_i32_0 = arith.constant 0 : i32
    %c0_i32_1 = arith.constant 0 : i32
    return %arg0, %c0_i32, %c0_i32_0 : i32, i32, i32
  }
}

</mosaic_0001>

<llo_original>
// kernel: inception_b_forward.3
$region0: #{inception_b_forward.3}
  #allocation0 [shape = 'u32[]', space=smem, size = 0x4, offset = 0x4, fixed_abs, tag = 'smem constant byte address 0x4 - core index']
  #allocation1 [shape = 'u32[144,128]{1,0:T(1,128)}', space=vmem, size = 0x12000, scoped, tag = 'internal scratch']
  %s0 = inlined_call_operand.vmem [shape: f32[2,49,36], index: 0, kind: input, shape index: {}]
  %s1 = inlined_call_operand.vmem [shape: f32[2,256,4], index: 1, kind: input, shape index: {}]
  %s2 = inlined_call_operand.vmem [shape: f32[36,384], index: 2, kind: input, shape index: {}]
  %s3 = inlined_call_operand.vmem [shape: f32[1,384], index: 3, kind: input, shape index: {}]
  %s4 = inlined_call_operand.vmem [shape: f32[4,64], index: 4, kind: input, shape index: {}]
  %s5 = inlined_call_operand.vmem [shape: f32[1,64], index: 5, kind: input, shape index: {}]
  %s6 = inlined_call_operand.vmem [shape: f32[2,49,384], index: 6, kind: output, shape index: {0}]
  %s7 = inlined_call_operand.vmem [shape: f32[2,256,64], index: 7, kind: output, shape index: {1}]
  %s8 = inlined_call_operand.vmem [shape: f32[2,49,4], index: 8, kind: output, shape index: {2}]
  %9 = xla_tuple %s6, %s7, %s8
  %s10 = sld [smem:[#allocation0]]
  $region73: #{inception_b_forward.3} parent=0
    _
  %s12 = ssub.s32 1, %s10
  %s13 = scalar_select 0, %s12, %s10
  loop: start=0, step=1, limit=4
  $region2: #{inception_b_forward.3} parent=0 // loop_pre_header
    _
  $region3: #{inception_b_forward.3} parent=0 // loop_header
    %s15 = sphi 0, %s19
    %p16 = scmp.ge.s32.totalorder %s15, 4
    %s25 = sphi 0, %s27
    %s28 = sphi 0, %s25
    %s29 = sphi 0, %s28
    %s45 = sphi 0, %s29
    %s51 = sphi 0, %s53
    %s54 = sphi 0, %s51
    %s55 = sphi 0, %s54
    %s71 = sphi 0, %s55
    %s75 = sphi 0, %s75
    %s77 = sphi 0, %s75
    %s78 = sphi 0, %s77
    %s92 = sphi 0, %s78
    %s96 = sphi 0, %s96
    %s98 = sphi 0, %s96
    %s99 = sphi 0, %s98
    %s113 = sphi 0, %s99
    %s117 = sphi 0, %s117
    %s119 = sphi 0, %s117
    %s120 = sphi 0, %s119
    %s134 = sphi 0, %s120
    %s138 = sphi 0, %s138
    %s140 = sphi 0, %s138
    %s141 = sphi 0, %s140
    %s155 = sphi 0, %s141
    %s161 = sphi 0, %s163
    %s164 = sphi 0, %s161
    %s165 = sphi 0, %s164
    %s181 = sphi 0, %s165
    %s187 = sphi 0, %s189
    %s190 = sphi 0, %s187
    %s191 = sphi 0, %s190
    %s207 = sphi 0, %s191
    %s213 = sphi 0, %s215
    %s216 = sphi 0, %s213
    %s217 = sphi 0, %s216
    %s233 = sphi 0, %s217
  $region4: #{inception_b_forward.3} parent=0 // loop_header_branch
    %18 = sbr.rel (%p16) target = $region8
  $region5: #{inception_b_forward.3} parent=0 // loop_body
    %s20 = ssub.s32 %s15, 1
    %s21 = ssub.s32 %s15, 2
    %s22 = sadd.s32 %s15, 1
    %s23 = ssub.s32 %s15, %s22
    %p24 = scmp.eq.s32.totalorder %s23, 0
    %s26 = sadd.s32 %s25, 1
    %s27 = scalar_select %p24, %s25, %s26
    %p30 = pneg %p24
    %p31 = scmp.eq.s32.totalorder %s15, 1
    %p32 = por %p30, %p31
    %p33 = scmp.ne.s32.totalorder %s25, %s28
    %p34 = scmp.eq.s32.totalorder %s15, 0
    %p35 = por %p33, %p34
    %p36 = scmp.ne.s32.totalorder %s25, %s28
    %p37 = scmp.eq.s32.totalorder %s20, 1
    %p38 = por %p36, %p37
    %p39 = scmp.ne.s32.totalorder %s28, %s29
    %p40 = scmp.eq.s32.totalorder %s20, 0
    %p41 = por %p39, %p40
    %p42 = scmp.ne.s32.totalorder %s28, %s29
    %p43 = scmp.eq.s32.totalorder %s21, 1
    %p44 = por %p42, %p43
    %p46 = scmp.ne.s32.totalorder %s29, %s45
    %p47 = scmp.eq.s32.totalorder %s21, 0
    %p48 = por %p46, %p47
    %s49 = ssub.s32 %s15, %s22
    %p50 = scmp.eq.s32.totalorder %s49, 0
    %s52 = sadd.s32 %s51, 1
    %s53 = scalar_select %p50, %s51, %s52
    %p56 = pneg %p50
    %p57 = scmp.eq.s32.totalorder %s15, 1
    %p58 = por %p56, %p57
    %p59 = scmp.ne.s32.totalorder %s51, %s54
    %p60 = scmp.eq.s32.totalorder %s15, 0
    %p61 = por %p59, %p60
    %p62 = scmp.ne.s32.totalorder %s51, %s54
    %p63 = scmp.eq.s32.totalorder %s20, 1
    %p64 = por %p62, %p63
    %p65 = scmp.ne.s32.totalorder %s54, %s55
    %p66 = scmp.eq.s32.totalorder %s20, 0
    %p67 = por %p65, %p66
    %p68 = scmp.ne.s32.totalorder %s54, %s55
    %p69 = scmp.eq.s32.totalorder %s21, 1
    %p70 = por %p68, %p69
    %p72 = scmp.ne.s32.totalorder %s55, %s71
    %p73 = scmp.eq.s32.totalorder %s21, 0
    %p74 = por %p72, %p73
    %s76 = sadd.s32 %s75, 1
    %p79 = scmp.eq.s32.totalorder %s15, 1
    %p80 = scmp.ne.s32.totalorder %s75, %s77
    %p81 = scmp.eq.s32.totalorder %s15, 0
    %p82 = por %p80, %p81
    %p83 = scmp.ne.s32.totalorder %s75, %s77
    %p84 = scmp.eq.s32.totalorder %s20, 1
    %p85 = por %p83, %p84
    %p86 = scmp.ne.s32.totalorder %s77, %s78
    %p87 = scmp.eq.s32.totalorder %s20, 0
    %p88 = por %p86, %p87
    %p89 = scmp.ne.s32.totalorder %s77, %s78
    %p90 = scmp.eq.s32.totalorder %s21, 1
    %p91 = por %p89, %p90
    %p93 = scmp.ne.s32.totalorder %s78, %s92
    %p94 = scmp.eq.s32.totalorder %s21, 0
    %p95 = por %p93, %p94
    %s97 = sadd.s32 %s96, 1
    %p100 = scmp.eq.s32.totalorder %s15, 1
    %p101 = scmp.ne.s32.totalorder %s96, %s98
    %p102 = scmp.eq.s32.totalorder %s15, 0
    %p103 = por %p101, %p102
    %p104 = scmp.ne.s32.totalorder %s96, %s98
    %p105 = scmp.eq.s32.totalorder %s20, 1
    %p106 = por %p104, %p105
    %p107 = scmp.ne.s32.totalorder %s98, %s99
    %p108 = scmp.eq.s32.totalorder %s20, 0
    %p109 = por %p107, %p108
    %p110 = scmp.ne.s32.totalorder %s98, %s99
    %p111 = scmp.eq.s32.totalorder %s21, 1
    %p112 = por %p110, %p111
    %p114 = scmp.ne.s32.totalorder %s99, %s113
    %p115 = scmp.eq.s32.totalorder %s21, 0
    %p116 = por %p114, %p115
    %s118 = sadd.s32 %s117, 1
    %p121 = scmp.eq.s32.totalorder %s15, 1
    %p122 = scmp.ne.s32.totalorder %s117, %s119
    %p123 = scmp.eq.s32.totalorder %s15, 0
    %p124 = por %p122, %p123
    %p125 = scmp.ne.s32.totalorder %s117, %s119
    %p126 = scmp.eq.s32.totalorder %s20, 1
    %p127 = por %p125, %p126
    %p128 = scmp.ne.s32.totalorder %s119, %s120
    %p129 = scmp.eq.s32.totalorder %s20, 0
    %p130 = por %p128, %p129
    %p131 = scmp.ne.s32.totalorder %s119, %s120
    %p132 = scmp.eq.s32.totalorder %s21, 1
    %p133 = por %p131, %p132
    %p135 = scmp.ne.s32.totalorder %s120, %s134
    %p136 = scmp.eq.s32.totalorder %s21, 0
    %p137 = por %p135, %p136
    %s139 = sadd.s32 %s138, 1
    %p142 = scmp.eq.s32.totalorder %s15, 1
    %p143 = scmp.ne.s32.totalorder %s138, %s140
    %p144 = scmp.eq.s32.totalorder %s15, 0
    %p145 = por %p143, %p144
    %p146 = scmp.ne.s32.totalorder %s138, %s140
    %p147 = scmp.eq.s32.totalorder %s20, 1
    %p148 = por %p146, %p147
    %p149 = scmp.ne.s32.totalorder %s140, %s141
    %p150 = scmp.eq.s32.totalorder %s20, 0
    %p151 = por %p149, %p150
    %p152 = scmp.ne.s32.totalorder %s140, %s141
    %p153 = scmp.eq.s32.totalorder %s21, 1
    %p154 = por %p152, %p153
    %p156 = scmp.ne.s32.totalorder %s141, %s155
    %p157 = scmp.eq.s32.totalorder %s21, 0
    %p158 = por %p156, %p157
    %s159 = ssub.s32 %s15, %s22
    %p160 = scmp.eq.s32.totalorder %s159, 0
    %s162 = sadd.s32 %s161, 1
    %s163 = scalar_select %p160, %s161, %s162
    %p166 = pneg %p160
    %p167 = scmp.eq.s32.totalorder %s15, 1
    %p168 = por %p166, %p167
    %p169 = scmp.ne.s32.totalorder %s161, %s164
    %p170 = scmp.eq.s32.totalorder %s15, 0
    %p171 = por %p169, %p170
    %p172 = scmp.ne.s32.totalorder %s161, %s164
    %p173 = scmp.eq.s32.totalorder %s20, 1
    %p174 = por %p172, %p173
    %p175 = scmp.ne.s32.totalorder %s164, %s165
    %p176 = scmp.eq.s32.totalorder %s20, 0
    %p177 = por %p175, %p176
    %p178 = scmp.ne.s32.totalorder %s164, %s165
    %p179 = scmp.eq.s32.totalorder %s21, 1
    %p180 = por %p178, %p179
    %p182 = scmp.ne.s32.totalorder %s165, %s181
    %p183 = scmp.eq.s32.totalorder %s21, 0
    %p184 = por %p182, %p183
    %s185 = ssub.s32 %s15, %s22
    %p186 = scmp.eq.s32.totalorder %s185, 0
    %s188 = sadd.s32 %s187, 1
    %s189 = scalar_select %p186, %s187, %s188
    %p192 = pneg %p186
    %p193 = scmp.eq.s32.totalorder %s15, 1
    %p194 = por %p192, %p193
    %p195 = scmp.ne.s32.totalorder %s187, %s190
    %p196 = scmp.eq.s32.totalorder %s15, 0
    %p197 = por %p195, %p196
    %p198 = scmp.ne.s32.totalorder %s187, %s190
    %p199 = scmp.eq.s32.totalorder %s20, 1
    %p200 = por %p198, %p199
    %p201 = scmp.ne.s32.totalorder %s190, %s191
    %p202 = scmp.eq.s32.totalorder %s20, 0
    %p203 = por %p201, %p202
    %p204 = scmp.ne.s32.totalorder %s190, %s191
    %p205 = scmp.eq.s32.totalorder %s21, 1
    %p206 = por %p204, %p205
    %p208 = scmp.ne.s32.totalorder %s191, %s207
    %p209 = scmp.eq.s32.totalorder %s21, 0
    %p210 = por %p208, %p209
    %s211 = ssub.s32 %s15, %s22
    %p212 = scmp.eq.s32.totalorder %s211, 0
    %s214 = sadd.s32 %s213, 1
    %s215 = scalar_select %p212, %s213, %s214
    %p218 = pneg %p212
    %p219 = scmp.eq.s32.totalorder %s15, 1
    %p220 = por %p218, %p219
    %p221 = scmp.ne.s32.totalorder %s213, %s216
    %p222 = scmp.eq.s32.totalorder %s15, 0
    %p223 = por %p221, %p222
    %p224 = scmp.ne.s32.totalorder %s213, %s216
    %p225 = scmp.eq.s32.totalorder %s20, 1
    %p226 = por %p224, %p225
    %p227 = scmp.ne.s32.totalorder %s216, %s217
    %p228 = scmp.eq.s32.totalorder %s20, 0
    %p229 = por %p227, %p228
    %p230 = scmp.ne.s32.totalorder %s216, %s217
    %p231 = scmp.eq.s32.totalorder %s21, 1
    %p232 = por %p230, %p231
    %p234 = scmp.ne.s32.totalorder %s217, %s233
    %p235 = scmp.eq.s32.totalorder %s21, 0
    %p236 = por %p234, %p235
    %p237 = scmp.le.s32.totalorder 1, %s15
    %p238 = scmp.lt.s32.totalorder %s15, 3
    %p239 = pnand %p237, %p238
    %p240 = pneg %p239
    // Predicated region
    $region9: #{inception_b_forward.3} parent=5 // pred_check
      _
    $region10: #{inception_b_forward.3} parent=5 // pred_check_branch
      %242 = sbr.rel (%p239) target = $region12
    $region11: #{inception_b_forward.3} parent=5 // pred_region
      %s243 = ssub.s32 %s15, 1
      // Predicated region
      $region13: #{inception_b_forward.3} parent=11 // pred_check
        %p244 = pneg %p88
      $region14: #{inception_b_forward.3} parent=11 // pred_check_branch
        %246 = sbr.rel (%p244) target = $region16
      $region15: #{inception_b_forward.3} parent=11 // pred_region
        _
      $region16: #{inception_b_forward.3} parent=11 // pred_fallthru
        _
      // Predicated region
      $region17: #{inception_b_forward.3} parent=11 // pred_check
        %p247 = pneg %p109
      $region18: #{inception_b_forward.3} parent=11 // pred_check_branch
        %249 = sbr.rel (%p247) target = $region20
      $region19: #{inception_b_forward.3} parent=11 // pred_region
        _
      $region20: #{inception_b_forward.3} parent=11 // pred_fallthru
        _
      // Predicated region
      $region21: #{inception_b_forward.3} parent=11 // pred_check
        %p250 = pneg %p130
      $region22: #{inception_b_forward.3} parent=11 // pred_check_branch
        %252 = sbr.rel (%p250) target = $region24
      $region23: #{inception_b_forward.3} parent=11 // pred_region
        _
      $region24: #{inception_b_forward.3} parent=11 // pred_fallthru
        _
      // Predicated region
      $region25: #{inception_b_forward.3} parent=11 // pred_check
        %p253 = pneg %p151
      $region26: #{inception_b_forward.3} parent=11 // pred_check_branch
        %255 = sbr.rel (%p253) target = $region28
      $region27: #{inception_b_forward.3} parent=11 // pred_region
        _
      $region28: #{inception_b_forward.3} parent=11 // pred_fallthru
        _
    $region12: #{inception_b_forward.3} parent=5 // pred_fallthru
      _
    %p256 = scmp.lt.s32.totalorder %s15, 2
    // Predicated region
    $region29: #{inception_b_forward.3} parent=5 // pred_check
      %p257 = pneg %p256
    $region30: #{inception_b_forward.3} parent=5 // pred_check_branch
      %259 = sbr.rel (%p257) target = $region32
    $region31: #{inception_b_forward.3} parent=5 // pred_region
      // Predicated region
      $region33: #{inception_b_forward.3} parent=31 // pred_check
        %p260 = pneg %p35
      $region34: #{inception_b_forward.3} parent=31 // pred_check_branch
        %262 = sbr.rel (%p260) target = $region36
      $region35: #{inception_b_forward.3} parent=31 // pred_region
        %p263 = scmp.lt.s32.totalorder %s15, 1
        %s264 = scalar_select %p263, %s15, 1
        %s265 = smul.addr %s264, 7
        %s266 = smul.addr %s265, 8
        %s267 = scalar_lea.vmem %s0, %s266
      $region36: #{inception_b_forward.3} parent=31 // pred_fallthru
        _
      // Predicated region
      $region37: #{inception_b_forward.3} parent=31 // pred_check
        %p268 = pneg %p61
      $region38: #{inception_b_forward.3} parent=31 // pred_check_branch
        %270 = sbr.rel (%p268) target = $region40
      $region39: #{inception_b_forward.3} parent=31 // pred_region
        %p271 = scmp.lt.s32.totalorder %s15, 1
        %s272 = scalar_select %p271, %s15, 1
        %s273 = smul.addr %s272, 32
        %s274 = smul.addr %s273, 8
        %s275 = scalar_lea.vmem %s1, %s274
      $region40: #{inception_b_forward.3} parent=31 // pred_fallthru
        _
    $region32: #{inception_b_forward.3} parent=5 // pred_fallthru
      _
    %p276 = scmp.le.s32.totalorder 1, %s15
    %p277 = scmp.lt.s32.totalorder %s15, 3
    %p278 = pnand %p276, %p277
    %p279 = pneg %p278
    // Predicated region
    $region41: #{inception_b_forward.3} parent=5 // pred_check
      _
    $region42: #{inception_b_forward.3} parent=5 // pred_check_branch
      %281 = sbr.rel (%p278) target = $region44
    $region43: #{inception_b_forward.3} parent=5 // pred_region
      %s282 = ssub.s32 %s15, 1
      %p283 = scmp.lt.s32.totalorder %s20, 1
      %s284 = scalar_select %p283, %s20, 1
      %s285 = smul.addr %s284, 7
      %s286 = smul.addr %s285, 8
      %s287 = scalar_lea.vmem %s0, %s286
      %p288 = pneg %p41
      %p289 = pneg %p38
      %p290 = scmp.lt.s32.totalorder %s20, 1
      %s291 = scalar_select %p290, %s20, 1
      %s292 = smul.addr %s291, 32
      %s293 = smul.addr %s292, 8
      %s294 = scalar_lea.vmem %s1, %s293
      %p295 = pneg %p67
      %p296 = pneg %p64
      %p297 = pneg %p88
      %p298 = pneg %p85
      %p299 = pneg %p109
      %p300 = pneg %p106
      %p301 = pneg %p130
      %p302 = pneg %p127
      %p303 = pneg %p151
      %p304 = pneg %p148
      %p305 = pneg %p177
      %p306 = pneg %p174
      %p307 = scmp.lt.s32.totalorder %s20, 1
      %s308 = scalar_select %p307, %s20, 1
      %s309 = smul.addr %s308, 21
      %s310 = smul.addr %s309, 8
      %s311 = scalar_lea.vmem %s6, %s310
      %p312 = pneg %p203
      %p313 = pneg %p200
      %p314 = scmp.lt.s32.totalorder %s20, 1
      %s315 = scalar_select %p314, %s20, 1
      %s316 = smul.addr %s315, 32
      %s317 = smul.addr %s316, 8
      %s318 = scalar_lea.vmem %s7, %s317
      %p319 = pneg %p229
      %p320 = pneg %p226
      %p321 = scmp.lt.s32.totalorder %s20, 1
      %s322 = scalar_select %p321, %s20, 1
      %s323 = smul.addr %s322, 7
      %s324 = smul.addr %s323, 8
      %s325 = scalar_lea.vmem %s8, %s324
      %p326 = scmp.lt.s32.totalorder %s20, 1
      %s327 = scalar_select %p326, %s20, 1
      %s328 = smul.addr %s327, 7
      %s329 = smul.addr %s328, 8
      %s330 = scalar_lea.vmem %s0, %s329
      %p331 = scmp.lt.s32.totalorder %s20, 1
      %s332 = scalar_select %p331, %s20, 1
      %s333 = smul.addr %s332, 32
      %s334 = smul.addr %s333, 8
      %s335 = scalar_lea.vmem %s1, %s334
      %p336 = scmp.lt.s32.totalorder %s20, 1
      %s337 = scalar_select %p336, %s20, 1
      %s338 = smul.addr %s337, 21
      %s339 = smul.addr %s338, 8
      %s340 = scalar_lea.vmem %s6, %s339
      %p341 = scmp.lt.s32.totalorder %s20, 1
      %s342 = scalar_select %p341, %s20, 1
      %s343 = smul.addr %s342, 32
      %s344 = smul.addr %s343, 8
      %s345 = scalar_lea.vmem %s7, %s344
      %p346 = scmp.lt.s32.totalorder %s20, 1
      %s347 = scalar_select %p346, %s20, 1
      %s348 = smul.addr %s347, 7
      %s349 = smul.addr %s348, 8
      %s350 = scalar_lea.vmem %s8, %s349
      %v351 = vld [vmem:[%s330] sm:$0xff]
      %v352 = vld [vmem:[%s330 + $0x8] sm:$0xff]
      %v353 = vld [vmem:[%s330 + $0x10] sm:$0xff]
      %v354 = vld [vmem:[%s330 + $0x18] sm:$0xff]
      %v355 = vld [vmem:[%s330 + $0x20] sm:$0xff]
      %v356 = vld [vmem:[%s330 + $0x28] sm:$0xff]
      %v357 = vld [vmem:[%s330 + $0x30] sm:$0x1]
      %v358 = vld [vmem:[%s2] sm:$0xff]
      %v359 = vld [vmem:[%s2 + $0x8] sm:$0xff]
      %v360 = vld [vmem:[%s2 + $0x10] sm:$0xff]
      %v361 = vld [vmem:[%s2 + $0x18] sm:$0xff]
      %v362 = vld [vmem:[%s2 + $0x20] sm:$0xff]
      %v363 = vld [vmem:[%s2 + $0x28] sm:$0xff]
      %v364 = vld [vmem:[%s2 + $0x30] sm:$0xff]
      %v365 = vld [vmem:[%s2 + $0x38] sm:$0xff]
      %v366 = vld [vmem:[%s2 + $0x40] sm:$0xff]
      %v367 = vld [vmem:[%s2 + $0x48] sm:$0xff]
      %v368 = vld [vmem:[%s2 + $0x50] sm:$0xff]
      %v369 = vld [vmem:[%s2 + $0x58] sm:$0xff]
      %v370 = vld [vmem:[%s2 + $0x60] sm:$0xf]
      %v371 = vld [vmem:[%s2 + $0x68] sm:$0xf]
      %v372 = vld [vmem:[%s2 + $0x70] sm:$0xf]
      %v373 = vld [vmem:[%s3] sm:$0x7]
      %v375 = vlaneseq
      %v376 = vshrl.u32 %v375, 7
      %v377 = vsub.s32 0, %v376
      %v378 = vrot.slane %v373, %v377
      %v379 = vlaneseq
      %v380 = vshrl.u32 %v379, 7
      %v381 = vsub.s32 1, %v380
      %v382 = vrot.slane %v373, %v381
      %v383 = vlaneseq
      %v384 = vshrl.u32 %v383, 7
      %v385 = vsub.s32 2, %v384
      %v386 = vrot.slane %v373, %v385
      %vm390 = vcmask 293888
      %v392 = vsel %vm390, %v351, 0
      %v395 = vsel %vm390, %v352, 0
      %v398 = vsel %vm390, %v353, 0
      %v401 = vsel %vm390, %v354, 0
      %v404 = vsel %vm390, %v355, 0
      %v407 = vsel %vm390, %v356, 0
      %v410 = vsel %vm390, %v357, 0
      %vm412 = vcmask 1043456
      %v414 = vsel %vm412, %v370, 0
      %v417 = vsel %vm412, %v371, 0
      %v420 = vsel %vm412, %v372, 0
      %422 = vmatprep.subr.mxu0 %v359
      %423 = vmatpush1.msra.mxu0 %v358
      %424 = vmatprep.subr.mxu0 %v362
      %425 = vmatpush1.msra.mxu0 %v361
      %426 = vmatprep.subr.mxu0 %v365
      %427 = vmatpush1.msra.mxu0 %v364
      %428 = vmatprep.subr.mxu0 %v368
      %429 = vmatpush1.msra.mxu0 %v367
      %430 = vmatprep.subr.mxu0 %v417
      %431 = vmatpush1.msra.mxu0 %v414
      %432 = vmatprep.subr.mxu0 0.0
      %433 = vmatpush1.msra.mxu0 0.0
      %434 = vmatprep.subr.mxu0 0.0
      %435 = vmatpush1.msra.mxu0 0.0
      %436 = vmatprep.subr.mxu0 0.0
      %437 = vmatpush1.msra.mxu0 0.0
      %438 = vmatprep.subr.mxu0 0.0
      %439 = vmatpush1.msra.mxu0 0.0
      %440 = vmatprep.subr.mxu0 0.0
      %441 = vmatpush1.msra.mxu0 0.0
      %442 = vmatprep.subr.mxu0 0.0
      %443 = vmatpush1.msra.mxu0 0.0
      %444 = vmatprep.subr.mxu0 0.0
      %445 = vmatpush1.msra.mxu0 0.0
      %446 = vmatprep.subr.mxu0 0.0
      %447 = vmatpush1.msra.mxu0 0.0
      %448 = vmatprep.subr.mxu0 0.0
      %449 = vmatpush1.msra.mxu0 0.0
      %450 = vmatprep.subr.mxu0 0.0
      %451 = vmatpush1.msra.mxu0 0.0
      %452 = vmatprep.subr.mxu0 0.0
      %453 = vmatpush1.msra.mxu0 0.0
      %454 = vmatprep.subr.mxu0 0.0
      %455 = vmatpush1.msra.mxu0 0.0
      %456 = vmatprep.subr.mxu0 0.0
      %457 = vmatpush1.msra.mxu0 0.0
      %458 = vmatprep.subr.mxu0 0.0
      %459 = vmatpush1.msra.mxu0 0.0
      %460 = vmatprep.subr.mxu0 0.0
      %461 = vmatpush1.msra.mxu0 0.0
      %462 = vmatprep.subr.mxu0 0.0
      %463 = vmatpush1.msra.mxu0 0.0
      %464 = vmatprep.subr.mxu0 0.0
      %465 = vmatpush1.msra.mxu0 0.0
      %466 = vmatprep.subr.mxu0 0.0
      %467 = vmatpush1.msra.mxu0 0.0
      %468 = vmatprep.subr.mxu0 0.0
      %469 = vmatpush1.msra.mxu0 0.0
      %470 = vmatprep.subr.mxu0 0.0
      %471 = vmatpush1.msra.mxu0 0.0
      %472 = vmatprep.subr.mxu0 0.0
      %473 = vmatpush1.msra.mxu0 0.0
      %474 = vmatprep.subr.mxu0 0.0
      %475 = vmatpush1.msra.mxu0 0.0
      %476 = vmatprep.subr.mxu0 0.0
      %477 = vmatpush1.msra.mxu0 0.0
      %478 = vmatprep.subr.mxu0 0.0
      %479 = vmatpush1.msra.mxu0 0.0
      %480 = vmatprep.subr.mxu0 0.0
      %481 = vmatpush1.msra.mxu0 0.0
      %482 = vmatprep.subr.mxu0 0.0
      %483 = vmatpush1.msra.mxu0 0.0
      %484 = vmatprep.subr.mxu0 0.0
      %485 = vmatpush1.msra.mxu0 0.0
      %486 = vmatprep.mubr.f32.mxu0 0.0
      %487 = vmatmul.mubr.f32.gmra.mrb[0].mxu0 %v392
      %v488 = vpop.f32.mrb[0].mxu0
      %v489 = vadd.f32 %v378, %v488
      %v490 = vpop.f32.mrb[0].mxu0
      %v491 = vadd.f32 %v382, %v490
      %492 = vmatprep.mubr.f32.mxu0 0.0
      %493 = vmatmul.mubr.f32.gmra.mrb[0].mxu0 %v395
      %v494 = vpop.f32.mrb[0].mxu0
      %v495 = vadd.f32 %v378, %v494
      %v496 = vpop.f32.mrb[0].mxu0
      %v497 = vadd.f32 %v382, %v496
      %498 = vmatprep.mubr.f32.mxu0 0.0
      %499 = vmatmul.mubr.f32.gmra.mrb[0].mxu0 %v398
      %v500 = vpop.f32.mrb[0].mxu0
      %v501 = vadd.f32 %v378, %v500
      %v502 = vpop.f32.mrb[0].mxu0
      %v503 = vadd.f32 %v382, %v502
      %504 = vmatprep.mubr.f32.mxu0 0.0
      %505 = vmatmul.mubr.f32.gmra.mrb[0].mxu0 %v401
      %v506 = vpop.f32.mrb[0].mxu0
      %v507 = vadd.f32 %v378, %v506
      %v508 = vpop.f32.mrb[0].mxu0
      %v509 = vadd.f32 %v382, %v508
      %510 = vmatprep.mubr.f32.mxu0 0.0
      %511 = vmatmul.mubr.f32.gmra.mrb[0].mxu0 %v404
      %v512 = vpop.f32.mrb[0].mxu0
      %v513 = vadd.f32 %v378, %v512
      %v514 = vpop.f32.mrb[0].mxu0
      %v515 = vadd.f32 %v382, %v514
      %516 = vmatprep.mubr.f32.mxu0 0.0
      %517 = vmatmul.mubr.f32.gmra.mrb[0].mxu0 %v407
      %v518 = vpop.f32.mrb[0].mxu0
      %v519 = vadd.f32 %v378, %v518
      %v520 = vpop.f32.mrb[0].mxu0
      %v521 = vadd.f32 %v382, %v520
      %522 = vmatprep.mubr.f32.mxu0 0.0
      %523 = vmatmul.mubr.f32.gmra.mrb[0].mxu0 %v410
      %v524 = vpop.f32.mrb[0].mxu0
      %v525 = vadd.f32 %v378, %v524
      %v526 = vpop.f32.mrb[0].mxu0
      %v527 = vadd.f32 %v382, %v526
      %528 = vdwg.mxu0
      %529 = vmatprep.subr.mxu0 0.0
      %530 = vmatpush1.msra.mxu0 %v360
      %531 = vmatprep.subr.mxu0 0.0
      %532 = vmatpush1.msra.mxu0 %v363
      %533 = vmatprep.subr.mxu0 0.0
      %534 = vmatpush1.msra.mxu0 %v366
      %535 = vmatprep.subr.mxu0 0.0
      %536 = vmatpush1.msra.mxu0 %v369
      %537 = vmatprep.subr.mxu0 0.0
      %538 = vmatpush1.msra.mxu0 %v420
      %539 = vmatprep.subr.mxu0 0.0
      %540 = vmatpush1.msra.mxu0 0.0
      %541 = vmatprep.subr.mxu0 0.0
      %542 = vmatpush1.msra.mxu0 0.0
      %543 = vmatprep.subr.mxu0 0.0
      %544 = vmatpush1.msra.mxu0 0.0
      %545 = vmatprep.subr.mxu0 0.0
      %546 = vmatpush1.msra.mxu0 0.0
      %547 = vmatprep.subr.mxu0 0.0
      %548 = vmatpush1.msra.mxu0 0.0
      %549 = vmatprep.subr.mxu0 0.0
      %550 = vmatpush1.msra.mxu0 0.0
      %551 = vmatprep.subr.mxu0 0.0
      %552 = vmatpush1.msra.mxu0 0.0
      %553 = vmatprep.subr.mxu0 0.0
      %554 = vmatpush1.msra.mxu0 0.0
      %555 = vmatprep.subr.mxu0 0.0
      %556 = vmatpush1.msra.mxu0 0.0
      %557 = vmatprep.subr.mxu0 0.0
      %558 = vmatpush1.msra.mxu0 0.0
      %559 = vmatprep.subr.mxu0 0.0
      %560 = vmatpush1.msra.mxu0 0.0
      %561 = vmatprep.subr.mxu0 0.0
      %562 = vmatpush1.msra.mxu0 0.0
      %563 = vmatprep.subr.mxu0 0.0
      %564 = vmatpush1.msra.mxu0 0.0
      %565 = vmatprep.subr.mxu0 0.0
      %566 = vmatpush1.msra.mxu0 0.0
      %567 = vmatprep.subr.mxu0 0.0
      %568 = vmatpush1.msra.mxu0 0.0
      %569 = vmatprep.subr.mxu0 0.0
      %570 = vmatpush1.msra.mxu0 0.0
      %571 = vmatprep.subr.mxu0 0.0
      %572 = vmatpush1.msra.mxu0 0.0
      %573 = vmatprep.subr.mxu0 0.0
      %574 = vmatpush1.msra.mxu0 0.0
      %575 = vmatprep.subr.mxu0 0.0
      %576 = vmatpush1.msra.mxu0 0.0
      %577 = vmatprep.subr.mxu0 0.0
      %578 = vmatpush1.msra.mxu0 0.0
      %579 = vmatprep.subr.mxu0 0.0
      %580 = vmatpush1.msra.mxu0 0.0
      %581 = vmatprep.subr.mxu0 0.0
      %582 = vmatpush1.msra.mxu0 0.0
      %583 = vmatprep.subr.mxu0 0.0
      %584 = vmatpush1.msra.mxu0 0.0
      %585 = vmatprep.subr.mxu0 0.0
      %586 = vmatpush1.msra.mxu0 0.0
      %587 = vmatprep.subr.mxu0 0.0
      %588 = vmatpush1.msra.mxu0 0.0
      %589 = vmatprep.subr.mxu0 0.0
      %590 = vmatpush1.msra.mxu0 0.0
      %591 = vmatprep.subr.mxu0 0.0
      %592 = vmatpush1.msra.mxu0 0.0
      %593 = vmatprep.mubr.f32.mxu0 0.0
      %594 = vmatmul.mubr.f32.gmra.mrb[0].mxu0 %v392
      %v595 = vpop.f32.mrb[0].mxu0
      %v596 = vadd.f32 %v386, %v595
      %v597 = vpop.f32.mrb[0].mxu0
      %598 = vmatprep.mubr.f32.mxu0 0.0
      %599 = vmatmul.mubr.f32.gmra.mrb[0].mxu0 %v395
      %v600 = vpop.f32.mrb[0].mxu0
      %v601 = vadd.f32 %v386, %v600
      %v602 = vpop.f32.mrb[0].mxu0
      %603 = vmatprep.mubr.f32.mxu0 0.0
      %604 = vmatmul.mubr.f32.gmra.mrb[0].mxu0 %v398
      %v605 = vpop.f32.mrb[0].mxu0
      %v606 = vadd.f32 %v386, %v605
      %v607 = vpop.f32.mrb[0].mxu0
      %608 = vmatprep.mubr.f32.mxu0 0.0
      %609 = vmatmul.mubr.f32.gmra.mrb[0].mxu0 %v401
      %v610 = vpop.f32.mrb[0].mxu0
      %v611 = vadd.f32 %v386, %v610
      %v612 = vpop.f32.mrb[0].mxu0
      %613 = vmatprep.mubr.f32.mxu0 0.0
      %614 = vmatmul.mubr.f32.gmra.mrb[0].mxu0 %v404
      %v615 = vpop.f32.mrb[0].mxu0
      %v616 = vadd.f32 %v386, %v615
      %v617 = vpop.f32.mrb[0].mxu0
      %618 = vmatprep.mubr.f32.mxu0 0.0
      %619 = vmatmul.mubr.f32.gmra.mrb[0].mxu0 %v407
      %v620 = vpop.f32.mrb[0].mxu0
      %v621 = vadd.f32 %v386, %v620
      %v622 = vpop.f32.mrb[0].mxu0
      %623 = vmatprep.mubr.f32.mxu0 0.0
      %624 = vmatmul.mubr.f32.gmra.mrb[0].mxu0 %v410
      %v625 = vpop.f32.mrb[0].mxu0
      %v626 = vadd.f32 %v386, %v625
      %v627 = vpop.f32.mrb[0].mxu0
      %628 = vdwg.mxu0
      %v629 = vmax.f32 %v489, 0.0
      %v630 = vmax.f32 %v491, 0.0
      %v631 = vmax.f32 %v596, 0.0
      %v632 = vmax.f32 %v495, 0.0
      %v633 = vmax.f32 %v497, 0.0
      %v634 = vmax.f32 %v601, 0.0
      %v635 = vmax.f32 %v501, 0.0
      %v636 = vmax.f32 %v503, 0.0
      %v637 = vmax.f32 %v606, 0.0
      %v638 = vmax.f32 %v507, 0.0
      %v639 = vmax.f32 %v509, 0.0
      %v640 = vmax.f32 %v611, 0.0
      %v641 = vmax.f32 %v513, 0.0
      %v642 = vmax.f32 %v515, 0.0
      %v643 = vmax.f32 %v616, 0.0
      %v644 = vmax.f32 %v519, 0.0
      %v645 = vmax.f32 %v521, 0.0
      %v646 = vmax.f32 %v621, 0.0
      %v647 = vmax.f32 %v525, 0.0
      %v648 = vmax.f32 %v527, 0.0
      %v649 = vmax.f32 %v626, 0.0
      %650 = vst [vmem:[%s340] sm:$0xff] %v629
      %651 = vst [vmem:[%s340 + $0x8] sm:$0xff] %v630
      %652 = vst [vmem:[%s340 + $0x10] sm:$0xff] %v631
      %653 = vst [vmem:[%s340 + $0x18] sm:$0xff] %v632
      %654 = vst [vmem:[%s340 + $0x20] sm:$0xff] %v633
      %655 = vst [vmem:[%s340 + $0x28] sm:$0xff] %v634
      %656 = vst [vmem:[%s340 + $0x30] sm:$0xff] %v635
      %657 = vst [vmem:[%s340 + $0x38] sm:$0xff] %v636
      %658 = vst [vmem:[%s340 + $0x40] sm:$0xff] %v637
      %659 = vst [vmem:[%s340 + $0x48] sm:$0xff] %v638
      %660 = vst [vmem:[%s340 + $0x50] sm:$0xff] %v639
      %661 = vst [vmem:[%s340 + $0x58] sm:$0xff] %v640
      %662 = vst [vmem:[%s340 + $0x60] sm:$0xff] %v641
      %663 = vst [vmem:[%s340 + $0x68] sm:$0xff] %v642
      %664 = vst [vmem:[%s340 + $0x70] sm:$0xff] %v643
      %665 = vst [vmem:[%s340 + $0x78] sm:$0xff] %v644
      %666 = vst [vmem:[%s340 + $0x80] sm:$0xff] %v645
      %667 = vst [vmem:[%s340 + $0x88] sm:$0xff] %v646
      %668 = vst [vmem:[%s340 + $0x90] sm:$0x1] %v647
      %669 = vst [vmem:[%s340 + $0x98] sm:$0x1] %v648
      %670 = vst [vmem:[%s340 + $0xa0] sm:$0x1] %v649
      %v671 = vld [vmem:[%s335] sm:$0xff]
      %v672 = vld [vmem:[%s335 + $0x8] sm:$0xff]
      %v673 = vld [vmem:[%s335 + $0x10] sm:$0xff]
      %v674 = vld [vmem:[%s335 + $0x18] sm:$0xff]
      %v675 = vld [vmem:[%s335 + $0x20] sm:$0xff]
      %v676 = vld [vmem:[%s335 + $0x28] sm:$0xff]
      %v677 = vld [vmem:[%s335 + $0x30] sm:$0xff]
      %v678 = vld [vmem:[%s335 + $0x38] sm:$0xff]
      %v679 = vld [vmem:[%s335 + $0x40] sm:$0xff]
      %v680 = vld [vmem:[%s335 + $0x48] sm:$0xff]
      %v681 = vld [vmem:[%s335 + $0x50] sm:$0xff]
      %v682 = vld [vmem:[%s335 + $0x58] sm:$0xff]
      %v683 = vld [vmem:[%s335 + $0x60] sm:$0xff]
      %v684 = vld [vmem:[%s335 + $0x68] sm:$0xff]
      %v685 = vld [vmem:[%s335 + $0x70] sm:$0xff]
      %v686 = vld [vmem:[%s335 + $0x78] sm:$0xff]
      %v687 = vld [vmem:[%s335 + $0x80] sm:$0xff]
      %v688 = vld [vmem:[%s335 + $0x88] sm:$0xff]
      %v689 = vld [vmem:[%s335 + $0x90] sm:$0xff]
      %v690 = vld [vmem:[%s335 + $0x98] sm:$0xff]
      %v691 = vld [vmem:[%s335 + $0xa0] sm:$0xff]
      %v692 = vld [vmem:[%s335 + $0xa8] sm:$0xff]
      %v693 = vld [vmem:[%s335 + $0xb0] sm:$0xff]
      %v694 = vld [vmem:[%s335 + $0xb8] sm:$0xff]
      %v695 = vld [vmem:[%s335 + $0xc0] sm:$0xff]
      %v696 = vld [vmem:[%s335 + $0xc8] sm:$0xff]
      %v697 = vld [vmem:[%s335 + $0xd0] sm:$0xff]
      %v698 = vld [vmem:[%s335 + $0xd8] sm:$0xff]
      %v699 = vld [vmem:[%s335 + $0xe0] sm:$0xff]
      %v700 = vld [vmem:[%s335 + $0xe8] sm:$0xff]
      %v701 = vld [vmem:[%s335 + $0xf0] sm:$0xff]
      %v702 = vld [vmem:[%s335 + $0xf8] sm:$0xff]
      %v703 = vld [vmem:[%s4] sm:$0xf]
      %v704 = vld [vmem:[%s5] sm:$0x1]
      %v706 = vlaneseq
      %v707 = vshrl.u32 %v706, 7
      %v708 = vsub.s32 0, %v707
      %v709 = vrot.slane %v704, %v708
      %vm711 = vcmask 31744
      %v713 = vsel %vm711, %v671, 0
      %v716 = vsel %vm711, %v672, 0
      %v719 = vsel %vm711, %v673, 0
      %v722 = vsel %vm711, %v674, 0
      %v725 = vsel %vm711, %v675, 0
      %v728 = vsel %vm711, %v676, 0
      %v731 = vsel %vm711, %v677, 0
      %v734 = vsel %vm711, %v678, 0
      %v737 = vsel %vm711, %v679, 0
      %v740 = vsel %vm711, %v680, 0
      %v743 = vsel %vm711, %v681, 0
      %v746 = vsel %vm711, %v682, 0
      %v749 = vsel %vm711, %v683, 0
      %v752 = vsel %vm711, %v684, 0
      %v755 = vsel %vm711, %v685, 0
      %v758 = vsel %vm711, %v686, 0
      %v761 = vsel %vm711, %v687, 0
      %v764 = vsel %vm711, %v688, 0
      %v767 = vsel %vm711, %v689, 0
      %v770 = vsel %vm711, %v690, 0
      %v773 = vsel %vm711, %v691, 0
      %v776 = vsel %vm711, %v692, 0
      %v779 = vsel %vm711, %v693, 0
      %v782 = vsel %vm711, %v694, 0
      %v785 = vsel %vm711, %v695, 0
      %v788 = vsel %vm711, %v696, 0
      %v791 = vsel %vm711, %v697, 0
      %v794 = vsel %vm711, %v698, 0
      %v797 = vsel %vm711, %v699, 0
      %v800 = vsel %vm711, %v700, 0
      %v803 = vsel %vm711, %v701, 0
      %v806 = vsel %vm711, %v702, 0
      %v809 = vsel %vm412, %v703, 0
      %811 = vmatprep.subr.mxu0 0.0
      %812 = vmatpush1.msra.mxu0 %v809
      %813 = vmatprep.subr.mxu0 0.0
      %814 = vmatpush1.msra.mxu0 0.0
      %815 = vmatprep.subr.mxu0 0.0
      %816 = vmatpush1.msra.mxu0 0.0
      %817 = vmatprep.subr.mxu0 0.0
      %818 = vmatpush1.msra.mxu0 0.0
      %819 = vmatprep.subr.mxu0 0.0
      %820 = vmatpush1.msra.mxu0 0.0
      %821 = vmatprep.subr.mxu0 0.0
      %822 = vmatpush1.msra.mxu0 0.0
      %823 = vmatprep.subr.mxu0 0.0
      %824 = vmatpush1.msra.mxu0 0.0
      %825 = vmatprep.subr.mxu0 0.0
      %826 = vmatpush1.msra.mxu0 0.0
      %827 = vmatprep.subr.mxu0 0.0
      %828 = vmatpush1.msra.mxu0 0.0
      %829 = vmatprep.subr.mxu0 0.0
      %830 = vmatpush1.msra.mxu0 0.0
      %831 = vmatprep.subr.mxu0 0.0
      %832 = vmatpush1.msra.mxu0 0.0
      %833 = vmatprep.subr.mxu0 0.0
      %834 = vmatpush1.msra.mxu0 0.0
      %835 = vmatprep.subr.mxu0 0.0
      %836 = vmatpush1.msra.mxu0 0.0
      %837 = vmatprep.subr.mxu0 0.0
      %838 = vmatpush1.msra.mxu0 0.0
      %839 = vmatprep.subr.mxu0 0.0
      %840 = vmatpush1.msra.mxu0 0.0
      %841 = vmatprep.subr.mxu0 0.0
      %842 = vmatpush1.msra.mxu0 0.0
      %843 = vmatprep.subr.mxu0 0.0
      %844 = vmatpush1.msra.mxu0 0.0
      %845 = vmatprep.subr.mxu0 0.0
      %846 = vmatpush1.msra.mxu0 0.0
      %847 = vmatprep.subr.mxu0 0.0
      %848 = vmatpush1.msra.mxu0 0.0
      %849 = vmatprep.subr.mxu0 0.0
      %850 = vmatpush1.msra.mxu0 0.0
      %851 = vmatprep.subr.mxu0 0.0
      %852 = vmatpush1.msra.mxu0 0.0
      %853 = vmatprep.subr.mxu0 0.0
      %854 = vmatpush1.msra.mxu0 0.0
      %855 = vmatprep.subr.mxu0 0.0
      %856 = vmatpush1.msra.mxu0 0.0
      %857 = vmatprep.subr.mxu0 0.0
      %858 = vmatpush1.msra.mxu0 0.0
      %859 = vmatprep.subr.mxu0 0.0
      %860 = vmatpush1.msra.mxu0 0.0
      %861 = vmatprep.subr.mxu0 0.0
      %862 = vmatpush1.msra.mxu0 0.0
      %863 = vmatprep.subr.mxu0 0.0
      %864 = vmatpush1.msra.mxu0 0.0
      %865 = vmatprep.subr.mxu0 0.0
      %866 = vmatpush1.msra.mxu0 0.0
      %867 = vmatprep.subr.mxu0 0.0
      %868 = vmatpush1.msra.mxu0 0.0
      %869 = vmatprep.subr.mxu0 0.0
      %870 = vmatpush1.msra.mxu0 0.0
      %871 = vmatprep.subr.mxu0 0.0
      %872 = vmatpush1.msra.mxu0 0.0
      %873 = vmatprep.subr.mxu0 0.0
      %874 = vmatpush1.msra.mxu0 0.0
      %875 = vmatprep.mubr.f32.mxu0 0.0
      %876 = vmatmul.mubr.f32.gmra.mrb[0].mxu0 %v713
      %v877 = vpop.f32.mrb[0].mxu0
      %v878 = vadd.f32 %v709, %v877
      %v879 = vpop.f32.mrb[0].mxu0
      %880 = vmatprep.mubr.f32.mxu0 0.0
      %881 = vmatmul.mubr.f32.gmra.mrb[0].mxu0 %v716
      %v882 = vpop.f32.mrb[0].mxu0
      %v883 = vadd.f32 %v709, %v882
      %v884 = vpop.f32.mrb[0].mxu0
      %885 = vmatprep.mubr.f32.mxu0 0.0
      %886 = vmatmul.mubr.f32.gmra.mrb[0].mxu0 %v719
      %v887 = vpop.f32.mrb[0].mxu0
      %v888 = vadd.f32 %v709, %v887
      %v889 = vpop.f32.mrb[0].mxu0
      %890 = vmatprep.mubr.f32.mxu0 0.0
      %891 = vmatmul.mubr.f32.gmra.mrb[0].mxu0 %v722
      %v892 = vpop.f32.mrb[0].mxu0
      %v893 = vadd.f32 %v709, %v892
      %v894 = vpop.f32.mrb[0].mxu0
      %895 = vmatprep.mubr.f32.mxu0 0.0
      %896 = vmatmul.mubr.f32.gmra.mrb[0].mxu0 %v725
      %v897 = vpop.f32.mrb[0].mxu0
      %v898 = vadd.f32 %v709, %v897
      %v899 = vpop.f32.mrb[0].mxu0
      %900 = vmatprep.mubr.f32.mxu0 0.0
      %901 = vmatmul.mubr.f32.gmra.mrb[0].mxu0 %v728
      %v902 = vpop.f32.mrb[0].mxu0
      %v903 = vadd.f32 %v709, %v902
      %v904 = vpop.f32.mrb[0].mxu0
      %905 = vmatprep.mubr.f32.mxu0 0.0
      %906 = vmatmul.mubr.f32.gmra.mrb[0].mxu0 %v731
      %v907 = vpop.f32.mrb[0].mxu0
      %v908 = vadd.f32 %v709, %v907
      %v909 = vpop.f32.mrb[0].mxu0
      %910 = vmatprep.mubr.f32.mxu0 0.0
      %911 = vmatmul.mubr.f32.gmra.mrb[0].mxu0 %v734
      %v912 = vpop.f32.mrb[0].mxu0
      %v913 = vadd.f32 %v709, %v912
      %v914 = vpop.f32.mrb[0].mxu0
      %915 = vmatprep.mubr.f32.mxu0 0.0
      %916 = vmatmul.mubr.f32.gmra.mrb[0].mxu0 %v737
      %v917 = vpop.f32.mrb[0].mxu0
      %v918 = vadd.f32 %v709, %v917
      %v919 = vpop.f32.mrb[0].mxu0
      %920 = vmatprep.mubr.f32.mxu0 0.0
      %921 = vmatmul.mubr.f32.gmra.mrb[0].mxu0 %v740
      %v922 = vpop.f32.mrb[0].mxu0
      %v923 = vadd.f32 %v709, %v922
      %v924 = vpop.f32.mrb[0].mxu0
      %925 = vmatprep.mubr.f32.mxu0 0.0
      %926 = vmatmul.mubr.f32.gmra.mrb[0].mxu0 %v743
      %v927 = vpop.f32.mrb[0].mxu0
      %v928 = vadd.f32 %v709, %v927
      %v929 = vpop.f32.mrb[0].mxu0
      %930 = vmatprep.mubr.f32.mxu0 0.0
      %931 = vmatmul.mubr.f32.gmra.mrb[0].mxu0 %v746
      %v932 = vpop.f32.mrb[0].mxu0
      %v933 = vadd.f32 %v709, %v932
      %v934 = vpop.f32.mrb[0].mxu0
      %935 = vmatprep.mubr.f32.mxu0 0.0
      %936 = vmatmul.mubr.f32.gmra.mrb[0].mxu0 %v749
      %v937 = vpop.f32.mrb[0].mxu0
      %v938 = vadd.f32 %v709, %v937
      %v939 = vpop.f32.mrb[0].mxu0
      %940 = vmatprep.mubr.f32.mxu0 0.0
      %941 = vmatmul.mubr.f32.gmra.mrb[0].mxu0 %v752
      %v942 = vpop.f32.mrb[0].mxu0
      %v943 = vadd.f32 %v709, %v942
      %v944 = vpop.f32.mrb[0].mxu0
      %945 = vmatprep.mubr.f32.mxu0 0.0
      %946 = vmatmul.mubr.f32.gmra.mrb[0].mxu0 %v755
      %v947 = vpop.f32.mrb[0].mxu0
      %v948 = vadd.f32 %v709, %v947
      %v949 = vpop.f32.mrb[0].mxu0
      %950 = vmatprep.mubr.f32.mxu0 0.0
      %951 = vmatmul.mubr.f32.gmra.mrb[0].mxu0 %v758
      %v952 = vpop.f32.mrb[0].mxu0
      %v953 = vadd.f32 %v709, %v952
      %v954 = vpop.f32.mrb[0].mxu0
      %955 = vmatprep.mubr.f32.mxu0 0.0
      %956 = vmatmul.mubr.f32.gmra.mrb[0].mxu0 %v761
      %v957 = vpop.f32.mrb[0].mxu0
      %v958 = vadd.f32 %v709, %v957
      %v959 = vpop.f32.mrb[0].mxu0
      %960 = vmatprep.mubr.f32.mxu0 0.0
      %961 = vmatmul.mubr.f32.gmra.mrb[0].mxu0 %v764
      %v962 = vpop.f32.mrb[0].mxu0
      %v963 = vadd.f32 %v709, %v962
      %v964 = vpop.f32.mrb[0].mxu0
      %965 = vmatprep.mubr.f32.mxu0 0.0
      %966 = vmatmul.mubr.f32.gmra.mrb[0].mxu0 %v767
      %v967 = vpop.f32.mrb[0].mxu0
      %v968 = vadd.f32 %v709, %v967
      %v969 = vpop.f32.mrb[0].mxu0
      %970 = vmatprep.mubr.f32.mxu0 0.0
      %971 = vmatmul.mubr.f32.gmra.mrb[0].mxu0 %v770
      %v972 = vpop.f32.mrb[0].mxu0
      %v973 = vadd.f32 %v709, %v972
      %v974 = vpop.f32.mrb[0].mxu0
      %975 = vmatprep.mubr.f32.mxu0 0.0
      %976 = vmatmul.mubr.f32.gmra.mrb[0].mxu0 %v773
      %v977 = vpop.f32.mrb[0].mxu0
      %v978 = vadd.f32 %v709, %v977
      %v979 = vpop.f32.mrb[0].mxu0
      %980 = vmatprep.mubr.f32.mxu0 0.0
      %981 = vmatmul.mubr.f32.gmra.mrb[0].mxu0 %v776
      %v982 = vpop.f32.mrb[0].mxu0
      %v983 = vadd.f32 %v709, %v982
      %v984 = vpop.f32.mrb[0].mxu0
      %985 = vmatprep.mubr.f32.mxu0 0.0
      %986 = vmatmul.mubr.f32.gmra.mrb[0].mxu0 %v779
      %v987 = vpop.f32.mrb[0].mxu0
      %v988 = vadd.f32 %v709, %v987
      %v989 = vpop.f32.mrb[0].mxu0
      %990 = vmatprep.mubr.f32.mxu0 0.0
      %991 = vmatmul.mubr.f32.gmra.mrb[0].mxu0 %v782
      %v992 = vpop.f32.mrb[0].mxu0
      %v993 = vadd.f32 %v709, %v992
      %v994 = vpop.f32.mrb[0].mxu0
      %995 = vmatprep.mubr.f32.mxu0 0.0
      %996 = vmatmul.mubr.f32.gmra.mrb[0].mxu0 %v785
      %v997 = vpop.f32.mrb[0].mxu0
      %v998 = vadd.f32 %v709, %v997
      %v999 = vpop.f32.mrb[0].mxu0
      %1000 = vmatprep.mubr.f32.mxu0 0.0
      %1001 = vmatmul.mubr.f32.gmra.mrb[0].mxu0 %v788
      %v1002 = vpop.f32.mrb[0].mxu0
      %v1003 = vadd.f32 %v709, %v1002
      %v1004 = vpop.f32.mrb[0].mxu0
      %1005 = vmatprep.mubr.f32.mxu0 0.0
      %1006 = vmatmul.mubr.f32.gmra.mrb[0].mxu0 %v791
      %v1007 = vpop.f32.mrb[0].mxu0
      %v1008 = vadd.f32 %v709, %v1007
      %v1009 = vpop.f32.mrb[0].mxu0
      %1010 = vmatprep.mubr.f32.mxu0 0.0
      %1011 = vmatmul.mubr.f32.gmra.mrb[0].mxu0 %v794
      %v1012 = vpop.f32.mrb[0].mxu0
      %v1013 = vadd.f32 %v709, %v1012
      %v1014 = vpop.f32.mrb[0].mxu0
      %1015 = vmatprep.mubr.f32.mxu0 0.0
      %1016 = vmatmul.mubr.f32.gmra.mrb[0].mxu0 %v797
      %v1017 = vpop.f32.mrb[0].mxu0
      %v1018 = vadd.f32 %v709, %v1017
      %v1019 = vpop.f32.mrb[0].mxu0
      %1020 = vmatprep.mubr.f32.mxu0 0.0
      %1021 = vmatmul.mubr.f32.gmra.mrb[0].mxu0 %v800
      %v1022 = vpop.f32.mrb[0].mxu0
      %v1023 = vadd.f32 %v709, %v1022
      %v1024 = vpop.f32.mrb[0].mxu0
      %1025 = vmatprep.mubr.f32.mxu0 0.0
      %1026 = vmatmul.mubr.f32.gmra.mrb[0].mxu0 %v803
      %v1027 = vpop.f32.mrb[0].mxu0
      %v1028 = vadd.f32 %v709, %v1027
      %v1029 = vpop.f32.mrb[0].mxu0
      %1030 = vmatprep.mubr.f32.mxu0 0.0
      %1031 = vmatmul.mubr.f32.gmra.mrb[0].mxu0 %v806
      %v1032 = vpop.f32.mrb[0].mxu0
      %v1033 = vadd.f32 %v709, %v1032
      %v1034 = vpop.f32.mrb[0].mxu0
      %1035 = vdwg.mxu0
      %v1036 = vmax.f32 %v878, 0.0
      %v1037 = vmax.f32 %v883, 0.0
      %v1038 = vmax.f32 %v888, 0.0
      %v1039 = vmax.f32 %v893, 0.0
      %v1040 = vmax.f32 %v898, 0.0
      %v1041 = vmax.f32 %v903, 0.0
      %v1042 = vmax.f32 %v908, 0.0
      %v1043 = vmax.f32 %v913, 0.0
      %v1044 = vmax.f32 %v918, 0.0
      %v1045 = vmax.f32 %v923, 0.0
      %v1046 = vmax.f32 %v928, 0.0
      %v1047 = vmax.f32 %v933, 0.0
      %v1048 = vmax.f32 %v938, 0.0
      %v1049 = vmax.f32 %v943, 0.0
      %v1050 = vmax.f32 %v948, 0.0
      %v1051 = vmax.f32 %v953, 0.0
      %v1052 = vmax.f32 %v958, 0.0
      %v1053 = vmax.f32 %v963, 0.0
      %v1054 = vmax.f32 %v968, 0.0
      %v1055 = vmax.f32 %v973, 0.0
      %v1056 = vmax.f32 %v978, 0.0
      %v1057 = vmax.f32 %v983, 0.0
      %v1058 = vmax.f32 %v988, 0.0
      %v1059 = vmax.f32 %v993, 0.0
      %v1060 = vmax.f32 %v998, 0.0
      %v1061 = vmax.f32 %v1003, 0.0
      %v1062 = vmax.f32 %v1008, 0.0
      %v1063 = vmax.f32 %v1013, 0.0
      %v1064 = vmax.f32 %v1018, 0.0
      %v1065 = vmax.f32 %v1023, 0.0
      %v1066 = vmax.f32 %v1028, 0.0
      %v1067 = vmax.f32 %v1033, 0.0
      %vm1068 = vcmask 523264
      %1069 = vst.msk [vmem:[%s345] sm:$0xff] %vm1068, %v1036
      %1070 = vst.msk [vmem:[%s345 + $0x8] sm:$0xff] %vm1068, %v1037
      %1071 = vst.msk [vmem:[%s345 + $0x10] sm:$0xff] %vm1068, %v1038
      %1072 = vst.msk [vmem:[%s345 + $0x18] sm:$0xff] %vm1068, %v1039
      %1073 = vst.msk [vmem:[%s345 + $0x20] sm:$0xff] %vm1068, %v1040
      %1074 = vst.msk [vmem:[%s345 + $0x28] sm:$0xff] %vm1068, %v1041
      %1075 = vst.msk [vmem:[%s345 + $0x30] sm:$0xff] %vm1068, %v1042
      %1076 = vst.msk [vmem:[%s345 + $0x38] sm:$0xff] %vm1068, %v1043
      %1077 = vst.msk [vmem:[%s345 + $0x40] sm:$0xff] %vm1068, %v1044
      %1078 = vst.msk [vmem:[%s345 + $0x48] sm:$0xff] %vm1068, %v1045
      %1079 = vst.msk [vmem:[%s345 + $0x50] sm:$0xff] %vm1068, %v1046
      %1080 = vst.msk [vmem:[%s345 + $0x58] sm:$0xff] %vm1068, %v1047
      %1081 = vst.msk [vmem:[%s345 + $0x60] sm:$0xff] %vm1068, %v1048
      %1082 = vst.msk [vmem:[%s345 + $0x68] sm:$0xff] %vm1068, %v1049
      %1083 = vst.msk [vmem:[%s345 + $0x70] sm:$0xff] %vm1068, %v1050
      %1084 = vst.msk [vmem:[%s345 + $0x78] sm:$0xff] %vm1068, %v1051
      %1085 = vst.msk [vmem:[%s345 + $0x80] sm:$0xff] %vm1068, %v1052
      %1086 = vst.msk [vmem:[%s345 + $0x88] sm:$0xff] %vm1068, %v1053
      %1087 = vst.msk [vmem:[%s345 + $0x90] sm:$0xff] %vm1068, %v1054
      %1088 = vst.msk [vmem:[%s345 + $0x98] sm:$0xff] %vm1068, %v1055
      %1089 = vst.msk [vmem:[%s345 + $0xa0] sm:$0xff] %vm1068, %v1056
      %1090 = vst.msk [vmem:[%s345 + $0xa8] sm:$0xff] %vm1068, %v1057
      %1091 = vst.msk [vmem:[%s345 + $0xb0] sm:$0xff] %vm1068, %v1058
      %1092 = vst.msk [vmem:[%s345 + $0xb8] sm:$0xff] %vm1068, %v1059
      %1093 = vst.msk [vmem:[%s345 + $0xc0] sm:$0xff] %vm1068, %v1060
      %1094 = vst.msk [vmem:[%s345 + $0xc8] sm:$0xff] %vm1068, %v1061
      %1095 = vst.msk [vmem:[%s345 + $0xd0] sm:$0xff] %vm1068, %v1062
      %1096 = vst.msk [vmem:[%s345 + $0xd8] sm:$0xff] %vm1068, %v1063
      %1097 = vst.msk [vmem:[%s345 + $0xe0] sm:$0xff] %vm1068, %v1064
      %1098 = vst.msk [vmem:[%s345 + $0xe8] sm:$0xff] %vm1068, %v1065
      %1099 = vst.msk [vmem:[%s345 + $0xf0] sm:$0xff] %vm1068, %v1066
      %1100 = vst.msk [vmem:[%s345 + $0xf8] sm:$0xff] %vm1068, %v1067
      %1101 = vrot.lane.b32.xlu0 %v351, 124
      %v1102 = vpop.permute.xlu0 %1101
      %1103 = vrot.lane.b32.xlu0 %v352, 124
      %v1104 = vpop.permute.xlu0 %1103
      %1105 = vrot.lane.b32.xlu0 %v353, 124
      %v1106 = vpop.permute.xlu0 %1105
      %1107 = vrot.lane.b32.xlu0 %v354, 124
      %v1108 = vpop.permute.xlu0 %1107
      %1109 = vrot.lane.b32.xlu0 %v355, 124
      %v1110 = vpop.permute.xlu0 %1109
      %1111 = vrot.lane.b32.xlu0 %v356, 124
      %v1112 = vpop.permute.xlu0 %1111
      %1113 = vrot.lane.b32.xlu0 %v357, 124
      %v1114 = vpop.permute.xlu0 %1113
      %v1122 = vmax.f32 %v351, %v1102
      %v1123 = vmax.f32 %v352, %v1104
      %v1124 = vmax.f32 %v353, %v1106
      %v1125 = vmax.f32 %v354, %v1108
      %v1126 = vmax.f32 %v355, %v1110
      %v1127 = vmax.f32 %v356, %v1112
      %v1128 = vmax.f32 %v357, %v1114
      %1129 = vrot.lane.b32.xlu0 %v351, 120
      %v1130 = vpop.permute.xlu0 %1129
      %1131 = vrot.lane.b32.xlu0 %v352, 120
      %v1132 = vpop.permute.xlu0 %1131
      %1133 = vrot.lane.b32.xlu0 %v353, 120
      %v1134 = vpop.permute.xlu0 %1133
      %1135 = vrot.lane.b32.xlu0 %v354, 120
      %v1136 = vpop.permute.xlu0 %1135
      %1137 = vrot.lane.b32.xlu0 %v355, 120
      %v1138 = vpop.permute.xlu0 %1137
      %1139 = vrot.lane.b32.xlu0 %v356, 120
      %v1140 = vpop.permute.xlu0 %1139
      %1141 = vrot.lane.b32.xlu0 %v357, 120
      %v1142 = vpop.permute.xlu0 %1141
      %v1150 = vmax.f32 %v1122, %v1130
      %v1151 = vmax.f32 %v1123, %v1132
      %v1152 = vmax.f32 %v1124, %v1134
      %v1153 = vmax.f32 %v1125, %v1136
      %v1154 = vmax.f32 %v1126, %v1138
      %v1155 = vmax.f32 %v1127, %v1140
      %v1156 = vmax.f32 %v1128, %v1142
      %1157 = vrot.lane.b32.xlu0 %v351, 116
      %v1158 = vpop.permute.xlu0 %1157
      %1159 = vrot.lane.b32.xlu0 %v352, 116
      %v1160 = vpop.permute.xlu0 %1159
      %1161 = vrot.lane.b32.xlu0 %v353, 116
      %v1162 = vpop.permute.xlu0 %1161
      %1163 = vrot.lane.b32.xlu0 %v354, 116
      %v1164 = vpop.permute.xlu0 %1163
      %1165 = vrot.lane.b32.xlu0 %v355, 116
      %v1166 = vpop.permute.xlu0 %1165
      %1167 = vrot.lane.b32.xlu0 %v356, 116
      %v1168 = vpop.permute.xlu0 %1167
      %1169 = vrot.lane.b32.xlu0 %v357, 116
      %v1170 = vpop.permute.xlu0 %1169
      %v1178 = vmax.f32 %v1150, %v1158
      %v1179 = vmax.f32 %v1151, %v1160
      %v1180 = vmax.f32 %v1152, %v1162
      %v1181 = vmax.f32 %v1153, %v1164
      %v1182 = vmax.f32 %v1154, %v1166
      %v1183 = vmax.f32 %v1155, %v1168
      %v1184 = vmax.f32 %v1156, %v1170
      %1185 = vrot.lane.b32.xlu0 %v351, 112
      %v1186 = vpop.permute.xlu0 %1185
      %1187 = vrot.lane.b32.xlu0 %v352, 112
      %v1188 = vpop.permute.xlu0 %1187
      %1189 = vrot.lane.b32.xlu0 %v353, 112
      %v1190 = vpop.permute.xlu0 %1189
      %1191 = vrot.lane.b32.xlu0 %v354, 112
      %v1192 = vpop.permute.xlu0 %1191
      %1193 = vrot.lane.b32.xlu0 %v355, 112
      %v1194 = vpop.permute.xlu0 %1193
      %1195 = vrot.lane.b32.xlu0 %v356, 112
      %v1196 = vpop.permute.xlu0 %1195
      %1197 = vrot.lane.b32.xlu0 %v357, 112
      %v1198 = vpop.permute.xlu0 %1197
      %v1206 = vmax.f32 %v1178, %v1186
      %v1207 = vmax.f32 %v1179, %v1188
      %v1208 = vmax.f32 %v1180, %v1190
      %v1209 = vmax.f32 %v1181, %v1192
      %v1210 = vmax.f32 %v1182, %v1194
      %v1211 = vmax.f32 %v1183, %v1196
      %v1212 = vmax.f32 %v1184, %v1198
      %1213 = vrot.lane.b32.xlu0 %v351, 108
      %v1214 = vpop.permute.xlu0 %1213
      %1215 = vrot.lane.b32.xlu0 %v352, 108
      %v1216 = vpop.permute.xlu0 %1215
      %1217 = vrot.lane.b32.xlu0 %v353, 108
      %v1218 = vpop.permute.xlu0 %1217
      %1219 = vrot.lane.b32.xlu0 %v354, 108
      %v1220 = vpop.permute.xlu0 %1219
      %1221 = vrot.lane.b32.xlu0 %v355, 108
      %v1222 = vpop.permute.xlu0 %1221
      %1223 = vrot.lane.b32.xlu0 %v356, 108
      %v1224 = vpop.permute.xlu0 %1223
      %1225 = vrot.lane.b32.xlu0 %v357, 108
      %v1226 = vpop.permute.xlu0 %1225
      %v1234 = vmax.f32 %v1206, %v1214
      %v1235 = vmax.f32 %v1207, %v1216
      %v1236 = vmax.f32 %v1208, %v1218
      %v1237 = vmax.f32 %v1209, %v1220
      %v1238 = vmax.f32 %v1210, %v1222
      %v1239 = vmax.f32 %v1211, %v1224
      %v1240 = vmax.f32 %v1212, %v1226
      %1241 = vrot.lane.b32.xlu0 %v351, 104
      %v1242 = vpop.permute.xlu0 %1241
      %1243 = vrot.lane.b32.xlu0 %v352, 104
      %v1244 = vpop.permute.xlu0 %1243
      %1245 = vrot.lane.b32.xlu0 %v353, 104
      %v1246 = vpop.permute.xlu0 %1245
      %1247 = vrot.lane.b32.xlu0 %v354, 104
      %v1248 = vpop.permute.xlu0 %1247
      %1249 = vrot.lane.b32.xlu0 %v355, 104
      %v1250 = vpop.permute.xlu0 %1249
      %1251 = vrot.lane.b32.xlu0 %v356, 104
      %v1252 = vpop.permute.xlu0 %1251
      %1253 = vrot.lane.b32.xlu0 %v357, 104
      %v1254 = vpop.permute.xlu0 %1253
      %v1262 = vmax.f32 %v1234, %v1242
      %v1263 = vmax.f32 %v1235, %v1244
      %v1264 = vmax.f32 %v1236, %v1246
      %v1265 = vmax.f32 %v1237, %v1248
      %v1266 = vmax.f32 %v1238, %v1250
      %v1267 = vmax.f32 %v1239, %v1252
      %v1268 = vmax.f32 %v1240, %v1254
      %1269 = vrot.lane.b32.xlu0 %v351, 100
      %v1270 = vpop.permute.xlu0 %1269
      %1271 = vrot.lane.b32.xlu0 %v352, 100
      %v1272 = vpop.permute.xlu0 %1271
      %1273 = vrot.lane.b32.xlu0 %v353, 100
      %v1274 = vpop.permute.xlu0 %1273
      %1275 = vrot.lane.b32.xlu0 %v354, 100
      %v1276 = vpop.permute.xlu0 %1275
      %1277 = vrot.lane.b32.xlu0 %v355, 100
      %v1278 = vpop.permute.xlu0 %1277
      %1279 = vrot.lane.b32.xlu0 %v356, 100
      %v1280 = vpop.permute.xlu0 %1279
      %1281 = vrot.lane.b32.xlu0 %v357, 100
      %v1282 = vpop.permute.xlu0 %1281
      %v1290 = vmax.f32 %v1262, %v1270
      %v1291 = vmax.f32 %v1263, %v1272
      %v1292 = vmax.f32 %v1264, %v1274
      %v1293 = vmax.f32 %v1265, %v1276
      %v1294 = vmax.f32 %v1266, %v1278
      %v1295 = vmax.f32 %v1267, %v1280
      %v1296 = vmax.f32 %v1268, %v1282
      %1297 = vrot.lane.b32.xlu0 %v351, 96
      %v1298 = vpop.permute.xlu0 %1297
      %1299 = vrot.lane.b32.xlu0 %v352, 96
      %v1300 = vpop.permute.xlu0 %1299
      %1301 = vrot.lane.b32.xlu0 %v353, 96
      %v1302 = vpop.permute.xlu0 %1301
      %1303 = vrot.lane.b32.xlu0 %v354, 96
      %v1304 = vpop.permute.xlu0 %1303
      %1305 = vrot.lane.b32.xlu0 %v355, 96
      %v1306 = vpop.permute.xlu0 %1305
      %1307 = vrot.lane.b32.xlu0 %v356, 96
      %v1308 = vpop.permute.xlu0 %1307
      %1309 = vrot.lane.b32.xlu0 %v357, 96
      %v1310 = vpop.permute.xlu0 %1309
      %v1318 = vmax.f32 %v1290, %v1298
      %v1319 = vmax.f32 %v1291, %v1300
      %v1320 = vmax.f32 %v1292, %v1302
      %v1321 = vmax.f32 %v1293, %v1304
      %v1322 = vmax.f32 %v1294, %v1306
      %v1323 = vmax.f32 %v1295, %v1308
      %v1324 = vmax.f32 %v1296, %v1310
      %1325 = vst.msk [vmem:[%s350] sm:$0xff] %vm711, %v1318
      %1326 = vst.msk [vmem:[%s350 + $0x8] sm:$0xff] %vm711, %v1319
      %1327 = vst.msk [vmem:[%s350 + $0x10] sm:$0xff] %vm711, %v1320
      %1328 = vst.msk [vmem:[%s350 + $0x18] sm:$0xff] %vm711, %v1321
      %1329 = vst.msk [vmem:[%s350 + $0x20] sm:$0xff] %vm711, %v1322
      %1330 = vst.msk [vmem:[%s350 + $0x28] sm:$0xff] %vm711, %v1323
      %vm1331 = vcmask 24576
      %1332 = vst.msk [vmem:[%s350 + $0x30] sm:$0x1] %vm1331, %v1324
      %p1333 = scmp.lt.s32.totalorder %s20, 1
      %s1334 = scalar_select %p1333, %s20, 1
      %s1335 = smul.addr %s1334, 21
      %s1336 = smul.addr %s1335, 8
      %s1337 = scalar_lea.vmem %s6, %s1336
      %p1338 = scmp.lt.s32.totalorder %s20, 1
      %s1339 = scalar_select %p1338, %s20, 1
      %s1340 = smul.addr %s1339, 32
      %s1341 = smul.addr %s1340, 8
      %s1342 = scalar_lea.vmem %s7, %s1341
      %p1343 = scmp.lt.s32.totalorder %s20, 1
      %s1344 = scalar_select %p1343, %s20, 1
      %s1345 = smul.addr %s1344, 7
      %s1346 = smul.addr %s1345, 8
      %s1347 = scalar_lea.vmem %s8, %s1346
      // Predicated region
      $region45: #{inception_b_forward.3} parent=43 // pred_check
        %p1348 = pneg %p174
      $region46: #{inception_b_forward.3} parent=43 // pred_check_branch
        %1350 = sbr.rel (%p1348) target = $region48
      $region47: #{inception_b_forward.3} parent=43 // pred_region
        _
      $region48: #{inception_b_forward.3} parent=43 // pred_fallthru
        _
      // Predicated region
      $region49: #{inception_b_forward.3} parent=43 // pred_check
        %p1351 = pneg %p200
      $region50: #{inception_b_forward.3} parent=43 // pred_check_branch
        %1353 = sbr.rel (%p1351) target = $region52
      $region51: #{inception_b_forward.3} parent=43 // pred_region
        _
      $region52: #{inception_b_forward.3} parent=43 // pred_fallthru
        _
      // Predicated region
      $region53: #{inception_b_forward.3} parent=43 // pred_check
        %p1354 = pneg %p226
      $region54: #{inception_b_forward.3} parent=43 // pred_check_branch
        %1356 = sbr.rel (%p1354) target = $region56
      $region55: #{inception_b_forward.3} parent=43 // pred_region
        _
      $region56: #{inception_b_forward.3} parent=43 // pred_fallthru
        _
    $region44: #{inception_b_forward.3} parent=5 // pred_fallthru
      _
    %p1357 = scmp.le.s32.totalorder 2, %s15
    // Predicated region
    $region57: #{inception_b_forward.3} parent=5 // pred_check
      %p1358 = pneg %p1357
    $region58: #{inception_b_forward.3} parent=5 // pred_check_branch
      %1360 = sbr.rel (%p1358) target = $region60
    $region59: #{inception_b_forward.3} parent=5 // pred_region
      %s1361 = ssub.s32 %s15, 2
      // Predicated region
      $region61: #{inception_b_forward.3} parent=59 // pred_check
        %p1362 = pneg %p180
      $region62: #{inception_b_forward.3} parent=59 // pred_check_branch
        %1364 = sbr.rel (%p1362) target = $region64
      $region63: #{inception_b_forward.3} parent=59 // pred_region
        %p1365 = scmp.lt.s32.totalorder %s21, 1
        %s1366 = scalar_select %p1365, %s21, 1
        %s1367 = smul.addr %s1366, 21
        %s1368 = smul.addr %s1367, 8
        %s1369 = scalar_lea.vmem %s6, %s1368
      $region64: #{inception_b_forward.3} parent=59 // pred_fallthru
        _
      // Predicated region
      $region65: #{inception_b_forward.3} parent=59 // pred_check
        %p1370 = pneg %p206
      $region66: #{inception_b_forward.3} parent=59 // pred_check_branch
        %1372 = sbr.rel (%p1370) target = $region68
      $region67: #{inception_b_forward.3} parent=59 // pred_region
        %p1373 = scmp.lt.s32.totalorder %s21, 1
        %s1374 = scalar_select %p1373, %s21, 1
        %s1375 = smul.addr %s1374, 32
        %s1376 = smul.addr %s1375, 8
        %s1377 = scalar_lea.vmem %s7, %s1376
      $region68: #{inception_b_forward.3} parent=59 // pred_fallthru
        _
      // Predicated region
      $region69: #{inception_b_forward.3} parent=59 // pred_check
        %p1378 = pneg %p232
      $region70: #{inception_b_forward.3} parent=59 // pred_check_branch
        %1380 = sbr.rel (%p1378) target = $region72
      $region71: #{inception_b_forward.3} parent=59 // pred_region
        %p1381 = scmp.lt.s32.totalorder %s21, 1
        %s1382 = scalar_select %p1381, %s21, 1
        %s1383 = smul.addr %s1382, 7
        %s1384 = smul.addr %s1383, 8
        %s1385 = scalar_lea.vmem %s8, %s1384
      $region72: #{inception_b_forward.3} parent=59 // pred_fallthru
        _
    $region60: #{inception_b_forward.3} parent=5 // pred_fallthru
      _
  $region6: #{inception_b_forward.3} parent=0 // loop_footer
    %s19 = sadd.s32 1, %s15
  $region7: #{inception_b_forward.3} parent=0 // loop_footer_branch
    %14 = sbr.rel target = $region3
  $region8: #{inception_b_forward.3} parent=0 // loop_exit
    _

// kernel: inception_b_forward.4
$region0: #{inception_b_forward.4}
  #allocation0 [shape = 'u32[]', space=smem, size = 0x4, offset = 0x4, fixed_abs, tag = 'smem constant byte address 0x4 - core index']
  #allocation1 [shape = 'u32[144,128]{1,0:T(1,128)}', space=vmem, size = 0x12000, scoped, tag = 'internal scratch']
  %s0 = inlined_call_operand.vmem [shape: f32[2,18,18,64], index: 0, kind: input, shape index: {}]
  %s1 = inlined_call_operand.vmem [shape: f32[9,64,96], index: 1, kind: input, shape index: {}]
  %s2 = inlined_call_operand.vmem [shape: f32[1,96], index: 2, kind: input, shape index: {}]
  %s3 = inlined_call_operand.vmem [shape: f32[2,16,16,96], index: 3, kind: output, shape index: {}]
  %s4 = sld [smem:[#allocation0]]
  $region45: #{inception_b_forward.4} parent=0
    _
  %s6 = ssub.s32 1, %s4
  %s7 = scalar_select 0, %s6, %s4
  loop: start=0, step=1, limit=6
  $region2: #{inception_b_forward.4} parent=0 // loop_pre_header
    _
  $region3: #{inception_b_forward.4} parent=0 // loop_header
    %s9 = sphi 0, %s13
    %p10 = scmp.ge.s32.totalorder %s9, 6
    %s16 = sphi 0, %s28
    %s17 = sphi 0, %s24
    %s18 = sphi 0, %s16
    %s19 = sphi 0, %s17
    %s20 = sphi 0, %s18
    %s21 = sphi 0, %s19
    %s31 = sphi 0, %s33
    %s34 = sphi 0, %s31
    %s35 = sphi 0, %s34
    %s51 = sphi 0, %s35
    %s55 = sphi 0, %s55
    %s57 = sphi 0, %s55
    %s58 = sphi 0, %s57
    %s72 = sphi 0, %s58
    %s76 = sphi 0, %s76
    %s78 = sphi 0, %s76
    %s79 = sphi 0, %s78
    %s93 = sphi 0, %s79
    %s101 = sphi 0, %s103
    %s104 = sphi 0, %s101
    %s105 = sphi 0, %s104
    %s121 = sphi 0, %s105
  $region4: #{inception_b_forward.4} parent=0 // loop_header_branch
    %12 = sbr.rel (%p10) target = $region8
  $region5: #{inception_b_forward.4} parent=0 // loop_body
    %s14 = ssub.s32 %s9, 1
    %s15 = ssub.s32 %s9, 2
    %s22 = sadd.s32 1, %s17
    %p23 = scmp.ge.s32.totalorder %s22, 2
    %s24 = scalar_select %p23, 0, %s22
    %s25 = sadd.s32 1, %s16
    %s26 = scalar_select %p23, %s25, %s16
    %p27 = scmp.ge.s32.totalorder %s26, 2
    %s28 = scalar_select %p27, 0, %s26
    %s29 = ssub.s32 %s16, %s28
    %p30 = scmp.eq.s32.totalorder %s29, 0
    %s32 = sadd.s32 %s31, 1
    %s33 = scalar_select %p30, %s31, %s32
    %p36 = pneg %p30
    %p37 = scmp.eq.s32.totalorder %s9, 3
    %p38 = por %p36, %p37
    %p39 = scmp.ne.s32.totalorder %s31, %s34
    %p40 = scmp.eq.s32.totalorder %s9, 0
    %p41 = por %p39, %p40
    %p42 = scmp.ne.s32.totalorder %s31, %s34
    %p43 = scmp.eq.s32.totalorder %s14, 3
    %p44 = por %p42, %p43
    %p45 = scmp.ne.s32.totalorder %s34, %s35
    %p46 = scmp.eq.s32.totalorder %s14, 0
    %p47 = por %p45, %p46
    %p48 = scmp.ne.s32.totalorder %s34, %s35
    %p49 = scmp.eq.s32.totalorder %s15, 3
    %p50 = por %p48, %p49
    %p52 = scmp.ne.s32.totalorder %s35, %s51
    %p53 = scmp.eq.s32.totalorder %s15, 0
    %p54 = por %p52, %p53
    %s56 = sadd.s32 %s55, 1
    %p59 = scmp.eq.s32.totalorder %s9, 3
    %p60 = scmp.ne.s32.totalorder %s55, %s57
    %p61 = scmp.eq.s32.totalorder %s9, 0
    %p62 = por %p60, %p61
    %p63 = scmp.ne.s32.totalorder %s55, %s57
    %p64 = scmp.eq.s32.totalorder %s14, 3
    %p65 = por %p63, %p64
    %p66 = scmp.ne.s32.totalorder %s57, %s58
    %p67 = scmp.eq.s32.totalorder %s14, 0
    %p68 = por %p66, %p67
    %p69 = scmp.ne.s32.totalorder %s57, %s58
    %p70 = scmp.eq.s32.totalorder %s15, 3
    %p71 = por %p69, %p70
    %p73 = scmp.ne.s32.totalorder %s58, %s72
    %p74 = scmp.eq.s32.totalorder %s15, 0
    %p75 = por %p73, %p74
    %s77 = sadd.s32 %s76, 1
    %p80 = scmp.eq.s32.totalorder %s9, 3
    %p81 = scmp.ne.s32.totalorder %s76, %s78
    %p82 = scmp.eq.s32.totalorder %s9, 0
    %p83 = por %p81, %p82
    %p84 = scmp.ne.s32.totalorder %s76, %s78
    %p85 = scmp.eq.s32.totalorder %s14, 3
    %p86 = por %p84, %p85
    %p87 = scmp.ne.s32.totalorder %s78, %s79
    %p88 = scmp.eq.s32.totalorder %s14, 0
    %p89 = por %p87, %p88
    %p90 = scmp.ne.s32.totalorder %s78, %s79
    %p91 = scmp.eq.s32.totalorder %s15, 3
    %p92 = por %p90, %p91
    %p94 = scmp.ne.s32.totalorder %s79, %s93
    %p95 = scmp.eq.s32.totalorder %s15, 0
    %p96 = por %p94, %p95
    %s97 = ssub.s32 %s16, %s28
    %s98 = ssub.s32 %s17, %s24
    %s99 = sor.u32 %s97, %s98
    %p100 = scmp.eq.s32.totalorder %s99, 0
    %s102 = sadd.s32 %s101, 1
    %s103 = scalar_select %p100, %s101, %s102
    %p106 = pneg %p100
    %p107 = scmp.eq.s32.totalorder %s9, 3
    %p108 = por %p106, %p107
    %p109 = scmp.ne.s32.totalorder %s101, %s104
    %p110 = scmp.eq.s32.totalorder %s9, 0
    %p111 = por %p109, %p110
    %p112 = scmp.ne.s32.totalorder %s101, %s104
    %p113 = scmp.eq.s32.totalorder %s14, 3
    %p114 = por %p112, %p113
    %p115 = scmp.ne.s32.totalorder %s104, %s105
    %p116 = scmp.eq.s32.totalorder %s14, 0
    %p117 = por %p115, %p116
    %p118 = scmp.ne.s32.totalorder %s104, %s105
    %p119 = scmp.eq.s32.totalorder %s15, 3
    %p120 = por %p118, %p119
    %p122 = scmp.ne.s32.totalorder %s105, %s121
    %p123 = scmp.eq.s32.totalorder %s15, 0
    %p124 = por %p122, %p123
    %p125 = scmp.le.s32.totalorder 1, %s9
    %p126 = scmp.lt.s32.totalorder %s9, 5
    %p127 = pnand %p125, %p126
    %p128 = pneg %p127
    // Predicated region
    $region9: #{inception_b_forward.4} parent=5 // pred_check
      _
    $region10: #{inception_b_forward.4} parent=5 // pred_check_branch
      %130 = sbr.rel (%p127) target = $region12
    $region11: #{inception_b_forward.4} parent=5 // pred_region
      %s131 = ssub.s32 %s9, 1
      // Predicated region
      $region13: #{inception_b_forward.4} parent=11 // pred_check
        %p132 = pneg %p68
      $region14: #{inception_b_forward.4} parent=11 // pred_check_branch
        %134 = sbr.rel (%p132) target = $region16
      $region15: #{inception_b_forward.4} parent=11 // pred_region
        _
      $region16: #{inception_b_forward.4} parent=11 // pred_fallthru
        _
      // Predicated region
      $region17: #{inception_b_forward.4} parent=11 // pred_check
        %p135 = pneg %p89
      $region18: #{inception_b_forward.4} parent=11 // pred_check_branch
        %137 = sbr.rel (%p135) target = $region20
      $region19: #{inception_b_forward.4} parent=11 // pred_region
        _
      $region20: #{inception_b_forward.4} parent=11 // pred_fallthru
        _
    $region12: #{inception_b_forward.4} parent=5 // pred_fallthru
      _
    %p138 = scmp.lt.s32.totalorder %s9, 4
    // Predicated region
    $region21: #{inception_b_forward.4} parent=5 // pred_check
      %p139 = pneg %p138
    $region22: #{inception_b_forward.4} parent=5 // pred_check_branch
      %141 = sbr.rel (%p139) target = $region24
    $region23: #{inception_b_forward.4} parent=5 // pred_region
      // Predicated region
      $region25: #{inception_b_forward.4} parent=23 // pred_check
        %p142 = pneg %p41
      $region26: #{inception_b_forward.4} parent=23 // pred_check_branch
        %144 = sbr.rel (%p142) target = $region28
      $region27: #{inception_b_forward.4} parent=23 // pred_region
        %p145 = scmp.lt.s32.totalorder %s16, 1
        %s146 = scalar_select %p145, %s16, 1
        %s147 = smul.addr %s146, 54
        %s148 = smul.addr %s147, 8
        %s149 = scalar_lea.vmem %s0, %s148
      $region28: #{inception_b_forward.4} parent=23 // pred_fallthru
        _
    $region24: #{inception_b_forward.4} parent=5 // pred_fallthru
      _
    %p150 = scmp.le.s32.totalorder 1, %s9
    %p151 = scmp.lt.s32.totalorder %s9, 5
    %p152 = pnand %p150, %p151
    %p153 = pneg %p152
    // Predicated region
    $region29: #{inception_b_forward.4} parent=5 // pred_check
      _
    $region30: #{inception_b_forward.4} parent=5 // pred_check_branch
      %155 = sbr.rel (%p152) target = $region32
    $region31: #{inception_b_forward.4} parent=5 // pred_region
      %s156 = ssub.s32 %s9, 1
      %p157 = scmp.lt.s32.totalorder %s18, 1
      %s158 = scalar_select %p157, %s18, 1
      %s159 = smul.addr %s158, 54
      %s160 = smul.addr %s159, 8
      %s161 = scalar_lea.vmem %s0, %s160
      %p162 = pneg %p47
      %p163 = pneg %p44
      %p164 = pneg %p68
      %p165 = pneg %p65
      %p166 = pneg %p89
      %p167 = pneg %p86
      %p168 = pneg %p117
      %p169 = pneg %p114
      %s170 = smul.u32 8, %s19
      %p171 = scmp.lt.s32.totalorder %s18, 1
      %s172 = scalar_select %p171, %s18, 1
      %p173 = scmp.lt.s32.totalorder %s170, 15
      %s174 = scalar_select %p173, %s170, 15
      %s175 = smul.addr %s174, 2
      %s176 = smul.addr %s172, 32
      %s177 = sadd.s32 %s175, %s176
      %s178 = smul.addr %s177, 8
      %s179 = scalar_lea.vmem %s3, %s178
      %p180 = scmp.lt.s32.totalorder %s18, 1
      %s181 = scalar_select %p180, %s18, 1
      %s182 = smul.addr %s181, 54
      %s183 = smul.addr %s182, 8
      %s184 = scalar_lea.vmem %s0, %s183
      %s185 = smul.u32 8, %s19
      %p186 = scmp.lt.s32.totalorder %s18, 1
      %s187 = scalar_select %p186, %s18, 1
      %p188 = scmp.lt.s32.totalorder %s185, 15
      %s189 = scalar_select %p188, %s185, 15
      %s190 = smul.addr %s189, 2
      %s191 = smul.addr %s187, 32
      %s192 = sadd.s32 %s190, %s191
      %s193 = smul.addr %s192, 8
      %s194 = scalar_lea.vmem %s3, %s193
      %s195 = smul.u32 8, %s19
      %s196 = smul.u32 %s19, 8
      %s197 = smul.u32 %s196, 24
      %s198 = scalar_lea.vmem %s184, %s197
      %v199 = vld [vmem:[%s198] sm:$0xff]
      %v200 = vld [vmem:[%s198 + $0x8] sm:$0xff]
      %v201 = vld [vmem:[%s198 + $0x10] sm:$0x3]
      %v202 = vld [vmem:[%s198 + $0x18] sm:$0xff]
      %v203 = vld [vmem:[%s198 + $0x20] sm:$0xff]
      %v204 = vld [vmem:[%s198 + $0x28] sm:$0x3]
      %v205 = vld [vmem:[%s198 + $0x30] sm:$0xff]
      %v206 = vld [vmem:[%s198 + $0x38] sm:$0xff]
      %v207 = vld [vmem:[%s198 + $0x40] sm:$0x3]
      %v208 = vld [vmem:[%s198 + $0x48] sm:$0xff]
      %v209 = vld [vmem:[%s198 + $0x50] sm:$0xff]
      %v210 = vld [vmem:[%s198 + $0x58] sm:$0x3]
      %v211 = vld [vmem:[%s198 + $0x60] sm:$0xff]
      %v212 = vld [vmem:[%s198 + $0x68] sm:$0xff]
      %v213 = vld [vmem:[%s198 + $0x70] sm:$0x3]
      %v214 = vld [vmem:[%s198 + $0x78] sm:$0xff]
      %v215 = vld [vmem:[%s198 + $0x80] sm:$0xff]
      %v216 = vld [vmem:[%s198 + $0x88] sm:$0x3]
      %v217 = vld [vmem:[%s198 + $0x90] sm:$0xff]
      %v218 = vld [vmem:[%s198 + $0x98] sm:$0xff]
      %v219 = vld [vmem:[%s198 + $0xa0] sm:$0x3]
      %v220 = vld [vmem:[%s198 + $0xa8] sm:$0xff]
      %v221 = vld [vmem:[%s198 + $0xb0] sm:$0xff]
      %v222 = vld [vmem:[%s198 + $0xb8] sm:$0x3]
      %v223 = vld [vmem:[%s198 + $0xc0] sm:$0xff]
      %v224 = vld [vmem:[%s198 + $0xc8] sm:$0xff]
      %v225 = vld [vmem:[%s198 + $0xd0] sm:$0x3]
      %v226 = vld [vmem:[%s198 + $0xd8] sm:$0xff]
      %v227 = vld [vmem:[%s198 + $0xe0] sm:$0xff]
      %v228 = vld [vmem:[%s198 + $0xe8] sm:$0x3]
      %v229 = vld [vmem:[%s1] sm:$0xff]
      %v230 = vld [vmem:[%s1 + $0x8] sm:$0xff]
      %v231 = vld [vmem:[%s1 + $0x10] sm:$0xff]
      %v232 = vld [vmem:[%s1 + $0x18] sm:$0xff]
      %v233 = vld [vmem:[%s1 + $0x20] sm:$0xff]
      %v234 = vld [vmem:[%s1 + $0x28] sm:$0xff]
      %v235 = vld [vmem:[%s1 + $0x30] sm:$0xff]
      %v236 = vld [vmem:[%s1 + $0x38] sm:$0xff]
      %vm261 = vcmask 1046528
      %v262 = vrot.slane %v199, 1
      %v263 = vrot.slane %v200, 1
      %v264 = vsel %vm261, %v262, %v263
      %v265 = vrot.slane %v201, 1
      %v266 = vsel %vm261, %v263, %v265
      %v267 = vrot.slane %v202, 1
      %v268 = vrot.slane %v203, 1
      %v269 = vsel %vm261, %v267, %v268
      %v270 = vrot.slane %v204, 1
      %v271 = vsel %vm261, %v268, %v270
      %v272 = vrot.slane %v205, 1
      %v273 = vrot.slane %v206, 1
      %v274 = vsel %vm261, %v272, %v273
      %v275 = vrot.slane %v207, 1
      %v276 = vsel %vm261, %v273, %v275
      %v277 = vrot.slane %v208, 1
      %v278 = vrot.slane %v209, 1
      %v279 = vsel %vm261, %v277, %v278
      %v280 = vrot.slane %v210, 1
      %v281 = vsel %vm261, %v278, %v280
      %v282 = vrot.slane %v211, 1
      %v283 = vrot.slane %v212, 1
      %v284 = vsel %vm261, %v282, %v283
      %v285 = vrot.slane %v213, 1
      %v286 = vsel %vm261, %v283, %v285
      %v287 = vrot.slane %v214, 1
      %v288 = vrot.slane %v215, 1
      %v289 = vsel %vm261, %v287, %v288
      %v290 = vrot.slane %v216, 1
      %v291 = vsel %vm261, %v288, %v290
      %v292 = vrot.slane %v217, 1
      %v293 = vrot.slane %v218, 1
      %v294 = vsel %vm261, %v292, %v293
      %v295 = vrot.slane %v219, 1
      %v296 = vsel %vm261, %v293, %v295
      %v297 = vrot.slane %v220, 1
      %v298 = vrot.slane %v221, 1
      %v299 = vsel %vm261, %v297, %v298
      %v300 = vrot.slane %v222, 1
      %v301 = vsel %vm261, %v298, %v300
      %s302 = scalar_lea.vmem %s1, 64
      %v303 = vld [vmem:[%s302] sm:$0xff]
      %v304 = vld [vmem:[%s302 + $0x8] sm:$0xff]
      %v305 = vld [vmem:[%s302 + $0x10] sm:$0xff]
      %v306 = vld [vmem:[%s302 + $0x18] sm:$0xff]
      %v307 = vld [vmem:[%s302 + $0x20] sm:$0xff]
      %v308 = vld [vmem:[%s302 + $0x28] sm:$0xff]
      %v309 = vld [vmem:[%s302 + $0x30] sm:$0xff]
      %v310 = vld [vmem:[%s302 + $0x38] sm:$0xff]
      %vm311 = vcmask 523264
      %v312 = vsel %vm311, %v264, 0
      %v314 = vsel %vm311, %v266, 0
      %v316 = vsel %vm311, %v269, 0
      %v318 = vsel %vm311, %v271, 0
      %v320 = vsel %vm311, %v274, 0
      %v322 = vsel %vm311, %v276, 0
      %v324 = vsel %vm311, %v279, 0
      %v326 = vsel %vm311, %v281, 0
      %v328 = vsel %vm311, %v284, 0
      %v330 = vsel %vm311, %v286, 0
      %v332 = vsel %vm311, %v289, 0
      %v334 = vsel %vm311, %v291, 0
      %v336 = vsel %vm311, %v294, 0
      %v338 = vsel %vm311, %v296, 0
      %v340 = vsel %vm311, %v299, 0
      %v342 = vsel %vm311, %v301, 0
      %344 = vmatprep.subr.mxu0 0.0
      %345 = vmatpush1.msra.mxu0 %v303
      %346 = vmatprep.subr.mxu0 0.0
      %347 = vmatpush1.msra.mxu0 %v304
      %348 = vmatprep.subr.mxu0 0.0
      %349 = vmatpush1.msra.mxu0 %v305
      %350 = vmatprep.subr.mxu0 0.0
      %351 = vmatpush1.msra.mxu0 %v306
      %352 = vmatprep.subr.mxu0 0.0
      %353 = vmatpush1.msra.mxu0 %v307
      %354 = vmatprep.subr.mxu0 0.0
      %355 = vmatpush1.msra.mxu0 %v308
      %356 = vmatprep.subr.mxu0 0.0
      %357 = vmatpush1.msra.mxu0 %v309
      %358 = vmatprep.subr.mxu0 0.0
      %359 = vmatpush1.msra.mxu0 %v310
      %360 = vmatprep.subr.mxu0 0.0
      %361 = vmatpush1.msra.mxu0 0.0
      %362 = vmatprep.subr.mxu0 0.0
      %363 = vmatpush1.msra.mxu0 0.0
      %364 = vmatprep.subr.mxu0 0.0
      %365 = vmatpush1.msra.mxu0 0.0
      %366 = vmatprep.subr.mxu0 0.0
      %367 = vmatpush1.msra.mxu0 0.0
      %368 = vmatprep.subr.mxu0 0.0
      %369 = vmatpush1.msra.mxu0 0.0
      %370 = vmatprep.subr.mxu0 0.0
      %371 = vmatpush1.msra.mxu0 0.0
      %372 = vmatprep.subr.mxu0 0.0
      %373 = vmatpush1.msra.mxu0 0.0
      %374 = vmatprep.subr.mxu0 0.0
      %375 = vmatpush1.msra.mxu0 0.0
      %376 = vmatprep.subr.mxu0 0.0
      %377 = vmatpush1.msra.mxu0 0.0
      %378 = vmatprep.subr.mxu0 0.0
      %379 = vmatpush1.msra.mxu0 0.0
      %380 = vmatprep.subr.mxu0 0.0
      %381 = vmatpush1.msra.mxu0 0.0
      %382 = vmatprep.subr.mxu0 0.0
      %383 = vmatpush1.msra.mxu0 0.0
      %384 = vmatprep.subr.mxu0 0.0
      %385 = vmatpush1.msra.mxu0 0.0
      %386 = vmatprep.subr.mxu0 0.0
      %387 = vmatpush1.msra.mxu0 0.0
      %388 = vmatprep.subr.mxu0 0.0
      %389 = vmatpush1.msra.mxu0 0.0
      %390 = vmatprep.subr.mxu0 0.0
      %391 = vmatpush1.msra.mxu0 0.0
      %392 = vmatprep.subr.mxu0 0.0
      %393 = vmatpush1.msra.mxu0 0.0
      %394 = vmatprep.subr.mxu0 0.0
      %395 = vmatpush1.msra.mxu0 0.0
      %396 = vmatprep.subr.mxu0 0.0
      %397 = vmatpush1.msra.mxu0 0.0
      %398 = vmatprep.subr.mxu0 0.0
      %399 = vmatpush1.msra.mxu0 0.0
      %400 = vmatprep.subr.mxu0 0.0
      %401 = vmatpush1.msra.mxu0 0.0
      %402 = vmatprep.subr.mxu0 0.0
      %403 = vmatpush1.msra.mxu0 0.0
      %404 = vmatprep.subr.mxu0 0.0
      %405 = vmatpush1.msra.mxu0 0.0
      %406 = vmatprep.subr.mxu0 0.0
      %407 = vmatpush1.msra.mxu0 0.0
      %408 = vmatprep.mubr.f32.mxu0 0.0
      %409 = vmatmul.mubr.f32.gmra.mrb[0].mxu0 %v312
      %v410 = vpop.f32.mrb[0].mxu0
      %v411 = vadd.f32 0.0, %v410
      %v412 = vpop.f32.mrb[0].mxu0
      %413 = vmatprep.mubr.f32.mxu0 0.0
      %414 = vmatmul.mubr.f32.gmra.mrb[0].mxu0 %v314
      %v415 = vpop.f32.mrb[0].mxu0
      %v416 = vadd.f32 0.0, %v415
      %v417 = vpop.f32.mrb[0].mxu0
      %418 = vmatprep.mubr.f32.mxu0 0.0
      %419 = vmatmul.mubr.f32.gmra.mrb[0].mxu0 %v316
      %v420 = vpop.f32.mrb[0].mxu0
      %v421 = vadd.f32 0.0, %v420
      %v422 = vpop.f32.mrb[0].mxu0
      %423 = vmatprep.mubr.f32.mxu0 0.0
      %424 = vmatmul.mubr.f32.gmra.mrb[0].mxu0 %v318
      %v425 = vpop.f32.mrb[0].mxu0
      %v426 = vadd.f32 0.0, %v425
      %v427 = vpop.f32.mrb[0].mxu0
      %428 = vmatprep.mubr.f32.mxu0 0.0
      %429 = vmatmul.mubr.f32.gmra.mrb[0].mxu0 %v320
      %v430 = vpop.f32.mrb[0].mxu0
      %v431 = vadd.f32 0.0, %v430
      %v432 = vpop.f32.mrb[0].mxu0
      %433 = vmatprep.mubr.f32.mxu0 0.0
      %434 = vmatmul.mubr.f32.gmra.mrb[0].mxu0 %v322
      %v435 = vpop.f32.mrb[0].mxu0
      %v436 = vadd.f32 0.0, %v435
      %v437 = vpop.f32.mrb[0].mxu0
      %438 = vmatprep.mubr.f32.mxu0 0.0
      %439 = vmatmul.mubr.f32.gmra.mrb[0].mxu0 %v324
      %v440 = vpop.f32.mrb[0].mxu0
      %v441 = vadd.f32 0.0, %v440
      %v442 = vpop.f32.mrb[0].mxu0
      %443 = vmatprep.mubr.f32.mxu0 0.0
      %444 = vmatmul.mubr.f32.gmra.mrb[0].mxu0 %v326
      %v445 = vpop.f32.mrb[0].mxu0
      %v446 = vadd.f32 0.0, %v445
      %v447 = vpop.f32.mrb[0].mxu0
      %448 = vmatprep.mubr.f32.mxu0 0.0
      %449 = vmatmul.mubr.f32.gmra.mrb[0].mxu0 %v328
      %v450 = vpop.f32.mrb[0].mxu0
      %v451 = vadd.f32 0.0, %v450
      %v452 = vpop.f32.mrb[0].mxu0
      %453 = vmatprep.mubr.f32.mxu0 0.0
      %454 = vmatmul.mubr.f32.gmra.mrb[0].mxu0 %v330
      %v455 = vpop.f32.mrb[0].mxu0
      %v456 = vadd.f32 0.0, %v455
      %v457 = vpop.f32.mrb[0].mxu0
      %458 = vmatprep.mubr.f32.mxu0 0.0
      %459 = vmatmul.mubr.f32.gmra.mrb[0].mxu0 %v332
      %v460 = vpop.f32.mrb[0].mxu0
      %v461 = vadd.f32 0.0, %v460
      %v462 = vpop.f32.mrb[0].mxu0
      %463 = vmatprep.mubr.f32.mxu0 0.0
      %464 = vmatmul.mubr.f32.gmra.mrb[0].mxu0 %v334
      %v465 = vpop.f32.mrb[0].mxu0
      %v466 = vadd.f32 0.0, %v465
      %v467 = vpop.f32.mrb[0].mxu0
      %468 = vmatprep.mubr.f32.mxu0 0.0
      %469 = vmatmul.mubr.f32.gmra.mrb[0].mxu0 %v336
      %v470 = vpop.f32.mrb[0].mxu0
      %v471 = vadd.f32 0.0, %v470
      %v472 = vpop.f32.mrb[0].mxu0
      %473 = vmatprep.mubr.f32.mxu0 0.0
      %474 = vmatmul.mubr.f32.gmra.mrb[0].mxu0 %v338
      %v475 = vpop.f32.mrb[0].mxu0
      %v476 = vadd.f32 0.0, %v475
      %v477 = vpop.f32.mrb[0].mxu0
      %478 = vmatprep.mubr.f32.mxu0 0.0
      %479 = vmatmul.mubr.f32.gmra.mrb[0].mxu0 %v340
      %v480 = vpop.f32.mrb[0].mxu0
      %v481 = vadd.f32 0.0, %v480
      %v482 = vpop.f32.mrb[0].mxu0
      %483 = vmatprep.mubr.f32.mxu0 0.0
      %484 = vmatmul.mubr.f32.gmra.mrb[0].mxu0 %v342
      %v485 = vpop.f32.mrb[0].mxu0
      %v486 = vadd.f32 0.0, %v485
      %v487 = vpop.f32.mrb[0].mxu0
      %488 = vdwg.mxu0
      %v489 = vsel %vm311, %v199, 0
      %v491 = vsel %vm311, %v200, 0
      %v493 = vsel %vm311, %v202, 0
      %v495 = vsel %vm311, %v203, 0
      %v497 = vsel %vm311, %v205, 0
      %v499 = vsel %vm311, %v206, 0
      %v501 = vsel %vm311, %v208, 0
      %v503 = vsel %vm311, %v209, 0
      %v505 = vsel %vm311, %v211, 0
      %v507 = vsel %vm311, %v212, 0
      %v509 = vsel %vm311, %v214, 0
      %v511 = vsel %vm311, %v215, 0
      %v513 = vsel %vm311, %v217, 0
      %v515 = vsel %vm311, %v218, 0
      %v517 = vsel %vm311, %v220, 0
      %v519 = vsel %vm311, %v221, 0
      %521 = vmatprep.subr.mxu0 0.0
      %522 = vmatpush1.msra.mxu0 %v229
      %523 = vmatprep.subr.mxu0 0.0
      %524 = vmatpush1.msra.mxu0 %v230
      %525 = vmatprep.subr.mxu0 0.0
      %526 = vmatpush1.msra.mxu0 %v231
      %527 = vmatprep.subr.mxu0 0.0
      %528 = vmatpush1.msra.mxu0 %v232
      %529 = vmatprep.subr.mxu0 0.0
      %530 = vmatpush1.msra.mxu0 %v233
      %531 = vmatprep.subr.mxu0 0.0
      %532 = vmatpush1.msra.mxu0 %v234
      %533 = vmatprep.subr.mxu0 0.0
      %534 = vmatpush1.msra.mxu0 %v235
      %535 = vmatprep.subr.mxu0 0.0
      %536 = vmatpush1.msra.mxu0 %v236
      %537 = vmatprep.subr.mxu0 0.0
      %538 = vmatpush1.msra.mxu0 0.0
      %539 = vmatprep.subr.mxu0 0.0
      %540 = vmatpush1.msra.mxu0 0.0
      %541 = vmatprep.subr.mxu0 0.0
      %542 = vmatpush1.msra.mxu0 0.0
      %543 = vmatprep.subr.mxu0 0.0
      %544 = vmatpush1.msra.mxu0 0.0
      %545 = vmatprep.subr.mxu0 0.0
      %546 = vmatpush1.msra.mxu0 0.0
      %547 = vmatprep.subr.mxu0 0.0
      %548 = vmatpush1.msra.mxu0 0.0
      %549 = vmatprep.subr.mxu0 0.0
      %550 = vmatpush1.msra.mxu0 0.0
      %551 = vmatprep.subr.mxu0 0.0
      %552 = vmatpush1.msra.mxu0 0.0
      %553 = vmatprep.subr.mxu0 0.0
      %554 = vmatpush1.msra.mxu0 0.0
      %555 = vmatprep.subr.mxu0 0.0
      %556 = vmatpush1.msra.mxu0 0.0
      %557 = vmatprep.subr.mxu0 0.0
      %558 = vmatpush1.msra.mxu0 0.0
      %559 = vmatprep.subr.mxu0 0.0
      %560 = vmatpush1.msra.mxu0 0.0
      %561 = vmatprep.subr.mxu0 0.0
      %562 = vmatpush1.msra.mxu0 0.0
      %563 = vmatprep.subr.mxu0 0.0
      %564 = vmatpush1.msra.mxu0 0.0
      %565 = vmatprep.subr.mxu0 0.0
      %566 = vmatpush1.msra.mxu0 0.0
      %567 = vmatprep.subr.mxu0 0.0
      %568 = vmatpush1.msra.mxu0 0.0
      %569 = vmatprep.subr.mxu0 0.0
      %570 = vmatpush1.msra.mxu0 0.0
      %571 = vmatprep.subr.mxu0 0.0
      %572 = vmatpush1.msra.mxu0 0.0
      %573 = vmatprep.subr.mxu0 0.0
      %574 = vmatpush1.msra.mxu0 0.0
      %575 = vmatprep.subr.mxu0 0.0
      %576 = vmatpush1.msra.mxu0 0.0
      %577 = vmatprep.subr.mxu0 0.0
      %578 = vmatpush1.msra.mxu0 0.0
      %579 = vmatprep.subr.mxu0 0.0
      %580 = vmatpush1.msra.mxu0 0.0
      %581 = vmatprep.subr.mxu0 0.0
      %582 = vmatpush1.msra.mxu0 0.0
      %583 = vmatprep.subr.mxu0 0.0
      %584 = vmatpush1.msra.mxu0 0.0
      %585 = vmatprep.mubr.f32.mxu0 0.0
      %586 = vmatmul.mubr.f32.gmra.mrb[0].mxu0 %v489
      %v587 = vpop.f32.mrb[0].mxu0
      %v588 = vadd.f32 %v411, %v587
      %v589 = vpop.f32.mrb[0].mxu0
      %590 = vmatprep.mubr.f32.mxu0 0.0
      %591 = vmatmul.mubr.f32.gmra.mrb[0].mxu0 %v491
      %v592 = vpop.f32.mrb[0].mxu0
      %v593 = vadd.f32 %v416, %v592
      %v594 = vpop.f32.mrb[0].mxu0
      %595 = vmatprep.mubr.f32.mxu0 0.0
      %596 = vmatmul.mubr.f32.gmra.mrb[0].mxu0 %v493
      %v597 = vpop.f32.mrb[0].mxu0
      %v598 = vadd.f32 %v421, %v597
      %v599 = vpop.f32.mrb[0].mxu0
      %600 = vmatprep.mubr.f32.mxu0 0.0
      %601 = vmatmul.mubr.f32.gmra.mrb[0].mxu0 %v495
      %v602 = vpop.f32.mrb[0].mxu0
      %v603 = vadd.f32 %v426, %v602
      %v604 = vpop.f32.mrb[0].mxu0
      %605 = vmatprep.mubr.f32.mxu0 0.0
      %606 = vmatmul.mubr.f32.gmra.mrb[0].mxu0 %v497
      %v607 = vpop.f32.mrb[0].mxu0
      %v608 = vadd.f32 %v431, %v607
      %v609 = vpop.f32.mrb[0].mxu0
      %610 = vmatprep.mubr.f32.mxu0 0.0
      %611 = vmatmul.mubr.f32.gmra.mrb[0].mxu0 %v499
      %v612 = vpop.f32.mrb[0].mxu0
      %v613 = vadd.f32 %v436, %v612
      %v614 = vpop.f32.mrb[0].mxu0
      %615 = vmatprep.mubr.f32.mxu0 0.0
      %616 = vmatmul.mubr.f32.gmra.mrb[0].mxu0 %v501
      %v617 = vpop.f32.mrb[0].mxu0
      %v618 = vadd.f32 %v441, %v617
      %v619 = vpop.f32.mrb[0].mxu0
      %620 = vmatprep.mubr.f32.mxu0 0.0
      %621 = vmatmul.mubr.f32.gmra.mrb[0].mxu0 %v503
      %v622 = vpop.f32.mrb[0].mxu0
      %v623 = vadd.f32 %v446, %v622
      %v624 = vpop.f32.mrb[0].mxu0
      %625 = vmatprep.mubr.f32.mxu0 0.0
      %626 = vmatmul.mubr.f32.gmra.mrb[0].mxu0 %v505
      %v627 = vpop.f32.mrb[0].mxu0
      %v628 = vadd.f32 %v451, %v627
      %v629 = vpop.f32.mrb[0].mxu0
      %630 = vmatprep.mubr.f32.mxu0 0.0
      %631 = vmatmul.mubr.f32.gmra.mrb[0].mxu0 %v507
      %v632 = vpop.f32.mrb[0].mxu0
      %v633 = vadd.f32 %v456, %v632
      %v634 = vpop.f32.mrb[0].mxu0
      %635 = vmatprep.mubr.f32.mxu0 0.0
      %636 = vmatmul.mubr.f32.gmra.mrb[0].mxu0 %v509
      %v637 = vpop.f32.mrb[0].mxu0
      %v638 = vadd.f32 %v461, %v637
      %v639 = vpop.f32.mrb[0].mxu0
      %640 = vmatprep.mubr.f32.mxu0 0.0
      %641 = vmatmul.mubr.f32.gmra.mrb[0].mxu0 %v511
      %v642 = vpop.f32.mrb[0].mxu0
      %v643 = vadd.f32 %v466, %v642
      %v644 = vpop.f32.mrb[0].mxu0
      %645 = vmatprep.mubr.f32.mxu0 0.0
      %646 = vmatmul.mubr.f32.gmra.mrb[0].mxu0 %v513
      %v647 = vpop.f32.mrb[0].mxu0
      %v648 = vadd.f32 %v471, %v647
      %v649 = vpop.f32.mrb[0].mxu0
      %650 = vmatprep.mubr.f32.mxu0 0.0
      %651 = vmatmul.mubr.f32.gmra.mrb[0].mxu0 %v515
      %v652 = vpop.f32.mrb[0].mxu0
      %v653 = vadd.f32 %v476, %v652
      %v654 = vpop.f32.mrb[0].mxu0
      %655 = vmatprep.mubr.f32.mxu0 0.0
      %656 = vmatmul.mubr.f32.gmra.mrb[0].mxu0 %v517
      %v657 = vpop.f32.mrb[0].mxu0
      %v658 = vadd.f32 %v481, %v657
      %v659 = vpop.f32.mrb[0].mxu0
      %660 = vmatprep.mubr.f32.mxu0 0.0
      %661 = vmatmul.mubr.f32.gmra.mrb[0].mxu0 %v519
      %v662 = vpop.f32.mrb[0].mxu0
      %v663 = vadd.f32 %v486, %v662
      %v664 = vpop.f32.mrb[0].mxu0
      %665 = vdwg.mxu0
      %vm666 = vcmask 1045504
      %v667 = vrot.slane %v199, 2
      %v668 = vrot.slane %v200, 2
      %v669 = vsel %vm666, %v667, %v668
      %v670 = vrot.slane %v201, 2
      %v671 = vsel %vm666, %v668, %v670
      %v672 = vrot.slane %v202, 2
      %v673 = vrot.slane %v203, 2
      %v674 = vsel %vm666, %v672, %v673
      %v675 = vrot.slane %v204, 2
      %v676 = vsel %vm666, %v673, %v675
      %v677 = vrot.slane %v205, 2
      %v678 = vrot.slane %v206, 2
      %v679 = vsel %vm666, %v677, %v678
      %v680 = vrot.slane %v207, 2
      %v681 = vsel %vm666, %v678, %v680
      %v682 = vrot.slane %v208, 2
      %v683 = vrot.slane %v209, 2
      %v684 = vsel %vm666, %v682, %v683
      %v685 = vrot.slane %v210, 2
      %v686 = vsel %vm666, %v683, %v685
      %v687 = vrot.slane %v211, 2
      %v688 = vrot.slane %v212, 2
      %v689 = vsel %vm666, %v687, %v688
      %v690 = vrot.slane %v213, 2
      %v691 = vsel %vm666, %v688, %v690
      %v692 = vrot.slane %v214, 2
      %v693 = vrot.slane %v215, 2
      %v694 = vsel %vm666, %v692, %v693
      %v695 = vrot.slane %v216, 2
      %v696 = vsel %vm666, %v693, %v695
      %v697 = vrot.slane %v217, 2
      %v698 = vrot.slane %v218, 2
      %v699 = vsel %vm666, %v697, %v698
      %v700 = vrot.slane %v219, 2
      %v701 = vsel %vm666, %v698, %v700
      %v702 = vrot.slane %v220, 2
      %v703 = vrot.slane %v221, 2
      %v704 = vsel %vm666, %v702, %v703
      %v705 = vrot.slane %v222, 2
      %v706 = vsel %vm666, %v703, %v705
      %s707 = scalar_lea.vmem %s1, 128
      %v708 = vld [vmem:[%s707] sm:$0xff]
      %v709 = vld [vmem:[%s707 + $0x8] sm:$0xff]
      %v710 = vld [vmem:[%s707 + $0x10] sm:$0xff]
      %v711 = vld [vmem:[%s707 + $0x18] sm:$0xff]
      %v712 = vld [vmem:[%s707 + $0x20] sm:$0xff]
      %v713 = vld [vmem:[%s707 + $0x28] sm:$0xff]
      %v714 = vld [vmem:[%s707 + $0x30] sm:$0xff]
      %v715 = vld [vmem:[%s707 + $0x38] sm:$0xff]
      %v716 = vsel %vm311, %v669, 0
      %v718 = vsel %vm311, %v671, 0
      %v720 = vsel %vm311, %v674, 0
      %v722 = vsel %vm311, %v676, 0
      %v724 = vsel %vm311, %v679, 0
      %v726 = vsel %vm311, %v681, 0
      %v728 = vsel %vm311, %v684, 0
      %v730 = vsel %vm311, %v686, 0
      %v732 = vsel %vm311, %v689, 0
      %v734 = vsel %vm311, %v691, 0
      %v736 = vsel %vm311, %v694, 0
      %v738 = vsel %vm311, %v696, 0
      %v740 = vsel %vm311, %v699, 0
      %v742 = vsel %vm311, %v701, 0
      %v744 = vsel %vm311, %v704, 0
      %v746 = vsel %vm311, %v706, 0
      %748 = vmatprep.subr.mxu0 0.0
      %749 = vmatpush1.msra.mxu0 %v708
      %750 = vmatprep.subr.mxu0 0.0
      %751 = vmatpush1.msra.mxu0 %v709
      %752 = vmatprep.subr.mxu0 0.0
      %753 = vmatpush1.msra.mxu0 %v710
      %754 = vmatprep.subr.mxu0 0.0
      %755 = vmatpush1.msra.mxu0 %v711
      %756 = vmatprep.subr.mxu0 0.0
      %757 = vmatpush1.msra.mxu0 %v712
      %758 = vmatprep.subr.mxu0 0.0
      %759 = vmatpush1.msra.mxu0 %v713
      %760 = vmatprep.subr.mxu0 0.0
      %761 = vmatpush1.msra.mxu0 %v714
      %762 = vmatprep.subr.mxu0 0.0
      %763 = vmatpush1.msra.mxu0 %v715
      %764 = vmatprep.subr.mxu0 0.0
      %765 = vmatpush1.msra.mxu0 0.0
      %766 = vmatprep.subr.mxu0 0.0
      %767 = vmatpush1.msra.mxu0 0.0
      %768 = vmatprep.subr.mxu0 0.0
      %769 = vmatpush1.msra.mxu0 0.0
      %770 = vmatprep.subr.mxu0 0.0
      %771 = vmatpush1.msra.mxu0 0.0
      %772 = vmatprep.subr.mxu0 0.0
      %773 = vmatpush1.msra.mxu0 0.0
      %774 = vmatprep.subr.mxu0 0.0
      %775 = vmatpush1.msra.mxu0 0.0
      %776 = vmatprep.subr.mxu0 0.0
      %777 = vmatpush1.msra.mxu0 0.0
      %778 = vmatprep.subr.mxu0 0.0
      %779 = vmatpush1.msra.mxu0 0.0
      %780 = vmatprep.subr.mxu0 0.0
      %781 = vmatpush1.msra.mxu0 0.0
      %782 = vmatprep.subr.mxu0 0.0
      %783 = vmatpush1.msra.mxu0 0.0
      %784 = vmatprep.subr.mxu0 0.0
      %785 = vmatpush1.msra.mxu0 0.0
      %786 = vmatprep.subr.mxu0 0.0
      %787 = vmatpush1.msra.mxu0 0.0
      %788 = vmatprep.subr.mxu0 0.0
      %789 = vmatpush1.msra.mxu0 0.0
      %790 = vmatprep.subr.mxu0 0.0
      %791 = vmatpush1.msra.mxu0 0.0
      %792 = vmatprep.subr.mxu0 0.0
      %793 = vmatpush1.msra.mxu0 0.0
      %794 = vmatprep.subr.mxu0 0.0
      %795 = vmatpush1.msra.mxu0 0.0
      %796 = vmatprep.subr.mxu0 0.0
      %797 = vmatpush1.msra.mxu0 0.0
      %798 = vmatprep.subr.mxu0 0.0
      %799 = vmatpush1.msra.mxu0 0.0
      %800 = vmatprep.subr.mxu0 0.0
      %801 = vmatpush1.msra.mxu0 0.0
      %802 = vmatprep.subr.mxu0 0.0
      %803 = vmatpush1.msra.mxu0 0.0
      %804 = vmatprep.subr.mxu0 0.0
      %805 = vmatpush1.msra.mxu0 0.0
      %806 = vmatprep.subr.mxu0 0.0
      %807 = vmatpush1.msra.mxu0 0.0
      %808 = vmatprep.subr.mxu0 0.0
      %809 = vmatpush1.msra.mxu0 0.0
      %810 = vmatprep.subr.mxu0 0.0
      %811 = vmatpush1.msra.mxu0 0.0
      %812 = vmatprep.mubr.f32.mxu0 0.0
      %813 = vmatmul.mubr.f32.gmra.mrb[0].mxu0 %v716
      %v814 = vpop.f32.mrb[0].mxu0
      %v815 = vadd.f32 0.0, %v814
      %v816 = vpop.f32.mrb[0].mxu0
      %817 = vmatprep.mubr.f32.mxu0 0.0
      %818 = vmatmul.mubr.f32.gmra.mrb[0].mxu0 %v718
      %v819 = vpop.f32.mrb[0].mxu0
      %v820 = vadd.f32 0.0, %v819
      %v821 = vpop.f32.mrb[0].mxu0
      %822 = vmatprep.mubr.f32.mxu0 0.0
      %823 = vmatmul.mubr.f32.gmra.mrb[0].mxu0 %v720
      %v824 = vpop.f32.mrb[0].mxu0
      %v825 = vadd.f32 0.0, %v824
      %v826 = vpop.f32.mrb[0].mxu0
      %827 = vmatprep.mubr.f32.mxu0 0.0
      %828 = vmatmul.mubr.f32.gmra.mrb[0].mxu0 %v722
      %v829 = vpop.f32.mrb[0].mxu0
      %v830 = vadd.f32 0.0, %v829
      %v831 = vpop.f32.mrb[0].mxu0
      %832 = vmatprep.mubr.f32.mxu0 0.0
      %833 = vmatmul.mubr.f32.gmra.mrb[0].mxu0 %v724
      %v834 = vpop.f32.mrb[0].mxu0
      %v835 = vadd.f32 0.0, %v834
      %v836 = vpop.f32.mrb[0].mxu0
      %837 = vmatprep.mubr.f32.mxu0 0.0
      %838 = vmatmul.mubr.f32.gmra.mrb[0].mxu0 %v726
      %v839 = vpop.f32.mrb[0].mxu0
      %v840 = vadd.f32 0.0, %v839
      %v841 = vpop.f32.mrb[0].mxu0
      %842 = vmatprep.mubr.f32.mxu0 0.0
      %843 = vmatmul.mubr.f32.gmra.mrb[0].mxu0 %v728
      %v844 = vpop.f32.mrb[0].mxu0
      %v845 = vadd.f32 0.0, %v844
      %v846 = vpop.f32.mrb[0].mxu0
      %847 = vmatprep.mubr.f32.mxu0 0.0
      %848 = vmatmul.mubr.f32.gmra.mrb[0].mxu0 %v730
      %v849 = vpop.f32.mrb[0].mxu0
      %v850 = vadd.f32 0.0, %v849
      %v851 = vpop.f32.mrb[0].mxu0
      %852 = vmatprep.mubr.f32.mxu0 0.0
      %853 = vmatmul.mubr.f32.gmra.mrb[0].mxu0 %v732
      %v854 = vpop.f32.mrb[0].mxu0
      %v855 = vadd.f32 0.0, %v854
      %v856 = vpop.f32.mrb[0].mxu0
      %857 = vmatprep.mubr.f32.mxu0 0.0
      %858 = vmatmul.mubr.f32.gmra.mrb[0].mxu0 %v734
      %v859 = vpop.f32.mrb[0].mxu0
      %v860 = vadd.f32 0.0, %v859
      %v861 = vpop.f32.mrb[0].mxu0
      %862 = vmatprep.mubr.f32.mxu0 0.0
      %863 = vmatmul.mubr.f32.gmra.mrb[0].mxu0 %v736
      %v864 = vpop.f32.mrb[0].mxu0
      %v865 = vadd.f32 0.0, %v864
      %v866 = vpop.f32.mrb[0].mxu0
      %867 = vmatprep.mubr.f32.mxu0 0.0
      %868 = vmatmul.mubr.f32.gmra.mrb[0].mxu0 %v738
      %v869 = vpop.f32.mrb[0].mxu0
      %v870 = vadd.f32 0.0, %v869
      %v871 = vpop.f32.mrb[0].mxu0
      %872 = vmatprep.mubr.f32.mxu0 0.0
      %873 = vmatmul.mubr.f32.gmra.mrb[0].mxu0 %v740
      %v874 = vpop.f32.mrb[0].mxu0
      %v875 = vadd.f32 0.0, %v874
      %v876 = vpop.f32.mrb[0].mxu0
      %877 = vmatprep.mubr.f32.mxu0 0.0
      %878 = vmatmul.mubr.f32.gmra.mrb[0].mxu0 %v742
      %v879 = vpop.f32.mrb[0].mxu0
      %v880 = vadd.f32 0.0, %v879
      %v881 = vpop.f32.mrb[0].mxu0
      %882 = vmatprep.mubr.f32.mxu0 0.0
      %883 = vmatmul.mubr.f32.gmra.mrb[0].mxu0 %v744
      %v884 = vpop.f32.mrb[0].mxu0
      %v885 = vadd.f32 0.0, %v884
      %v886 = vpop.f32.mrb[0].mxu0
      %887 = vmatprep.mubr.f32.mxu0 0.0
      %888 = vmatmul.mubr.f32.gmra.mrb[0].mxu0 %v746
      %v889 = vpop.f32.mrb[0].mxu0
      %v890 = vadd.f32 0.0, %v889
      %v891 = vpop.f32.mrb[0].mxu0
      %892 = vdwg.mxu0
      %v893 = vadd.f32 %v588, %v815
      %v894 = vadd.f32 %v593, %v820
      %v895 = vadd.f32 %v598, %v825
      %v896 = vadd.f32 %v603, %v830
      %v897 = vadd.f32 %v608, %v835
      %v898 = vadd.f32 %v613, %v840
      %v899 = vadd.f32 %v618, %v845
      %v900 = vadd.f32 %v623, %v850
      %v901 = vadd.f32 %v628, %v855
      %v902 = vadd.f32 %v633, %v860
      %v903 = vadd.f32 %v638, %v865
      %v904 = vadd.f32 %v643, %v870
      %v905 = vadd.f32 %v648, %v875
      %v906 = vadd.f32 %v653, %v880
      %v907 = vadd.f32 %v658, %v885
      %v908 = vadd.f32 %v663, %v890
      %s909 = scalar_lea.vmem %s1, 192
      %v910 = vld [vmem:[%s909] sm:$0xff]
      %v911 = vld [vmem:[%s909 + $0x8] sm:$0xff]
      %v912 = vld [vmem:[%s909 + $0x10] sm:$0xff]
      %v913 = vld [vmem:[%s909 + $0x18] sm:$0xff]
      %v914 = vld [vmem:[%s909 + $0x20] sm:$0xff]
      %v915 = vld [vmem:[%s909 + $0x28] sm:$0xff]
      %v916 = vld [vmem:[%s909 + $0x30] sm:$0xff]
      %v917 = vld [vmem:[%s909 + $0x38] sm:$0xff]
      %v919 = vsel %vm311, %v223, 0
      %v922 = vsel %vm311, %v224, 0
      %924 = vmatprep.subr.mxu0 0.0
      %925 = vmatpush1.msra.mxu0 %v910
      %926 = vmatprep.subr.mxu0 0.0
      %927 = vmatpush1.msra.mxu0 %v911
      %928 = vmatprep.subr.mxu0 0.0
      %929 = vmatpush1.msra.mxu0 %v912
      %930 = vmatprep.subr.mxu0 0.0
      %931 = vmatpush1.msra.mxu0 %v913
      %932 = vmatprep.subr.mxu0 0.0
      %933 = vmatpush1.msra.mxu0 %v914
      %934 = vmatprep.subr.mxu0 0.0
      %935 = vmatpush1.msra.mxu0 %v915
      %936 = vmatprep.subr.mxu0 0.0
      %937 = vmatpush1.msra.mxu0 %v916
      %938 = vmatprep.subr.mxu0 0.0
      %939 = vmatpush1.msra.mxu0 %v917
      %940 = vmatprep.subr.mxu0 0.0
      %941 = vmatpush1.msra.mxu0 0.0
      %942 = vmatprep.subr.mxu0 0.0
      %943 = vmatpush1.msra.mxu0 0.0
      %944 = vmatprep.subr.mxu0 0.0
      %945 = vmatpush1.msra.mxu0 0.0
      %946 = vmatprep.subr.mxu0 0.0
      %947 = vmatpush1.msra.mxu0 0.0
      %948 = vmatprep.subr.mxu0 0.0
      %949 = vmatpush1.msra.mxu0 0.0
      %950 = vmatprep.subr.mxu0 0.0
      %951 = vmatpush1.msra.mxu0 0.0
      %952 = vmatprep.subr.mxu0 0.0
      %953 = vmatpush1.msra.mxu0 0.0
      %954 = vmatprep.subr.mxu0 0.0
      %955 = vmatpush1.msra.mxu0 0.0
      %956 = vmatprep.subr.mxu0 0.0
      %957 = vmatpush1.msra.mxu0 0.0
      %958 = vmatprep.subr.mxu0 0.0
      %959 = vmatpush1.msra.mxu0 0.0
      %960 = vmatprep.subr.mxu0 0.0
      %961 = vmatpush1.msra.mxu0 0.0
      %962 = vmatprep.subr.mxu0 0.0
      %963 = vmatpush1.msra.mxu0 0.0
      %964 = vmatprep.subr.mxu0 0.0
      %965 = vmatpush1.msra.mxu0 0.0
      %966 = vmatprep.subr.mxu0 0.0
      %967 = vmatpush1.msra.mxu0 0.0
      %968 = vmatprep.subr.mxu0 0.0
      %969 = vmatpush1.msra.mxu0 0.0
      %970 = vmatprep.subr.mxu0 0.0
      %971 = vmatpush1.msra.mxu0 0.0
      %972 = vmatprep.subr.mxu0 0.0
      %973 = vmatpush1.msra.mxu0 0.0
      %974 = vmatprep.subr.mxu0 0.0
      %975 = vmatpush1.msra.mxu0 0.0
      %976 = vmatprep.subr.mxu0 0.0
      %977 = vmatpush1.msra.mxu0 0.0
      %978 = vmatprep.subr.mxu0 0.0
      %979 = vmatpush1.msra.mxu0 0.0
      %980 = vmatprep.subr.mxu0 0.0
      %981 = vmatpush1.msra.mxu0 0.0
      %982 = vmatprep.subr.mxu0 0.0
      %983 = vmatpush1.msra.mxu0 0.0
      %984 = vmatprep.subr.mxu0 0.0
      %985 = vmatpush1.msra.mxu0 0.0
      %986 = vmatprep.subr.mxu0 0.0
      %987 = vmatpush1.msra.mxu0 0.0
      %988 = vmatprep.mubr.f32.mxu0 0.0
      %989 = vmatmul.mubr.f32.gmra.mrb[0].mxu0 %v493
      %v990 = vpop.f32.mrb[0].mxu0
      %v991 = vadd.f32 0.0, %v990
      %v992 = vpop.f32.mrb[0].mxu0
      %993 = vmatprep.mubr.f32.mxu0 0.0
      %994 = vmatmul.mubr.f32.gmra.mrb[0].mxu0 %v495
      %v995 = vpop.f32.mrb[0].mxu0
      %v996 = vadd.f32 0.0, %v995
      %v997 = vpop.f32.mrb[0].mxu0
      %998 = vmatprep.mubr.f32.mxu0 0.0
      %999 = vmatmul.mubr.f32.gmra.mrb[0].mxu0 %v497
      %v1000 = vpop.f32.mrb[0].mxu0
      %v1001 = vadd.f32 0.0, %v1000
      %v1002 = vpop.f32.mrb[0].mxu0
      %1003 = vmatprep.mubr.f32.mxu0 0.0
      %1004 = vmatmul.mubr.f32.gmra.mrb[0].mxu0 %v499
      %v1005 = vpop.f32.mrb[0].mxu0
      %v1006 = vadd.f32 0.0, %v1005
      %v1007 = vpop.f32.mrb[0].mxu0
      %1008 = vmatprep.mubr.f32.mxu0 0.0
      %1009 = vmatmul.mubr.f32.gmra.mrb[0].mxu0 %v501
      %v1010 = vpop.f32.mrb[0].mxu0
      %v1011 = vadd.f32 0.0, %v1010
      %v1012 = vpop.f32.mrb[0].mxu0
      %1013 = vmatprep.mubr.f32.mxu0 0.0
      %1014 = vmatmul.mubr.f32.gmra.mrb[0].mxu0 %v503
      %v1015 = vpop.f32.mrb[0].mxu0
      %v1016 = vadd.f32 0.0, %v1015
      %v1017 = vpop.f32.mrb[0].mxu0
      %1018 = vmatprep.mubr.f32.mxu0 0.0
      %1019 = vmatmul.mubr.f32.gmra.mrb[0].mxu0 %v505
      %v1020 = vpop.f32.mrb[0].mxu0
      %v1021 = vadd.f32 0.0, %v1020
      %v1022 = vpop.f32.mrb[0].mxu0
      %1023 = vmatprep.mubr.f32.mxu0 0.0
      %1024 = vmatmul.mubr.f32.gmra.mrb[0].mxu0 %v507
      %v1025 = vpop.f32.mrb[0].mxu0
      %v1026 = vadd.f32 0.0, %v1025
      %v1027 = vpop.f32.mrb[0].mxu0
      %1028 = vmatprep.mubr.f32.mxu0 0.0
      %1029 = vmatmul.mubr.f32.gmra.mrb[0].mxu0 %v509
      %v1030 = vpop.f32.mrb[0].mxu0
      %v1031 = vadd.f32 0.0, %v1030
      %v1032 = vpop.f32.mrb[0].mxu0
      %1033 = vmatprep.mubr.f32.mxu0 0.0
      %1034 = vmatmul.mubr.f32.gmra.mrb[0].mxu0 %v511
      %v1035 = vpop.f32.mrb[0].mxu0
      %v1036 = vadd.f32 0.0, %v1035
      %v1037 = vpop.f32.mrb[0].mxu0
      %1038 = vmatprep.mubr.f32.mxu0 0.0
      %1039 = vmatmul.mubr.f32.gmra.mrb[0].mxu0 %v513
      %v1040 = vpop.f32.mrb[0].mxu0
      %v1041 = vadd.f32 0.0, %v1040
      %v1042 = vpop.f32.mrb[0].mxu0
      %1043 = vmatprep.mubr.f32.mxu0 0.0
      %1044 = vmatmul.mubr.f32.gmra.mrb[0].mxu0 %v515
      %v1045 = vpop.f32.mrb[0].mxu0
      %v1046 = vadd.f32 0.0, %v1045
      %v1047 = vpop.f32.mrb[0].mxu0
      %1048 = vmatprep.mubr.f32.mxu0 0.0
      %1049 = vmatmul.mubr.f32.gmra.mrb[0].mxu0 %v517
      %v1050 = vpop.f32.mrb[0].mxu0
      %v1051 = vadd.f32 0.0, %v1050
      %v1052 = vpop.f32.mrb[0].mxu0
      %1053 = vmatprep.mubr.f32.mxu0 0.0
      %1054 = vmatmul.mubr.f32.gmra.mrb[0].mxu0 %v519
      %v1055 = vpop.f32.mrb[0].mxu0
      %v1056 = vadd.f32 0.0, %v1055
      %v1057 = vpop.f32.mrb[0].mxu0
      %1058 = vmatprep.mubr.f32.mxu0 0.0
      %1059 = vmatmul.mubr.f32.gmra.mrb[0].mxu0 %v919
      %v1060 = vpop.f32.mrb[0].mxu0
      %v1061 = vadd.f32 0.0, %v1060
      %v1062 = vpop.f32.mrb[0].mxu0
      %1063 = vmatprep.mubr.f32.mxu0 0.0
      %1064 = vmatmul.mubr.f32.gmra.mrb[0].mxu0 %v922
      %v1065 = vpop.f32.mrb[0].mxu0
      %v1066 = vadd.f32 0.0, %v1065
      %v1067 = vpop.f32.mrb[0].mxu0
      %1068 = vdwg.mxu0
      %v1069 = vadd.f32 %v893, %v991
      %v1070 = vadd.f32 %v894, %v996
      %v1071 = vadd.f32 %v895, %v1001
      %v1072 = vadd.f32 %v896, %v1006
      %v1073 = vadd.f32 %v897, %v1011
      %v1074 = vadd.f32 %v898, %v1016
      %v1075 = vadd.f32 %v899, %v1021
      %v1076 = vadd.f32 %v900, %v1026
      %v1077 = vadd.f32 %v901, %v1031
      %v1078 = vadd.f32 %v902, %v1036
      %v1079 = vadd.f32 %v903, %v1041
      %v1080 = vadd.f32 %v904, %v1046
      %v1081 = vadd.f32 %v905, %v1051
      %v1082 = vadd.f32 %v906, %v1056
      %v1083 = vadd.f32 %v907, %v1061
      %v1084 = vadd.f32 %v908, %v1066
      %v1086 = vrot.slane %v223, 1
      %v1087 = vrot.slane %v224, 1
      %v1088 = vsel %vm261, %v1086, %v1087
      %v1089 = vrot.slane %v225, 1
      %v1090 = vsel %vm261, %v1087, %v1089
      %s1091 = scalar_lea.vmem %s1, 256
      %v1092 = vld [vmem:[%s1091] sm:$0xff]
      %v1093 = vld [vmem:[%s1091 + $0x8] sm:$0xff]
      %v1094 = vld [vmem:[%s1091 + $0x10] sm:$0xff]
      %v1095 = vld [vmem:[%s1091 + $0x18] sm:$0xff]
      %v1096 = vld [vmem:[%s1091 + $0x20] sm:$0xff]
      %v1097 = vld [vmem:[%s1091 + $0x28] sm:$0xff]
      %v1098 = vld [vmem:[%s1091 + $0x30] sm:$0xff]
      %v1099 = vld [vmem:[%s1091 + $0x38] sm:$0xff]
      %v1100 = vsel %vm311, %v1088, 0
      %v1102 = vsel %vm311, %v1090, 0
      %1104 = vmatprep.subr.mxu0 0.0
      %1105 = vmatpush1.msra.mxu0 %v1092
      %1106 = vmatprep.subr.mxu0 0.0
      %1107 = vmatpush1.msra.mxu0 %v1093
      %1108 = vmatprep.subr.mxu0 0.0
      %1109 = vmatpush1.msra.mxu0 %v1094
      %1110 = vmatprep.subr.mxu0 0.0
      %1111 = vmatpush1.msra.mxu0 %v1095
      %1112 = vmatprep.subr.mxu0 0.0
      %1113 = vmatpush1.msra.mxu0 %v1096
      %1114 = vmatprep.subr.mxu0 0.0
      %1115 = vmatpush1.msra.mxu0 %v1097
      %1116 = vmatprep.subr.mxu0 0.0
      %1117 = vmatpush1.msra.mxu0 %v1098
      %1118 = vmatprep.subr.mxu0 0.0
      %1119 = vmatpush1.msra.mxu0 %v1099
      %1120 = vmatprep.subr.mxu0 0.0
      %1121 = vmatpush1.msra.mxu0 0.0
      %1122 = vmatprep.subr.mxu0 0.0
      %1123 = vmatpush1.msra.mxu0 0.0
      %1124 = vmatprep.subr.mxu0 0.0
      %1125 = vmatpush1.msra.mxu0 0.0
      %1126 = vmatprep.subr.mxu0 0.0
      %1127 = vmatpush1.msra.mxu0 0.0
      %1128 = vmatprep.subr.mxu0 0.0
      %1129 = vmatpush1.msra.mxu0 0.0
      %1130 = vmatprep.subr.mxu0 0.0
      %1131 = vmatpush1.msra.mxu0 0.0
      %1132 = vmatprep.subr.mxu0 0.0
      %1133 = vmatpush1.msra.mxu0 0.0
      %1134 = vmatprep.subr.mxu0 0.0
      %1135 = vmatpush1.msra.mxu0 0.0
      %1136 = vmatprep.subr.mxu0 0.0
      %1137 = vmatpush1.msra.mxu0 0.0
      %1138 = vmatprep.subr.mxu0 0.0
      %1139 = vmatpush1.msra.mxu0 0.0
      %1140 = vmatprep.subr.mxu0 0.0
      %1141 = vmatpush1.msra.mxu0 0.0
      %1142 = vmatprep.subr.mxu0 0.0
      %1143 = vmatpush1.msra.mxu0 0.0
      %1144 = vmatprep.subr.mxu0 0.0
      %1145 = vmatpush1.msra.mxu0 0.0
      %1146 = vmatprep.subr.mxu0 0.0
      %1147 = vmatpush1.msra.mxu0 0.0
      %1148 = vmatprep.subr.mxu0 0.0
      %1149 = vmatpush1.msra.mxu0 0.0
      %1150 = vmatprep.subr.mxu0 0.0
      %1151 = vmatpush1.msra.mxu0 0.0
      %1152 = vmatprep.subr.mxu0 0.0
      %1153 = vmatpush1.msra.mxu0 0.0
      %1154 = vmatprep.subr.mxu0 0.0
      %1155 = vmatpush1.msra.mxu0 0.0
      %1156 = vmatprep.subr.mxu0 0.0
      %1157 = vmatpush1.msra.mxu0 0.0
      %1158 = vmatprep.subr.mxu0 0.0
      %1159 = vmatpush1.msra.mxu0 0.0
      %1160 = vmatprep.subr.mxu0 0.0
      %1161 = vmatpush1.msra.mxu0 0.0
      %1162 = vmatprep.subr.mxu0 0.0
      %1163 = vmatpush1.msra.mxu0 0.0
      %1164 = vmatprep.subr.mxu0 0.0
      %1165 = vmatpush1.msra.mxu0 0.0
      %1166 = vmatprep.subr.mxu0 0.0
      %1167 = vmatpush1.msra.mxu0 0.0
      %1168 = vmatprep.mubr.f32.mxu0 0.0
      %1169 = vmatmul.mubr.f32.gmra.mrb[0].mxu0 %v316
      %v1170 = vpop.f32.mrb[0].mxu0
      %v1171 = vadd.f32 0.0, %v1170
      %v1172 = vpop.f32.mrb[0].mxu0
      %1173 = vmatprep.mubr.f32.mxu0 0.0
      %1174 = vmatmul.mubr.f32.gmra.mrb[0].mxu0 %v318
      %v1175 = vpop.f32.mrb[0].mxu0
      %v1176 = vadd.f32 0.0, %v1175
      %v1177 = vpop.f32.mrb[0].mxu0
      %1178 = vmatprep.mubr.f32.mxu0 0.0
      %1179 = vmatmul.mubr.f32.gmra.mrb[0].mxu0 %v320
      %v1180 = vpop.f32.mrb[0].mxu0
      %v1181 = vadd.f32 0.0, %v1180
      %v1182 = vpop.f32.mrb[0].mxu0
      %1183 = vmatprep.mubr.f32.mxu0 0.0
      %1184 = vmatmul.mubr.f32.gmra.mrb[0].mxu0 %v322
      %v1185 = vpop.f32.mrb[0].mxu0
      %v1186 = vadd.f32 0.0, %v1185
      %v1187 = vpop.f32.mrb[0].mxu0
      %1188 = vmatprep.mubr.f32.mxu0 0.0
      %1189 = vmatmul.mubr.f32.gmra.mrb[0].mxu0 %v324
      %v1190 = vpop.f32.mrb[0].mxu0
      %v1191 = vadd.f32 0.0, %v1190
      %v1192 = vpop.f32.mrb[0].mxu0
      %1193 = vmatprep.mubr.f32.mxu0 0.0
      %1194 = vmatmul.mubr.f32.gmra.mrb[0].mxu0 %v326
      %v1195 = vpop.f32.mrb[0].mxu0
      %v1196 = vadd.f32 0.0, %v1195
      %v1197 = vpop.f32.mrb[0].mxu0
      %1198 = vmatprep.mubr.f32.mxu0 0.0
      %1199 = vmatmul.mubr.f32.gmra.mrb[0].mxu0 %v328
      %v1200 = vpop.f32.mrb[0].mxu0
      %v1201 = vadd.f32 0.0, %v1200
      %v1202 = vpop.f32.mrb[0].mxu0
      %1203 = vmatprep.mubr.f32.mxu0 0.0
      %1204 = vmatmul.mubr.f32.gmra.mrb[0].mxu0 %v330
      %v1205 = vpop.f32.mrb[0].mxu0
      %v1206 = vadd.f32 0.0, %v1205
      %v1207 = vpop.f32.mrb[0].mxu0
      %1208 = vmatprep.mubr.f32.mxu0 0.0
      %1209 = vmatmul.mubr.f32.gmra.mrb[0].mxu0 %v332
      %v1210 = vpop.f32.mrb[0].mxu0
      %v1211 = vadd.f32 0.0, %v1210
      %v1212 = vpop.f32.mrb[0].mxu0
      %1213 = vmatprep.mubr.f32.mxu0 0.0
      %1214 = vmatmul.mubr.f32.gmra.mrb[0].mxu0 %v334
      %v1215 = vpop.f32.mrb[0].mxu0
      %v1216 = vadd.f32 0.0, %v1215
      %v1217 = vpop.f32.mrb[0].mxu0
      %1218 = vmatprep.mubr.f32.mxu0 0.0
      %1219 = vmatmul.mubr.f32.gmra.mrb[0].mxu0 %v336
      %v1220 = vpop.f32.mrb[0].mxu0
      %v1221 = vadd.f32 0.0, %v1220
      %v1222 = vpop.f32.mrb[0].mxu0
      %1223 = vmatprep.mubr.f32.mxu0 0.0
      %1224 = vmatmul.mubr.f32.gmra.mrb[0].mxu0 %v338
      %v1225 = vpop.f32.mrb[0].mxu0
      %v1226 = vadd.f32 0.0, %v1225
      %v1227 = vpop.f32.mrb[0].mxu0
      %1228 = vmatprep.mubr.f32.mxu0 0.0
      %1229 = vmatmul.mubr.f32.gmra.mrb[0].mxu0 %v340
      %v1230 = vpop.f32.mrb[0].mxu0
      %v1231 = vadd.f32 0.0, %v1230
      %v1232 = vpop.f32.mrb[0].mxu0
      %1233 = vmatprep.mubr.f32.mxu0 0.0
      %1234 = vmatmul.mubr.f32.gmra.mrb[0].mxu0 %v342
      %v1235 = vpop.f32.mrb[0].mxu0
      %v1236 = vadd.f32 0.0, %v1235
      %v1237 = vpop.f32.mrb[0].mxu0
      %1238 = vmatprep.mubr.f32.mxu0 0.0
      %1239 = vmatmul.mubr.f32.gmra.mrb[0].mxu0 %v1100
      %v1240 = vpop.f32.mrb[0].mxu0
      %v1241 = vadd.f32 0.0, %v1240
      %v1242 = vpop.f32.mrb[0].mxu0
      %1243 = vmatprep.mubr.f32.mxu0 0.0
      %1244 = vmatmul.mubr.f32.gmra.mrb[0].mxu0 %v1102
      %v1245 = vpop.f32.mrb[0].mxu0
      %v1246 = vadd.f32 0.0, %v1245
      %v1247 = vpop.f32.mrb[0].mxu0
      %1248 = vdwg.mxu0
      %v1249 = vadd.f32 %v1069, %v1171
      %v1250 = vadd.f32 %v1070, %v1176
      %v1251 = vadd.f32 %v1071, %v1181
      %v1252 = vadd.f32 %v1072, %v1186
      %v1253 = vadd.f32 %v1073, %v1191
      %v1254 = vadd.f32 %v1074, %v1196
      %v1255 = vadd.f32 %v1075, %v1201
      %v1256 = vadd.f32 %v1076, %v1206
      %v1257 = vadd.f32 %v1077, %v1211
      %v1258 = vadd.f32 %v1078, %v1216
      %v1259 = vadd.f32 %v1079, %v1221
      %v1260 = vadd.f32 %v1080, %v1226
      %v1261 = vadd.f32 %v1081, %v1231
      %v1262 = vadd.f32 %v1082, %v1236
      %v1263 = vadd.f32 %v1083, %v1241
      %v1264 = vadd.f32 %v1084, %v1246
      %v1265 = vrot.slane %v223, 2
      %v1266 = vrot.slane %v224, 2
      %v1267 = vsel %vm666, %v1265, %v1266
      %v1268 = vrot.slane %v225, 2
      %v1269 = vsel %vm666, %v1266, %v1268
      %s1270 = scalar_lea.vmem %s1, 320
      %v1271 = vld [vmem:[%s1270] sm:$0xff]
      %v1272 = vld [vmem:[%s1270 + $0x8] sm:$0xff]
      %v1273 = vld [vmem:[%s1270 + $0x10] sm:$0xff]
      %v1274 = vld [vmem:[%s1270 + $0x18] sm:$0xff]
      %v1275 = vld [vmem:[%s1270 + $0x20] sm:$0xff]
      %v1276 = vld [vmem:[%s1270 + $0x28] sm:$0xff]
      %v1277 = vld [vmem:[%s1270 + $0x30] sm:$0xff]
      %v1278 = vld [vmem:[%s1270 + $0x38] sm:$0xff]
      %v1279 = vsel %vm311, %v1267, 0
      %v1281 = vsel %vm311, %v1269, 0
      %1283 = vmatprep.subr.mxu0 0.0
      %1284 = vmatpush1.msra.mxu0 %v1271
      %1285 = vmatprep.subr.mxu0 0.0
      %1286 = vmatpush1.msra.mxu0 %v1272
      %1287 = vmatprep.subr.mxu0 0.0
      %1288 = vmatpush1.msra.mxu0 %v1273
      %1289 = vmatprep.subr.mxu0 0.0
      %1290 = vmatpush1.msra.mxu0 %v1274
      %1291 = vmatprep.subr.mxu0 0.0
      %1292 = vmatpush1.msra.mxu0 %v1275
      %1293 = vmatprep.subr.mxu0 0.0
      %1294 = vmatpush1.msra.mxu0 %v1276
      %1295 = vmatprep.subr.mxu0 0.0
      %1296 = vmatpush1.msra.mxu0 %v1277
      %1297 = vmatprep.subr.mxu0 0.0
      %1298 = vmatpush1.msra.mxu0 %v1278
      %1299 = vmatprep.subr.mxu0 0.0
      %1300 = vmatpush1.msra.mxu0 0.0
      %1301 = vmatprep.subr.mxu0 0.0
      %1302 = vmatpush1.msra.mxu0 0.0
      %1303 = vmatprep.subr.mxu0 0.0
      %1304 = vmatpush1.msra.mxu0 0.0
      %1305 = vmatprep.subr.mxu0 0.0
      %1306 = vmatpush1.msra.mxu0 0.0
      %1307 = vmatprep.subr.mxu0 0.0
      %1308 = vmatpush1.msra.mxu0 0.0
      %1309 = vmatprep.subr.mxu0 0.0
      %1310 = vmatpush1.msra.mxu0 0.0
      %1311 = vmatprep.subr.mxu0 0.0
      %1312 = vmatpush1.msra.mxu0 0.0
      %1313 = vmatprep.subr.mxu0 0.0
      %1314 = vmatpush1.msra.mxu0 0.0
      %1315 = vmatprep.subr.mxu0 0.0
      %1316 = vmatpush1.msra.mxu0 0.0
      %1317 = vmatprep.subr.mxu0 0.0
      %1318 = vmatpush1.msra.mxu0 0.0
      %1319 = vmatprep.subr.mxu0 0.0
      %1320 = vmatpush1.msra.mxu0 0.0
      %1321 = vmatprep.subr.mxu0 0.0
      %1322 = vmatpush1.msra.mxu0 0.0
      %1323 = vmatprep.subr.mxu0 0.0
      %1324 = vmatpush1.msra.mxu0 0.0
      %1325 = vmatprep.subr.mxu0 0.0
      %1326 = vmatpush1.msra.mxu0 0.0
      %1327 = vmatprep.subr.mxu0 0.0
      %1328 = vmatpush1.msra.mxu0 0.0
      %1329 = vmatprep.subr.mxu0 0.0
      %1330 = vmatpush1.msra.mxu0 0.0
      %1331 = vmatprep.subr.mxu0 0.0
      %1332 = vmatpush1.msra.mxu0 0.0
      %1333 = vmatprep.subr.mxu0 0.0
      %1334 = vmatpush1.msra.mxu0 0.0
      %1335 = vmatprep.subr.mxu0 0.0
      %1336 = vmatpush1.msra.mxu0 0.0
      %1337 = vmatprep.subr.mxu0 0.0
      %1338 = vmatpush1.msra.mxu0 0.0
      %1339 = vmatprep.subr.mxu0 0.0
      %1340 = vmatpush1.msra.mxu0 0.0
      %1341 = vmatprep.subr.mxu0 0.0
      %1342 = vmatpush1.msra.mxu0 0.0
      %1343 = vmatprep.subr.mxu0 0.0
      %1344 = vmatpush1.msra.mxu0 0.0
      %1345 = vmatprep.subr.mxu0 0.0
      %1346 = vmatpush1.msra.mxu0 0.0
      %1347 = vmatprep.mubr.f32.mxu0 0.0
      %1348 = vmatmul.mubr.f32.gmra.mrb[0].mxu0 %v720
      %v1349 = vpop.f32.mrb[0].mxu0
      %v1350 = vadd.f32 0.0, %v1349
      %v1351 = vpop.f32.mrb[0].mxu0
      %1352 = vmatprep.mubr.f32.mxu0 0.0
      %1353 = vmatmul.mubr.f32.gmra.mrb[0].mxu0 %v722
      %v1354 = vpop.f32.mrb[0].mxu0
      %v1355 = vadd.f32 0.0, %v1354
      %v1356 = vpop.f32.mrb[0].mxu0
      %1357 = vmatprep.mubr.f32.mxu0 0.0
      %1358 = vmatmul.mubr.f32.gmra.mrb[0].mxu0 %v724
      %v1359 = vpop.f32.mrb[0].mxu0
      %v1360 = vadd.f32 0.0, %v1359
      %v1361 = vpop.f32.mrb[0].mxu0
      %1362 = vmatprep.mubr.f32.mxu0 0.0
      %1363 = vmatmul.mubr.f32.gmra.mrb[0].mxu0 %v726
      %v1364 = vpop.f32.mrb[0].mxu0
      %v1365 = vadd.f32 0.0, %v1364
      %v1366 = vpop.f32.mrb[0].mxu0
      %1367 = vmatprep.mubr.f32.mxu0 0.0
      %1368 = vmatmul.mubr.f32.gmra.mrb[0].mxu0 %v728
      %v1369 = vpop.f32.mrb[0].mxu0
      %v1370 = vadd.f32 0.0, %v1369
      %v1371 = vpop.f32.mrb[0].mxu0
      %1372 = vmatprep.mubr.f32.mxu0 0.0
      %1373 = vmatmul.mubr.f32.gmra.mrb[0].mxu0 %v730
      %v1374 = vpop.f32.mrb[0].mxu0
      %v1375 = vadd.f32 0.0, %v1374
      %v1376 = vpop.f32.mrb[0].mxu0
      %1377 = vmatprep.mubr.f32.mxu0 0.0
      %1378 = vmatmul.mubr.f32.gmra.mrb[0].mxu0 %v732
      %v1379 = vpop.f32.mrb[0].mxu0
      %v1380 = vadd.f32 0.0, %v1379
      %v1381 = vpop.f32.mrb[0].mxu0
      %1382 = vmatprep.mubr.f32.mxu0 0.0
      %1383 = vmatmul.mubr.f32.gmra.mrb[0].mxu0 %v734
      %v1384 = vpop.f32.mrb[0].mxu0
      %v1385 = vadd.f32 0.0, %v1384
      %v1386 = vpop.f32.mrb[0].mxu0
      %1387 = vmatprep.mubr.f32.mxu0 0.0
      %1388 = vmatmul.mubr.f32.gmra.mrb[0].mxu0 %v736
      %v1389 = vpop.f32.mrb[0].mxu0
      %v1390 = vadd.f32 0.0, %v1389
      %v1391 = vpop.f32.mrb[0].mxu0
      %1392 = vmatprep.mubr.f32.mxu0 0.0
      %1393 = vmatmul.mubr.f32.gmra.mrb[0].mxu0 %v738
      %v1394 = vpop.f32.mrb[0].mxu0
      %v1395 = vadd.f32 0.0, %v1394
      %v1396 = vpop.f32.mrb[0].mxu0
      %1397 = vmatprep.mubr.f32.mxu0 0.0
      %1398 = vmatmul.mubr.f32.gmra.mrb[0].mxu0 %v740
      %v1399 = vpop.f32.mrb[0].mxu0
      %v1400 = vadd.f32 0.0, %v1399
      %v1401 = vpop.f32.mrb[0].mxu0
      %1402 = vmatprep.mubr.f32.mxu0 0.0
      %1403 = vmatmul.mubr.f32.gmra.mrb[0].mxu0 %v742
      %v1404 = vpop.f32.mrb[0].mxu0
      %v1405 = vadd.f32 0.0, %v1404
      %v1406 = vpop.f32.mrb[0].mxu0
      %1407 = vmatprep.mubr.f32.mxu0 0.0
      %1408 = vmatmul.mubr.f32.gmra.mrb[0].mxu0 %v744
      %v1409 = vpop.f32.mrb[0].mxu0
      %v1410 = vadd.f32 0.0, %v1409
      %v1411 = vpop.f32.mrb[0].mxu0
      %1412 = vmatprep.mubr.f32.mxu0 0.0
      %1413 = vmatmul.mubr.f32.gmra.mrb[0].mxu0 %v746
      %v1414 = vpop.f32.mrb[0].mxu0
      %v1415 = vadd.f32 0.0, %v1414
      %v1416 = vpop.f32.mrb[0].mxu0
      %1417 = vmatprep.mubr.f32.mxu0 0.0
      %1418 = vmatmul.mubr.f32.gmra.mrb[0].mxu0 %v1279
      %v1419 = vpop.f32.mrb[0].mxu0
      %v1420 = vadd.f32 0.0, %v1419
      %v1421 = vpop.f32.mrb[0].mxu0
      %1422 = vmatprep.mubr.f32.mxu0 0.0
      %1423 = vmatmul.mubr.f32.gmra.mrb[0].mxu0 %v1281
      %v1424 = vpop.f32.mrb[0].mxu0
      %v1425 = vadd.f32 0.0, %v1424
      %v1426 = vpop.f32.mrb[0].mxu0
      %1427 = vdwg.mxu0
      %v1428 = vadd.f32 %v1249, %v1350
      %v1429 = vadd.f32 %v1250, %v1355
      %v1430 = vadd.f32 %v1251, %v1360
      %v1431 = vadd.f32 %v1252, %v1365
      %v1432 = vadd.f32 %v1253, %v1370
      %v1433 = vadd.f32 %v1254, %v1375
      %v1434 = vadd.f32 %v1255, %v1380
      %v1435 = vadd.f32 %v1256, %v1385
      %v1436 = vadd.f32 %v1257, %v1390
      %v1437 = vadd.f32 %v1258, %v1395
      %v1438 = vadd.f32 %v1259, %v1400
      %v1439 = vadd.f32 %v1260, %v1405
      %v1440 = vadd.f32 %v1261, %v1410
      %v1441 = vadd.f32 %v1262, %v1415
      %v1442 = vadd.f32 %v1263, %v1420
      %v1443 = vadd.f32 %v1264, %v1425
      %s1444 = scalar_lea.vmem %s1, 384
      %v1445 = vld [vmem:[%s1444] sm:$0xff]
      %v1446 = vld [vmem:[%s1444 + $0x8] sm:$0xff]
      %v1447 = vld [vmem:[%s1444 + $0x10] sm:$0xff]
      %v1448 = vld [vmem:[%s1444 + $0x18] sm:$0xff]
      %v1449 = vld [vmem:[%s1444 + $0x20] sm:$0xff]
      %v1450 = vld [vmem:[%s1444 + $0x28] sm:$0xff]
      %v1451 = vld [vmem:[%s1444 + $0x30] sm:$0xff]
      %v1452 = vld [vmem:[%s1444 + $0x38] sm:$0xff]
      %v1454 = vsel %vm311, %v226, 0
      %v1457 = vsel %vm311, %v227, 0
      %1459 = vmatprep.subr.mxu0 0.0
      %1460 = vmatpush1.msra.mxu0 %v1445
      %1461 = vmatprep.subr.mxu0 0.0
      %1462 = vmatpush1.msra.mxu0 %v1446
      %1463 = vmatprep.subr.mxu0 0.0
      %1464 = vmatpush1.msra.mxu0 %v1447
      %1465 = vmatprep.subr.mxu0 0.0
      %1466 = vmatpush1.msra.mxu0 %v1448
      %1467 = vmatprep.subr.mxu0 0.0
      %1468 = vmatpush1.msra.mxu0 %v1449
      %1469 = vmatprep.subr.mxu0 0.0
      %1470 = vmatpush1.msra.mxu0 %v1450
      %1471 = vmatprep.subr.mxu0 0.0
      %1472 = vmatpush1.msra.mxu0 %v1451
      %1473 = vmatprep.subr.mxu0 0.0
      %1474 = vmatpush1.msra.mxu0 %v1452
      %1475 = vmatprep.subr.mxu0 0.0
      %1476 = vmatpush1.msra.mxu0 0.0
      %1477 = vmatprep.subr.mxu0 0.0
      %1478 = vmatpush1.msra.mxu0 0.0
      %1479 = vmatprep.subr.mxu0 0.0
      %1480 = vmatpush1.msra.mxu0 0.0
      %1481 = vmatprep.subr.mxu0 0.0
      %1482 = vmatpush1.msra.mxu0 0.0
      %1483 = vmatprep.subr.mxu0 0.0
      %1484 = vmatpush1.msra.mxu0 0.0
      %1485 = vmatprep.subr.mxu0 0.0
      %1486 = vmatpush1.msra.mxu0 0.0
      %1487 = vmatprep.subr.mxu0 0.0
      %1488 = vmatpush1.msra.mxu0 0.0
      %1489 = vmatprep.subr.mxu0 0.0
      %1490 = vmatpush1.msra.mxu0 0.0
      %1491 = vmatprep.subr.mxu0 0.0
      %1492 = vmatpush1.msra.mxu0 0.0
      %1493 = vmatprep.subr.mxu0 0.0
      %1494 = vmatpush1.msra.mxu0 0.0
      %1495 = vmatprep.subr.mxu0 0.0
      %1496 = vmatpush1.msra.mxu0 0.0
      %1497 = vmatprep.subr.mxu0 0.0
      %1498 = vmatpush1.msra.mxu0 0.0
      %1499 = vmatprep.subr.mxu0 0.0
      %1500 = vmatpush1.msra.mxu0 0.0
      %1501 = vmatprep.subr.mxu0 0.0
      %1502 = vmatpush1.msra.mxu0 0.0
      %1503 = vmatprep.subr.mxu0 0.0
      %1504 = vmatpush1.msra.mxu0 0.0
      %1505 = vmatprep.subr.mxu0 0.0
      %1506 = vmatpush1.msra.mxu0 0.0
      %1507 = vmatprep.subr.mxu0 0.0
      %1508 = vmatpush1.msra.mxu0 0.0
      %1509 = vmatprep.subr.mxu0 0.0
      %1510 = vmatpush1.msra.mxu0 0.0
      %1511 = vmatprep.subr.mxu0 0.0
      %1512 = vmatpush1.msra.mxu0 0.0
      %1513 = vmatprep.subr.mxu0 0.0
      %1514 = vmatpush1.msra.mxu0 0.0
      %1515 = vmatprep.subr.mxu0 0.0
      %1516 = vmatpush1.msra.mxu0 0.0
      %1517 = vmatprep.subr.mxu0 0.0
      %1518 = vmatpush1.msra.mxu0 0.0
      %1519 = vmatprep.subr.mxu0 0.0
      %1520 = vmatpush1.msra.mxu0 0.0
      %1521 = vmatprep.subr.mxu0 0.0
      %1522 = vmatpush1.msra.mxu0 0.0
      %1523 = vmatprep.mubr.f32.mxu0 0.0
      %1524 = vmatmul.mubr.f32.gmra.mrb[0].mxu0 %v497
      %v1525 = vpop.f32.mrb[0].mxu0
      %v1526 = vadd.f32 0.0, %v1525
      %v1527 = vpop.f32.mrb[0].mxu0
      %1528 = vmatprep.mubr.f32.mxu0 0.0
      %1529 = vmatmul.mubr.f32.gmra.mrb[0].mxu0 %v499
      %v1530 = vpop.f32.mrb[0].mxu0
      %v1531 = vadd.f32 0.0, %v1530
      %v1532 = vpop.f32.mrb[0].mxu0
      %1533 = vmatprep.mubr.f32.mxu0 0.0
      %1534 = vmatmul.mubr.f32.gmra.mrb[0].mxu0 %v501
      %v1535 = vpop.f32.mrb[0].mxu0
      %v1536 = vadd.f32 0.0, %v1535
      %v1537 = vpop.f32.mrb[0].mxu0
      %1538 = vmatprep.mubr.f32.mxu0 0.0
      %1539 = vmatmul.mubr.f32.gmra.mrb[0].mxu0 %v503
      %v1540 = vpop.f32.mrb[0].mxu0
      %v1541 = vadd.f32 0.0, %v1540
      %v1542 = vpop.f32.mrb[0].mxu0
      %1543 = vmatprep.mubr.f32.mxu0 0.0
      %1544 = vmatmul.mubr.f32.gmra.mrb[0].mxu0 %v505
      %v1545 = vpop.f32.mrb[0].mxu0
      %v1546 = vadd.f32 0.0, %v1545
      %v1547 = vpop.f32.mrb[0].mxu0
      %1548 = vmatprep.mubr.f32.mxu0 0.0
      %1549 = vmatmul.mubr.f32.gmra.mrb[0].mxu0 %v507
      %v1550 = vpop.f32.mrb[0].mxu0
      %v1551 = vadd.f32 0.0, %v1550
      %v1552 = vpop.f32.mrb[0].mxu0
      %1553 = vmatprep.mubr.f32.mxu0 0.0
      %1554 = vmatmul.mubr.f32.gmra.mrb[0].mxu0 %v509
      %v1555 = vpop.f32.mrb[0].mxu0
      %v1556 = vadd.f32 0.0, %v1555
      %v1557 = vpop.f32.mrb[0].mxu0
      %1558 = vmatprep.mubr.f32.mxu0 0.0
      %1559 = vmatmul.mubr.f32.gmra.mrb[0].mxu0 %v511
      %v1560 = vpop.f32.mrb[0].mxu0
      %v1561 = vadd.f32 0.0, %v1560
      %v1562 = vpop.f32.mrb[0].mxu0
      %1563 = vmatprep.mubr.f32.mxu0 0.0
      %1564 = vmatmul.mubr.f32.gmra.mrb[0].mxu0 %v513
      %v1565 = vpop.f32.mrb[0].mxu0
      %v1566 = vadd.f32 0.0, %v1565
      %v1567 = vpop.f32.mrb[0].mxu0
      %1568 = vmatprep.mubr.f32.mxu0 0.0
      %1569 = vmatmul.mubr.f32.gmra.mrb[0].mxu0 %v515
      %v1570 = vpop.f32.mrb[0].mxu0
      %v1571 = vadd.f32 0.0, %v1570
      %v1572 = vpop.f32.mrb[0].mxu0
      %1573 = vmatprep.mubr.f32.mxu0 0.0
      %1574 = vmatmul.mubr.f32.gmra.mrb[0].mxu0 %v517
      %v1575 = vpop.f32.mrb[0].mxu0
      %v1576 = vadd.f32 0.0, %v1575
      %v1577 = vpop.f32.mrb[0].mxu0
      %1578 = vmatprep.mubr.f32.mxu0 0.0
      %1579 = vmatmul.mubr.f32.gmra.mrb[0].mxu0 %v519
      %v1580 = vpop.f32.mrb[0].mxu0
      %v1581 = vadd.f32 0.0, %v1580
      %v1582 = vpop.f32.mrb[0].mxu0
      %1583 = vmatprep.mubr.f32.mxu0 0.0
      %1584 = vmatmul.mubr.f32.gmra.mrb[0].mxu0 %v919
      %v1585 = vpop.f32.mrb[0].mxu0
      %v1586 = vadd.f32 0.0, %v1585
      %v1587 = vpop.f32.mrb[0].mxu0
      %1588 = vmatprep.mubr.f32.mxu0 0.0
      %1589 = vmatmul.mubr.f32.gmra.mrb[0].mxu0 %v922
      %v1590 = vpop.f32.mrb[0].mxu0
      %v1591 = vadd.f32 0.0, %v1590
      %v1592 = vpop.f32.mrb[0].mxu0
      %1593 = vmatprep.mubr.f32.mxu0 0.0
      %1594 = vmatmul.mubr.f32.gmra.mrb[0].mxu0 %v1454
      %v1595 = vpop.f32.mrb[0].mxu0
      %v1596 = vadd.f32 0.0, %v1595
      %v1597 = vpop.f32.mrb[0].mxu0
      %1598 = vmatprep.mubr.f32.mxu0 0.0
      %1599 = vmatmul.mubr.f32.gmra.mrb[0].mxu0 %v1457
      %v1600 = vpop.f32.mrb[0].mxu0
      %v1601 = vadd.f32 0.0, %v1600
      %v1602 = vpop.f32.mrb[0].mxu0
      %1603 = vdwg.mxu0
      %v1604 = vadd.f32 %v1428, %v1526
      %v1605 = vadd.f32 %v1429, %v1531
      %v1606 = vadd.f32 %v1430, %v1536
      %v1607 = vadd.f32 %v1431, %v1541
      %v1608 = vadd.f32 %v1432, %v1546
      %v1609 = vadd.f32 %v1433, %v1551
      %v1610 = vadd.f32 %v1434, %v1556
      %v1611 = vadd.f32 %v1435, %v1561
      %v1612 = vadd.f32 %v1436, %v1566
      %v1613 = vadd.f32 %v1437, %v1571
      %v1614 = vadd.f32 %v1438, %v1576
      %v1615 = vadd.f32 %v1439, %v1581
      %v1616 = vadd.f32 %v1440, %v1586
      %v1617 = vadd.f32 %v1441, %v1591
      %v1618 = vadd.f32 %v1442, %v1596
      %v1619 = vadd.f32 %v1443, %v1601
      %v1621 = vrot.slane %v226, 1
      %v1622 = vrot.slane %v227, 1
      %v1623 = vsel %vm261, %v1621, %v1622
      %v1624 = vrot.slane %v228, 1
      %v1625 = vsel %vm261, %v1622, %v1624
      %s1626 = scalar_lea.vmem %s1, 448
      %v1627 = vld [vmem:[%s1626] sm:$0xff]
      %v1628 = vld [vmem:[%s1626 + $0x8] sm:$0xff]
      %v1629 = vld [vmem:[%s1626 + $0x10] sm:$0xff]
      %v1630 = vld [vmem:[%s1626 + $0x18] sm:$0xff]
      %v1631 = vld [vmem:[%s1626 + $0x20] sm:$0xff]
      %v1632 = vld [vmem:[%s1626 + $0x28] sm:$0xff]
      %v1633 = vld [vmem:[%s1626 + $0x30] sm:$0xff]
      %v1634 = vld [vmem:[%s1626 + $0x38] sm:$0xff]
      %v1635 = vsel %vm311, %v1623, 0
      %v1637 = vsel %vm311, %v1625, 0
      %1639 = vmatprep.subr.mxu0 0.0
      %1640 = vmatpush1.msra.mxu0 %v1627
      %1641 = vmatprep.subr.mxu0 0.0
      %1642 = vmatpush1.msra.mxu0 %v1628
      %1643 = vmatprep.subr.mxu0 0.0
      %1644 = vmatpush1.msra.mxu0 %v1629
      %1645 = vmatprep.subr.mxu0 0.0
      %1646 = vmatpush1.msra.mxu0 %v1630
      %1647 = vmatprep.subr.mxu0 0.0
      %1648 = vmatpush1.msra.mxu0 %v1631
      %1649 = vmatprep.subr.mxu0 0.0
      %1650 = vmatpush1.msra.mxu0 %v1632
      %1651 = vmatprep.subr.mxu0 0.0
      %1652 = vmatpush1.msra.mxu0 %v1633
      %1653 = vmatprep.subr.mxu0 0.0
      %1654 = vmatpush1.msra.mxu0 %v1634
      %1655 = vmatprep.subr.mxu0 0.0
      %1656 = vmatpush1.msra.mxu0 0.0
      %1657 = vmatprep.subr.mxu0 0.0
      %1658 = vmatpush1.msra.mxu0 0.0
      %1659 = vmatprep.subr.mxu0 0.0
      %1660 = vmatpush1.msra.mxu0 0.0
      %1661 = vmatprep.subr.mxu0 0.0
      %1662 = vmatpush1.msra.mxu0 0.0
      %1663 = vmatprep.subr.mxu0 0.0
      %1664 = vmatpush1.msra.mxu0 0.0
      %1665 = vmatprep.subr.mxu0 0.0
      %1666 = vmatpush1.msra.mxu0 0.0
      %1667 = vmatprep.subr.mxu0 0.0
      %1668 = vmatpush1.msra.mxu0 0.0
      %1669 = vmatprep.subr.mxu0 0.0
      %1670 = vmatpush1.msra.mxu0 0.0
      %1671 = vmatprep.subr.mxu0 0.0
      %1672 = vmatpush1.msra.mxu0 0.0
      %1673 = vmatprep.subr.mxu0 0.0
      %1674 = vmatpush1.msra.mxu0 0.0
      %1675 = vmatprep.subr.mxu0 0.0
      %1676 = vmatpush1.msra.mxu0 0.0
      %1677 = vmatprep.subr.mxu0 0.0
      %1678 = vmatpush1.msra.mxu0 0.0
      %1679 = vmatprep.subr.mxu0 0.0
      %1680 = vmatpush1.msra.mxu0 0.0
      %1681 = vmatprep.subr.mxu0 0.0
      %1682 = vmatpush1.msra.mxu0 0.0
      %1683 = vmatprep.subr.mxu0 0.0
      %1684 = vmatpush1.msra.mxu0 0.0
      %1685 = vmatprep.subr.mxu0 0.0
      %1686 = vmatpush1.msra.mxu0 0.0
      %1687 = vmatprep.subr.mxu0 0.0
      %1688 = vmatpush1.msra.mxu0 0.0
      %1689 = vmatprep.subr.mxu0 0.0
      %1690 = vmatpush1.msra.mxu0 0.0
      %1691 = vmatprep.subr.mxu0 0.0
      %1692 = vmatpush1.msra.mxu0 0.0
      %1693 = vmatprep.subr.mxu0 0.0
      %1694 = vmatpush1.msra.mxu0 0.0
      %1695 = vmatprep.subr.mxu0 0.0
      %1696 = vmatpush1.msra.mxu0 0.0
      %1697 = vmatprep.subr.mxu0 0.0
      %1698 = vmatpush1.msra.mxu0 0.0
      %1699 = vmatprep.subr.mxu0 0.0
      %1700 = vmatpush1.msra.mxu0 0.0
      %1701 = vmatprep.subr.mxu0 0.0
      %1702 = vmatpush1.msra.mxu0 0.0
      %1703 = vmatprep.mubr.f32.mxu0 0.0
      %1704 = vmatmul.mubr.f32.gmra.mrb[0].mxu0 %v320
      %v1705 = vpop.f32.mrb[0].mxu0
      %v1706 = vadd.f32 0.0, %v1705
      %v1707 = vpop.f32.mrb[0].mxu0
      %1708 = vmatprep.mubr.f32.mxu0 0.0
      %1709 = vmatmul.mubr.f32.gmra.mrb[0].mxu0 %v322
      %v1710 = vpop.f32.mrb[0].mxu0
      %v1711 = vadd.f32 0.0, %v1710
      %v1712 = vpop.f32.mrb[0].mxu0
      %1713 = vmatprep.mubr.f32.mxu0 0.0
      %1714 = vmatmul.mubr.f32.gmra.mrb[0].mxu0 %v324
      %v1715 = vpop.f32.mrb[0].mxu0
      %v1716 = vadd.f32 0.0, %v1715
      %v1717 = vpop.f32.mrb[0].mxu0
      %1718 = vmatprep.mubr.f32.mxu0 0.0
      %1719 = vmatmul.mubr.f32.gmra.mrb[0].mxu0 %v326
      %v1720 = vpop.f32.mrb[0].mxu0
      %v1721 = vadd.f32 0.0, %v1720
      %v1722 = vpop.f32.mrb[0].mxu0
      %1723 = vmatprep.mubr.f32.mxu0 0.0
      %1724 = vmatmul.mubr.f32.gmra.mrb[0].mxu0 %v328
      %v1725 = vpop.f32.mrb[0].mxu0
      %v1726 = vadd.f32 0.0, %v1725
      %v1727 = vpop.f32.mrb[0].mxu0
      %1728 = vmatprep.mubr.f32.mxu0 0.0
      %1729 = vmatmul.mubr.f32.gmra.mrb[0].mxu0 %v330
      %v1730 = vpop.f32.mrb[0].mxu0
      %v1731 = vadd.f32 0.0, %v1730
      %v1732 = vpop.f32.mrb[0].mxu0
      %1733 = vmatprep.mubr.f32.mxu0 0.0
      %1734 = vmatmul.mubr.f32.gmra.mrb[0].mxu0 %v332
      %v1735 = vpop.f32.mrb[0].mxu0
      %v1736 = vadd.f32 0.0, %v1735
      %v1737 = vpop.f32.mrb[0].mxu0
      %1738 = vmatprep.mubr.f32.mxu0 0.0
      %1739 = vmatmul.mubr.f32.gmra.mrb[0].mxu0 %v334
      %v1740 = vpop.f32.mrb[0].mxu0
      %v1741 = vadd.f32 0.0, %v1740
      %v1742 = vpop.f32.mrb[0].mxu0
      %1743 = vmatprep.mubr.f32.mxu0 0.0
      %1744 = vmatmul.mubr.f32.gmra.mrb[0].mxu0 %v336
      %v1745 = vpop.f32.mrb[0].mxu0
      %v1746 = vadd.f32 0.0, %v1745
      %v1747 = vpop.f32.mrb[0].mxu0
      %1748 = vmatprep.mubr.f32.mxu0 0.0
      %1749 = vmatmul.mubr.f32.gmra.mrb[0].mxu0 %v338
      %v1750 = vpop.f32.mrb[0].mxu0
      %v1751 = vadd.f32 0.0, %v1750
      %v1752 = vpop.f32.mrb[0].mxu0
      %1753 = vmatprep.mubr.f32.mxu0 0.0
      %1754 = vmatmul.mubr.f32.gmra.mrb[0].mxu0 %v340
      %v1755 = vpop.f32.mrb[0].mxu0
      %v1756 = vadd.f32 0.0, %v1755
      %v1757 = vpop.f32.mrb[0].mxu0
      %1758 = vmatprep.mubr.f32.mxu0 0.0
      %1759 = vmatmul.mubr.f32.gmra.mrb[0].mxu0 %v342
      %v1760 = vpop.f32.mrb[0].mxu0
      %v1761 = vadd.f32 0.0, %v1760
      %v1762 = vpop.f32.mrb[0].mxu0
      %1763 = vmatprep.mubr.f32.mxu0 0.0
      %1764 = vmatmul.mubr.f32.gmra.mrb[0].mxu0 %v1100
      %v1765 = vpop.f32.mrb[0].mxu0
      %v1766 = vadd.f32 0.0, %v1765
      %v1767 = vpop.f32.mrb[0].mxu0
      %1768 = vmatprep.mubr.f32.mxu0 0.0
      %1769 = vmatmul.mubr.f32.gmra.mrb[0].mxu0 %v1102
      %v1770 = vpop.f32.mrb[0].mxu0
      %v1771 = vadd.f32 0.0, %v1770
      %v1772 = vpop.f32.mrb[0].mxu0
      %1773 = vmatprep.mubr.f32.mxu0 0.0
      %1774 = vmatmul.mubr.f32.gmra.mrb[0].mxu0 %v1635
      %v1775 = vpop.f32.mrb[0].mxu0
      %v1776 = vadd.f32 0.0, %v1775
      %v1777 = vpop.f32.mrb[0].mxu0
      %1778 = vmatprep.mubr.f32.mxu0 0.0
      %1779 = vmatmul.mubr.f32.gmra.mrb[0].mxu0 %v1637
      %v1780 = vpop.f32.mrb[0].mxu0
      %v1781 = vadd.f32 0.0, %v1780
      %v1782 = vpop.f32.mrb[0].mxu0
      %1783 = vdwg.mxu0
      %v1784 = vadd.f32 %v1604, %v1706
      %v1785 = vadd.f32 %v1605, %v1711
      %v1786 = vadd.f32 %v1606, %v1716
      %v1787 = vadd.f32 %v1607, %v1721
      %v1788 = vadd.f32 %v1608, %v1726
      %v1789 = vadd.f32 %v1609, %v1731
      %v1790 = vadd.f32 %v1610, %v1736
      %v1791 = vadd.f32 %v1611, %v1741
      %v1792 = vadd.f32 %v1612, %v1746
      %v1793 = vadd.f32 %v1613, %v1751
      %v1794 = vadd.f32 %v1614, %v1756
      %v1795 = vadd.f32 %v1615, %v1761
      %v1796 = vadd.f32 %v1616, %v1766
      %v1797 = vadd.f32 %v1617, %v1771
      %v1798 = vadd.f32 %v1618, %v1776
      %v1799 = vadd.f32 %v1619, %v1781
      %v1800 = vrot.slane %v226, 2
      %v1801 = vrot.slane %v227, 2
      %v1802 = vsel %vm666, %v1800, %v1801
      %v1803 = vrot.slane %v228, 2
      %v1804 = vsel %vm666, %v1801, %v1803
      %s1805 = scalar_lea.vmem %s1, 512
      %v1806 = vld [vmem:[%s1805] sm:$0xff]
      %v1807 = vld [vmem:[%s1805 + $0x8] sm:$0xff]
      %v1808 = vld [vmem:[%s1805 + $0x10] sm:$0xff]
      %v1809 = vld [vmem:[%s1805 + $0x18] sm:$0xff]
      %v1810 = vld [vmem:[%s1805 + $0x20] sm:$0xff]
      %v1811 = vld [vmem:[%s1805 + $0x28] sm:$0xff]
      %v1812 = vld [vmem:[%s1805 + $0x30] sm:$0xff]
      %v1813 = vld [vmem:[%s1805 + $0x38] sm:$0xff]
      %v1814 = vsel %vm311, %v1802, 0
      %v1816 = vsel %vm311, %v1804, 0
      %1818 = vmatprep.subr.mxu0 0.0
      %1819 = vmatpush1.msra.mxu0 %v1806
      %1820 = vmatprep.subr.mxu0 0.0
      %1821 = vmatpush1.msra.mxu0 %v1807
      %1822 = vmatprep.subr.mxu0 0.0
      %1823 = vmatpush1.msra.mxu0 %v1808
      %1824 = vmatprep.subr.mxu0 0.0
      %1825 = vmatpush1.msra.mxu0 %v1809
      %1826 = vmatprep.subr.mxu0 0.0
      %1827 = vmatpush1.msra.mxu0 %v1810
      %1828 = vmatprep.subr.mxu0 0.0
      %1829 = vmatpush1.msra.mxu0 %v1811
      %1830 = vmatprep.subr.mxu0 0.0
      %1831 = vmatpush1.msra.mxu0 %v1812
      %1832 = vmatprep.subr.mxu0 0.0
      %1833 = vmatpush1.msra.mxu0 %v1813
      %1834 = vmatprep.subr.mxu0 0.0
      %1835 = vmatpush1.msra.mxu0 0.0
      %1836 = vmatprep.subr.mxu0 0.0
      %1837 = vmatpush1.msra.mxu0 0.0
      %1838 = vmatprep.subr.mxu0 0.0
      %1839 = vmatpush1.msra.mxu0 0.0
      %1840 = vmatprep.subr.mxu0 0.0
      %1841 = vmatpush1.msra.mxu0 0.0
      %1842 = vmatprep.subr.mxu0 0.0
      %1843 = vmatpush1.msra.mxu0 0.0
      %1844 = vmatprep.subr.mxu0 0.0
      %1845 = vmatpush1.msra.mxu0 0.0
      %1846 = vmatprep.subr.mxu0 0.0
      %1847 = vmatpush1.msra.mxu0 0.0
      %1848 = vmatprep.subr.mxu0 0.0
      %1849 = vmatpush1.msra.mxu0 0.0
      %1850 = vmatprep.subr.mxu0 0.0
      %1851 = vmatpush1.msra.mxu0 0.0
      %1852 = vmatprep.subr.mxu0 0.0
      %1853 = vmatpush1.msra.mxu0 0.0
      %1854 = vmatprep.subr.mxu0 0.0
      %1855 = vmatpush1.msra.mxu0 0.0
      %1856 = vmatprep.subr.mxu0 0.0
      %1857 = vmatpush1.msra.mxu0 0.0
      %1858 = vmatprep.subr.mxu0 0.0
      %1859 = vmatpush1.msra.mxu0 0.0
      %1860 = vmatprep.subr.mxu0 0.0
      %1861 = vmatpush1.msra.mxu0 0.0
      %1862 = vmatprep.subr.mxu0 0.0
      %1863 = vmatpush1.msra.mxu0 0.0
      %1864 = vmatprep.subr.mxu0 0.0
      %1865 = vmatpush1.msra.mxu0 0.0
      %1866 = vmatprep.subr.mxu0 0.0
      %1867 = vmatpush1.msra.mxu0 0.0
      %1868 = vmatprep.subr.mxu0 0.0
      %1869 = vmatpush1.msra.mxu0 0.0
      %1870 = vmatprep.subr.mxu0 0.0
      %1871 = vmatpush1.msra.mxu0 0.0
      %1872 = vmatprep.subr.mxu0 0.0
      %1873 = vmatpush1.msra.mxu0 0.0
      %1874 = vmatprep.subr.mxu0 0.0
      %1875 = vmatpush1.msra.mxu0 0.0
      %1876 = vmatprep.subr.mxu0 0.0
      %1877 = vmatpush1.msra.mxu0 0.0
      %1878 = vmatprep.subr.mxu0 0.0
      %1879 = vmatpush1.msra.mxu0 0.0
      %1880 = vmatprep.subr.mxu0 0.0
      %1881 = vmatpush1.msra.mxu0 0.0
      %1882 = vmatprep.mubr.f32.mxu0 0.0
      %1883 = vmatmul.mubr.f32.gmra.mrb[0].mxu0 %v724
      %v1884 = vpop.f32.mrb[0].mxu0
      %v1885 = vadd.f32 0.0, %v1884
      %v1886 = vpop.f32.mrb[0].mxu0
      %1887 = vmatprep.mubr.f32.mxu0 0.0
      %1888 = vmatmul.mubr.f32.gmra.mrb[0].mxu0 %v726
      %v1889 = vpop.f32.mrb[0].mxu0
      %v1890 = vadd.f32 0.0, %v1889
      %v1891 = vpop.f32.mrb[0].mxu0
      %1892 = vmatprep.mubr.f32.mxu0 0.0
      %1893 = vmatmul.mubr.f32.gmra.mrb[0].mxu0 %v728
      %v1894 = vpop.f32.mrb[0].mxu0
      %v1895 = vadd.f32 0.0, %v1894
      %v1896 = vpop.f32.mrb[0].mxu0
      %1897 = vmatprep.mubr.f32.mxu0 0.0
      %1898 = vmatmul.mubr.f32.gmra.mrb[0].mxu0 %v730
      %v1899 = vpop.f32.mrb[0].mxu0
      %v1900 = vadd.f32 0.0, %v1899
      %v1901 = vpop.f32.mrb[0].mxu0
      %1902 = vmatprep.mubr.f32.mxu0 0.0
      %1903 = vmatmul.mubr.f32.gmra.mrb[0].mxu0 %v732
      %v1904 = vpop.f32.mrb[0].mxu0
      %v1905 = vadd.f32 0.0, %v1904
      %v1906 = vpop.f32.mrb[0].mxu0
      %1907 = vmatprep.mubr.f32.mxu0 0.0
      %1908 = vmatmul.mubr.f32.gmra.mrb[0].mxu0 %v734
      %v1909 = vpop.f32.mrb[0].mxu0
      %v1910 = vadd.f32 0.0, %v1909
      %v1911 = vpop.f32.mrb[0].mxu0
      %1912 = vmatprep.mubr.f32.mxu0 0.0
      %1913 = vmatmul.mubr.f32.gmra.mrb[0].mxu0 %v736
      %v1914 = vpop.f32.mrb[0].mxu0
      %v1915 = vadd.f32 0.0, %v1914
      %v1916 = vpop.f32.mrb[0].mxu0
      %1917 = vmatprep.mubr.f32.mxu0 0.0
      %1918 = vmatmul.mubr.f32.gmra.mrb[0].mxu0 %v738
      %v1919 = vpop.f32.mrb[0].mxu0
      %v1920 = vadd.f32 0.0, %v1919
      %v1921 = vpop.f32.mrb[0].mxu0
      %1922 = vmatprep.mubr.f32.mxu0 0.0
      %1923 = vmatmul.mubr.f32.gmra.mrb[0].mxu0 %v740
      %v1924 = vpop.f32.mrb[0].mxu0
      %v1925 = vadd.f32 0.0, %v1924
      %v1926 = vpop.f32.mrb[0].mxu0
      %1927 = vmatprep.mubr.f32.mxu0 0.0
      %1928 = vmatmul.mubr.f32.gmra.mrb[0].mxu0 %v742
      %v1929 = vpop.f32.mrb[0].mxu0
      %v1930 = vadd.f32 0.0, %v1929
      %v1931 = vpop.f32.mrb[0].mxu0
      %1932 = vmatprep.mubr.f32.mxu0 0.0
      %1933 = vmatmul.mubr.f32.gmra.mrb[0].mxu0 %v744
      %v1934 = vpop.f32.mrb[0].mxu0
      %v1935 = vadd.f32 0.0, %v1934
      %v1936 = vpop.f32.mrb[0].mxu0
      %1937 = vmatprep.mubr.f32.mxu0 0.0
      %1938 = vmatmul.mubr.f32.gmra.mrb[0].mxu0 %v746
      %v1939 = vpop.f32.mrb[0].mxu0
      %v1940 = vadd.f32 0.0, %v1939
      %v1941 = vpop.f32.mrb[0].mxu0
      %1942 = vmatprep.mubr.f32.mxu0 0.0
      %1943 = vmatmul.mubr.f32.gmra.mrb[0].mxu0 %v1279
      %v1944 = vpop.f32.mrb[0].mxu0
      %v1945 = vadd.f32 0.0, %v1944
      %v1946 = vpop.f32.mrb[0].mxu0
      %1947 = vmatprep.mubr.f32.mxu0 0.0
      %1948 = vmatmul.mubr.f32.gmra.mrb[0].mxu0 %v1281
      %v1949 = vpop.f32.mrb[0].mxu0
      %v1950 = vadd.f32 0.0, %v1949
      %v1951 = vpop.f32.mrb[0].mxu0
      %1952 = vmatprep.mubr.f32.mxu0 0.0
      %1953 = vmatmul.mubr.f32.gmra.mrb[0].mxu0 %v1814
      %v1954 = vpop.f32.mrb[0].mxu0
      %v1955 = vadd.f32 0.0, %v1954
      %v1956 = vpop.f32.mrb[0].mxu0
      %1957 = vmatprep.mubr.f32.mxu0 0.0
      %1958 = vmatmul.mubr.f32.gmra.mrb[0].mxu0 %v1816
      %v1959 = vpop.f32.mrb[0].mxu0
      %v1960 = vadd.f32 0.0, %v1959
      %v1961 = vpop.f32.mrb[0].mxu0
      %1962 = vdwg.mxu0
      %v1963 = vadd.f32 %v1784, %v1885
      %v1964 = vadd.f32 %v1785, %v1890
      %v1965 = vadd.f32 %v1786, %v1895
      %v1966 = vadd.f32 %v1787, %v1900
      %v1967 = vadd.f32 %v1788, %v1905
      %v1968 = vadd.f32 %v1789, %v1910
      %v1969 = vadd.f32 %v1790, %v1915
      %v1970 = vadd.f32 %v1791, %v1920
      %v1971 = vadd.f32 %v1792, %v1925
      %v1972 = vadd.f32 %v1793, %v1930
      %v1973 = vadd.f32 %v1794, %v1935
      %v1974 = vadd.f32 %v1795, %v1940
      %v1975 = vadd.f32 %v1796, %v1945
      %v1976 = vadd.f32 %v1797, %v1950
      %v1977 = vadd.f32 %v1798, %v1955
      %v1978 = vadd.f32 %v1799, %v1960
      %v1979 = vld [vmem:[%s2] sm:$0x1]
      %v1981 = vlaneseq
      %v1982 = vshrl.u32 %v1981, 7
      %v1983 = vsub.s32 0, %v1982
      %v1984 = vrot.slane %v1979, %v1983
      %v1986 = vadd.f32 %v1963, %v1984
      %v1987 = vadd.f32 %v1964, %v1984
      %v1988 = vadd.f32 %v1965, %v1984
      %v1989 = vadd.f32 %v1966, %v1984
      %v1990 = vadd.f32 %v1967, %v1984
      %v1991 = vadd.f32 %v1968, %v1984
      %v1992 = vadd.f32 %v1969, %v1984
      %v1993 = vadd.f32 %v1970, %v1984
      %v1994 = vadd.f32 %v1971, %v1984
      %v1995 = vadd.f32 %v1972, %v1984
      %v1996 = vadd.f32 %v1973, %v1984
      %v1997 = vadd.f32 %v1974, %v1984
      %v1998 = vadd.f32 %v1975, %v1984
      %v1999 = vadd.f32 %v1976, %v1984
      %v2000 = vadd.f32 %v1977, %v1984
      %v2001 = vadd.f32 %v1978, %v1984
      %v2002 = vmax.f32 %v1986, 0.0
      %v2003 = vmax.f32 %v1987, 0.0
      %v2004 = vmax.f32 %v1988, 0.0
      %v2005 = vmax.f32 %v1989, 0.0
      %v2006 = vmax.f32 %v1990, 0.0
      %v2007 = vmax.f32 %v1991, 0.0
      %v2008 = vmax.f32 %v1992, 0.0
      %v2009 = vmax.f32 %v1993, 0.0
      %v2010 = vmax.f32 %v1994, 0.0
      %v2011 = vmax.f32 %v1995, 0.0
      %v2012 = vmax.f32 %v1996, 0.0
      %v2013 = vmax.f32 %v1997, 0.0
      %v2014 = vmax.f32 %v1998, 0.0
      %v2015 = vmax.f32 %v1999, 0.0
      %v2016 = vmax.f32 %v2000, 0.0
      %v2017 = vmax.f32 %v2001, 0.0
      %vm2018 = vcmask 785408
      %2019 = vst.msk [vmem:[%s194] sm:$0xff] %vm2018, %v2002
      %2020 = vst.msk [vmem:[%s194 + $0x8] sm:$0xff] %vm2018, %v2003
      %2021 = vst.msk [vmem:[%s194 + $0x10] sm:$0xff] %vm2018, %v2004
      %2022 = vst.msk [vmem:[%s194 + $0x18] sm:$0xff] %vm2018, %v2005
      %2023 = vst.msk [vmem:[%s194 + $0x20] sm:$0xff] %vm2018, %v2006
      %2024 = vst.msk [vmem:[%s194 + $0x28] sm:$0xff] %vm2018, %v2007
      %2025 = vst.msk [vmem:[%s194 + $0x30] sm:$0xff] %vm2018, %v2008
      %2026 = vst.msk [vmem:[%s194 + $0x38] sm:$0xff] %vm2018, %v2009
      %2027 = vst.msk [vmem:[%s194 + $0x40] sm:$0xff] %vm2018, %v2010
      %2028 = vst.msk [vmem:[%s194 + $0x48] sm:$0xff] %vm2018, %v2011
      %2029 = vst.msk [vmem:[%s194 + $0x50] sm:$0xff] %vm2018, %v2012
      %2030 = vst.msk [vmem:[%s194 + $0x58] sm:$0xff] %vm2018, %v2013
      %2031 = vst.msk [vmem:[%s194 + $0x60] sm:$0xff] %vm2018, %v2014
      %2032 = vst.msk [vmem:[%s194 + $0x68] sm:$0xff] %vm2018, %v2015
      %2033 = vst.msk [vmem:[%s194 + $0x70] sm:$0xff] %vm2018, %v2016
      %2034 = vst.msk [vmem:[%s194 + $0x78] sm:$0xff] %vm2018, %v2017
      %s2035 = smul.u32 8, %s19
      %p2036 = scmp.lt.s32.totalorder %s18, 1
      %s2037 = scalar_select %p2036, %s18, 1
      %p2038 = scmp.lt.s32.totalorder %s2035, 15
      %s2039 = scalar_select %p2038, %s2035, 15
      %s2040 = smul.addr %s2039, 2
      %s2041 = smul.addr %s2037, 32
      %s2042 = sadd.s32 %s2040, %s2041
      %s2043 = smul.addr %s2042, 8
      %s2044 = scalar_lea.vmem %s3, %s2043
      // Predicated region
      $region33: #{inception_b_forward.4} parent=31 // pred_check
        %p2045 = pneg %p114
      $region34: #{inception_b_forward.4} parent=31 // pred_check_branch
        %2047 = sbr.rel (%p2045) target = $region36
      $region35: #{inception_b_forward.4} parent=31 // pred_region
        %s2048 = smul.u32 8, %s19
      $region36: #{inception_b_forward.4} parent=31 // pred_fallthru
        _
    $region32: #{inception_b_forward.4} parent=5 // pred_fallthru
      _
    %p2049 = scmp.le.s32.totalorder 2, %s9
    // Predicated region
    $region37: #{inception_b_forward.4} parent=5 // pred_check
      %p2050 = pneg %p2049
    $region38: #{inception_b_forward.4} parent=5 // pred_check_branch
      %2052 = sbr.rel (%p2050) target = $region40
    $region39: #{inception_b_forward.4} parent=5 // pred_region
      %s2053 = ssub.s32 %s9, 2
      // Predicated region
      $region41: #{inception_b_forward.4} parent=39 // pred_check
        %p2054 = pneg %p120
      $region42: #{inception_b_forward.4} parent=39 // pred_check_branch
        %2056 = sbr.rel (%p2054) target = $region44
      $region43: #{inception_b_forward.4} parent=39 // pred_region
        %s2057 = smul.u32 8, %s21
        %p2058 = scmp.lt.s32.totalorder %s20, 1
        %s2059 = scalar_select %p2058, %s20, 1
        %p2060 = scmp.lt.s32.totalorder %s2057, 15
        %s2061 = scalar_select %p2060, %s2057, 15
        %s2062 = smul.addr %s2061, 2
        %s2063 = smul.addr %s2059, 32
        %s2064 = sadd.s32 %s2062, %s2063
        %s2065 = smul.addr %s2064, 8
        %s2066 = scalar_lea.vmem %s3, %s2065
      $region44: #{inception_b_forward.4} parent=39 // pred_fallthru
        _
    $region40: #{inception_b_forward.4} parent=5 // pred_fallthru
      _
  $region6: #{inception_b_forward.4} parent=0 // loop_footer
    %s13 = sadd.s32 1, %s9
  $region7: #{inception_b_forward.4} parent=0 // loop_footer_branch
    %8 = sbr.rel target = $region3
  $region8: #{inception_b_forward.4} parent=0 // loop_exit
    _

// kernel: inception_b_forward.5
$region0: #{inception_b_forward.5}
  #allocation0 [shape = 'u32[]', space=smem, size = 0x4, offset = 0x4, fixed_abs, tag = 'smem constant byte address 0x4 - core index']
  #allocation1 [shape = 'u32[144,128]{1,0:T(1,128)}', space=vmem, size = 0x12000, scoped, tag = 'internal scratch']
  %s0 = inlined_call_operand.vmem [shape: f32[2,49,864], index: 0, kind: input, shape index: {}]
  %s1 = inlined_call_operand.vmem [shape: f32[864,96], index: 1, kind: input, shape index: {}]
  %s2 = inlined_call_operand.vmem [shape: f32[1,96], index: 2, kind: input, shape index: {}]
  %s3 = inlined_call_operand.vmem [shape: f32[2,49,384], index: 3, kind: input, shape index: {}]
  %s4 = inlined_call_operand.vmem [shape: f32[2,49,4], index: 4, kind: input, shape index: {}]
  %s5 = inlined_call_operand.vmem [shape: f32[2,49,484], index: 5, kind: output, shape index: {}]
  %s6 = sld [smem:[#allocation0]]
  $region53: #{inception_b_forward.5} parent=0
    _
  %s8 = ssub.s32 1, %s6
  %s9 = scalar_select 0, %s8, %s6
  loop: start=0, step=1, limit=4
  $region2: #{inception_b_forward.5} parent=0 // loop_pre_header
    _
  $region3: #{inception_b_forward.5} parent=0 // loop_header
    %s11 = sphi 0, %s15
    %p12 = scmp.ge.s32.totalorder %s11, 4
    %s21 = sphi 0, %s23
    %s24 = sphi 0, %s21
    %s25 = sphi 0, %s24
    %s41 = sphi 0, %s25
    %s45 = sphi 0, %s45
    %s47 = sphi 0, %s45
    %s48 = sphi 0, %s47
    %s62 = sphi 0, %s48
    %s66 = sphi 0, %s66
    %s68 = sphi 0, %s66
    %s69 = sphi 0, %s68
    %s83 = sphi 0, %s69
    %s89 = sphi 0, %s91
    %s92 = sphi 0, %s89
    %s93 = sphi 0, %s92
    %s109 = sphi 0, %s93
    %s115 = sphi 0, %s117
    %s118 = sphi 0, %s115
    %s119 = sphi 0, %s118
    %s135 = sphi 0, %s119
    %s141 = sphi 0, %s143
    %s144 = sphi 0, %s141
    %s145 = sphi 0, %s144
    %s161 = sphi 0, %s145
  $region4: #{inception_b_forward.5} parent=0 // loop_header_branch
    %14 = sbr.rel (%p12) target = $region8
  $region5: #{inception_b_forward.5} parent=0 // loop_body
    %s16 = ssub.s32 %s11, 1
    %s17 = ssub.s32 %s11, 2
    %s18 = sadd.s32 %s11, 1
    %s19 = ssub.s32 %s11, %s18
    %p20 = scmp.eq.s32.totalorder %s19, 0
    %s22 = sadd.s32 %s21, 1
    %s23 = scalar_select %p20, %s21, %s22
    %p26 = pneg %p20
    %p27 = scmp.eq.s32.totalorder %s11, 1
    %p28 = por %p26, %p27
    %p29 = scmp.ne.s32.totalorder %s21, %s24
    %p30 = scmp.eq.s32.totalorder %s11, 0
    %p31 = por %p29, %p30
    %p32 = scmp.ne.s32.totalorder %s21, %s24
    %p33 = scmp.eq.s32.totalorder %s16, 1
    %p34 = por %p32, %p33
    %p35 = scmp.ne.s32.totalorder %s24, %s25
    %p36 = scmp.eq.s32.totalorder %s16, 0
    %p37 = por %p35, %p36
    %p38 = scmp.ne.s32.totalorder %s24, %s25
    %p39 = scmp.eq.s32.totalorder %s17, 1
    %p40 = por %p38, %p39
    %p42 = scmp.ne.s32.totalorder %s25, %s41
    %p43 = scmp.eq.s32.totalorder %s17, 0
    %p44 = por %p42, %p43
    %s46 = sadd.s32 %s45, 1
    %p49 = scmp.eq.s32.totalorder %s11, 1
    %p50 = scmp.ne.s32.totalorder %s45, %s47
    %p51 = scmp.eq.s32.totalorder %s11, 0
    %p52 = por %p50, %p51
    %p53 = scmp.ne.s32.totalorder %s45, %s47
    %p54 = scmp.eq.s32.totalorder %s16, 1
    %p55 = por %p53, %p54
    %p56 = scmp.ne.s32.totalorder %s47, %s48
    %p57 = scmp.eq.s32.totalorder %s16, 0
    %p58 = por %p56, %p57
    %p59 = scmp.ne.s32.totalorder %s47, %s48
    %p60 = scmp.eq.s32.totalorder %s17, 1
    %p61 = por %p59, %p60
    %p63 = scmp.ne.s32.totalorder %s48, %s62
    %p64 = scmp.eq.s32.totalorder %s17, 0
    %p65 = por %p63, %p64
    %s67 = sadd.s32 %s66, 1
    %p70 = scmp.eq.s32.totalorder %s11, 1
    %p71 = scmp.ne.s32.totalorder %s66, %s68
    %p72 = scmp.eq.s32.totalorder %s11, 0
    %p73 = por %p71, %p72
    %p74 = scmp.ne.s32.totalorder %s66, %s68
    %p75 = scmp.eq.s32.totalorder %s16, 1
    %p76 = por %p74, %p75
    %p77 = scmp.ne.s32.totalorder %s68, %s69
    %p78 = scmp.eq.s32.totalorder %s16, 0
    %p79 = por %p77, %p78
    %p80 = scmp.ne.s32.totalorder %s68, %s69
    %p81 = scmp.eq.s32.totalorder %s17, 1
    %p82 = por %p80, %p81
    %p84 = scmp.ne.s32.totalorder %s69, %s83
    %p85 = scmp.eq.s32.totalorder %s17, 0
    %p86 = por %p84, %p85
    %s87 = ssub.s32 %s11, %s18
    %p88 = scmp.eq.s32.totalorder %s87, 0
    %s90 = sadd.s32 %s89, 1
    %s91 = scalar_select %p88, %s89, %s90
    %p94 = pneg %p88
    %p95 = scmp.eq.s32.totalorder %s11, 1
    %p96 = por %p94, %p95
    %p97 = scmp.ne.s32.totalorder %s89, %s92
    %p98 = scmp.eq.s32.totalorder %s11, 0
    %p99 = por %p97, %p98
    %p100 = scmp.ne.s32.totalorder %s89, %s92
    %p101 = scmp.eq.s32.totalorder %s16, 1
    %p102 = por %p100, %p101
    %p103 = scmp.ne.s32.totalorder %s92, %s93
    %p104 = scmp.eq.s32.totalorder %s16, 0
    %p105 = por %p103, %p104
    %p106 = scmp.ne.s32.totalorder %s92, %s93
    %p107 = scmp.eq.s32.totalorder %s17, 1
    %p108 = por %p106, %p107
    %p110 = scmp.ne.s32.totalorder %s93, %s109
    %p111 = scmp.eq.s32.totalorder %s17, 0
    %p112 = por %p110, %p111
    %s113 = ssub.s32 %s11, %s18
    %p114 = scmp.eq.s32.totalorder %s113, 0
    %s116 = sadd.s32 %s115, 1
    %s117 = scalar_select %p114, %s115, %s116
    %p120 = pneg %p114
    %p121 = scmp.eq.s32.totalorder %s11, 1
    %p122 = por %p120, %p121
    %p123 = scmp.ne.s32.totalorder %s115, %s118
    %p124 = scmp.eq.s32.totalorder %s11, 0
    %p125 = por %p123, %p124
    %p126 = scmp.ne.s32.totalorder %s115, %s118
    %p127 = scmp.eq.s32.totalorder %s16, 1
    %p128 = por %p126, %p127
    %p129 = scmp.ne.s32.totalorder %s118, %s119
    %p130 = scmp.eq.s32.totalorder %s16, 0
    %p131 = por %p129, %p130
    %p132 = scmp.ne.s32.totalorder %s118, %s119
    %p133 = scmp.eq.s32.totalorder %s17, 1
    %p134 = por %p132, %p133
    %p136 = scmp.ne.s32.totalorder %s119, %s135
    %p137 = scmp.eq.s32.totalorder %s17, 0
    %p138 = por %p136, %p137
    %s139 = ssub.s32 %s11, %s18
    %p140 = scmp.eq.s32.totalorder %s139, 0
    %s142 = sadd.s32 %s141, 1
    %s143 = scalar_select %p140, %s141, %s142
    %p146 = pneg %p140
    %p147 = scmp.eq.s32.totalorder %s11, 1
    %p148 = por %p146, %p147
    %p149 = scmp.ne.s32.totalorder %s141, %s144
    %p150 = scmp.eq.s32.totalorder %s11, 0
    %p151 = por %p149, %p150
    %p152 = scmp.ne.s32.totalorder %s141, %s144
    %p153 = scmp.eq.s32.totalorder %s16, 1
    %p154 = por %p152, %p153
    %p155 = scmp.ne.s32.totalorder %s144, %s145
    %p156 = scmp.eq.s32.totalorder %s16, 0
    %p157 = por %p155, %p156
    %p158 = scmp.ne.s32.totalorder %s144, %s145
    %p159 = scmp.eq.s32.totalorder %s17, 1
    %p160 = por %p158, %p159
    %p162 = scmp.ne.s32.totalorder %s145, %s161
    %p163 = scmp.eq.s32.totalorder %s17, 0
    %p164 = por %p162, %p163
    %p165 = scmp.le.s32.totalorder 1, %s11
    %p166 = scmp.lt.s32.totalorder %s11, 3
    %p167 = pnand %p165, %p166
    %p168 = pneg %p167
    // Predicated region
    $region9: #{inception_b_forward.5} parent=5 // pred_check
      _
    $region10: #{inception_b_forward.5} parent=5 // pred_check_branch
      %170 = sbr.rel (%p167) target = $region12
    $region11: #{inception_b_forward.5} parent=5 // pred_region
      %s171 = ssub.s32 %s11, 1
      // Predicated region
      $region13: #{inception_b_forward.5} parent=11 // pred_check
        %p172 = pneg %p58
      $region14: #{inception_b_forward.5} parent=11 // pred_check_branch
        %174 = sbr.rel (%p172) target = $region16
      $region15: #{inception_b_forward.5} parent=11 // pred_region
        _
      $region16: #{inception_b_forward.5} parent=11 // pred_fallthru
        _
      // Predicated region
      $region17: #{inception_b_forward.5} parent=11 // pred_check
        %p175 = pneg %p79
      $region18: #{inception_b_forward.5} parent=11 // pred_check_branch
        %177 = sbr.rel (%p175) target = $region20
      $region19: #{inception_b_forward.5} parent=11 // pred_region
        _
      $region20: #{inception_b_forward.5} parent=11 // pred_fallthru
        _
    $region12: #{inception_b_forward.5} parent=5 // pred_fallthru
      _
    %p178 = scmp.lt.s32.totalorder %s11, 2
    // Predicated region
    $region21: #{inception_b_forward.5} parent=5 // pred_check
      %p179 = pneg %p178
    $region22: #{inception_b_forward.5} parent=5 // pred_check_branch
      %181 = sbr.rel (%p179) target = $region24
    $region23: #{inception_b_forward.5} parent=5 // pred_region
      // Predicated region
      $region25: #{inception_b_forward.5} parent=23 // pred_check
        %p182 = pneg %p31
      $region26: #{inception_b_forward.5} parent=23 // pred_check_branch
        %184 = sbr.rel (%p182) target = $region28
      $region27: #{inception_b_forward.5} parent=23 // pred_region
        %p185 = scmp.lt.s32.totalorder %s11, 1
        %s186 = scalar_select %p185, %s11, 1
        %s187 = smul.addr %s186, 49
        %s188 = smul.addr %s187, 8
        %s189 = scalar_lea.vmem %s0, %s188
      $region28: #{inception_b_forward.5} parent=23 // pred_fallthru
        _
      // Predicated region
      $region29: #{inception_b_forward.5} parent=23 // pred_check
        %p190 = pneg %p99
      $region30: #{inception_b_forward.5} parent=23 // pred_check_branch
        %192 = sbr.rel (%p190) target = $region32
      $region31: #{inception_b_forward.5} parent=23 // pred_region
        %p193 = scmp.lt.s32.totalorder %s11, 1
        %s194 = scalar_select %p193, %s11, 1
        %s195 = smul.addr %s194, 21
        %s196 = smul.addr %s195, 8
        %s197 = scalar_lea.vmem %s3, %s196
      $region32: #{inception_b_forward.5} parent=23 // pred_fallthru
        _
      // Predicated region
      $region33: #{inception_b_forward.5} parent=23 // pred_check
        %p198 = pneg %p125
      $region34: #{inception_b_forward.5} parent=23 // pred_check_branch
        %200 = sbr.rel (%p198) target = $region36
      $region35: #{inception_b_forward.5} parent=23 // pred_region
        %p201 = scmp.lt.s32.totalorder %s11, 1
        %s202 = scalar_select %p201, %s11, 1
        %s203 = smul.addr %s202, 7
        %s204 = smul.addr %s203, 8
        %s205 = scalar_lea.vmem %s4, %s204
      $region36: #{inception_b_forward.5} parent=23 // pred_fallthru
        _
    $region24: #{inception_b_forward.5} parent=5 // pred_fallthru
      _
    %p206 = scmp.le.s32.totalorder 1, %s11
    %p207 = scmp.lt.s32.totalorder %s11, 3
    %p208 = pnand %p206, %p207
    %p209 = pneg %p208
    // Predicated region
    $region37: #{inception_b_forward.5} parent=5 // pred_check
      _
    $region38: #{inception_b_forward.5} parent=5 // pred_check_branch
      %211 = sbr.rel (%p208) target = $region40
    $region39: #{inception_b_forward.5} parent=5 // pred_region
      %s212 = ssub.s32 %s11, 1
      %p213 = scmp.lt.s32.totalorder %s16, 1
      %s214 = scalar_select %p213, %s16, 1
      %s215 = smul.addr %s214, 49
      %s216 = smul.addr %s215, 8
      %s217 = scalar_lea.vmem %s0, %s216
      %p218 = pneg %p37
      %p219 = pneg %p34
      %p220 = pneg %p58
      %p221 = pneg %p55
      %p222 = pneg %p79
      %p223 = pneg %p76
      %p224 = scmp.lt.s32.totalorder %s16, 1
      %s225 = scalar_select %p224, %s16, 1
      %s226 = smul.addr %s225, 21
      %s227 = smul.addr %s226, 8
      %s228 = scalar_lea.vmem %s3, %s227
      %p229 = pneg %p105
      %p230 = pneg %p102
      %p231 = scmp.lt.s32.totalorder %s16, 1
      %s232 = scalar_select %p231, %s16, 1
      %s233 = smul.addr %s232, 7
      %s234 = smul.addr %s233, 8
      %s235 = scalar_lea.vmem %s4, %s234
      %p236 = pneg %p131
      %p237 = pneg %p128
      %p238 = pneg %p157
      %p239 = pneg %p154
      %p240 = scmp.lt.s32.totalorder %s16, 1
      %s241 = scalar_select %p240, %s16, 1
      %s242 = smul.addr %s241, 28
      %s243 = smul.addr %s242, 8
      %s244 = scalar_lea.vmem %s5, %s243
      %p245 = scmp.lt.s32.totalorder %s16, 1
      %s246 = scalar_select %p245, %s16, 1
      %s247 = smul.addr %s246, 49
      %s248 = smul.addr %s247, 8
      %s249 = scalar_lea.vmem %s0, %s248
      %p250 = scmp.lt.s32.totalorder %s16, 1
      %s251 = scalar_select %p250, %s16, 1
      %s252 = smul.addr %s251, 21
      %s253 = smul.addr %s252, 8
      %s254 = scalar_lea.vmem %s3, %s253
      %p255 = scmp.lt.s32.totalorder %s16, 1
      %s256 = scalar_select %p255, %s16, 1
      %s257 = smul.addr %s256, 7
      %s258 = smul.addr %s257, 8
      %s259 = scalar_lea.vmem %s4, %s258
      %p260 = scmp.lt.s32.totalorder %s16, 1
      %s261 = scalar_select %p260, %s16, 1
      %s262 = smul.addr %s261, 28
      %s263 = smul.addr %s262, 8
      %s264 = scalar_lea.vmem %s5, %s263
      %v265 = vld [vmem:[%s249] sm:$0xff]
      %v266 = vld [vmem:[%s249 + $0x8] sm:$0xff]
      %v267 = vld [vmem:[%s249 + $0x10] sm:$0xff]
      %v268 = vld [vmem:[%s249 + $0x18] sm:$0xff]
      %v269 = vld [vmem:[%s249 + $0x20] sm:$0xff]
      %v270 = vld [vmem:[%s249 + $0x28] sm:$0xff]
      %v271 = vld [vmem:[%s249 + $0x30] sm:$0xff]
      %v272 = vld [vmem:[%s249 + $0x38] sm:$0xff]
      %v273 = vld [vmem:[%s249 + $0x40] sm:$0xff]
      %v274 = vld [vmem:[%s249 + $0x48] sm:$0xff]
      %v275 = vld [vmem:[%s249 + $0x50] sm:$0xff]
      %v276 = vld [vmem:[%s249 + $0x58] sm:$0xff]
      %v277 = vld [vmem:[%s249 + $0x60] sm:$0xff]
      %v278 = vld [vmem:[%s249 + $0x68] sm:$0xff]
      %v279 = vld [vmem:[%s249 + $0x70] sm:$0xff]
      %v280 = vld [vmem:[%s249 + $0x78] sm:$0xff]
      %v281 = vld [vmem:[%s249 + $0x80] sm:$0xff]
      %v282 = vld [vmem:[%s249 + $0x88] sm:$0xff]
      %v283 = vld [vmem:[%s249 + $0x90] sm:$0xff]
      %v284 = vld [vmem:[%s249 + $0x98] sm:$0xff]
      %v285 = vld [vmem:[%s249 + $0xa0] sm:$0xff]
      %v286 = vld [vmem:[%s249 + $0xa8] sm:$0xff]
      %v287 = vld [vmem:[%s249 + $0xb0] sm:$0xff]
      %v288 = vld [vmem:[%s249 + $0xb8] sm:$0xff]
      %v289 = vld [vmem:[%s249 + $0xc0] sm:$0xff]
      %v290 = vld [vmem:[%s249 + $0xc8] sm:$0xff]
      %v291 = vld [vmem:[%s249 + $0xd0] sm:$0xff]
      %v292 = vld [vmem:[%s249 + $0xd8] sm:$0xff]
      %v293 = vld [vmem:[%s249 + $0xe0] sm:$0xff]
      %v294 = vld [vmem:[%s249 + $0xe8] sm:$0xff]
      %v295 = vld [vmem:[%s249 + $0xf0] sm:$0xff]
      %v296 = vld [vmem:[%s249 + $0xf8] sm:$0xff]
      %v297 = vld [vmem:[%s249 + $0x100] sm:$0xff]
      %v298 = vld [vmem:[%s249 + $0x108] sm:$0xff]
      %v299 = vld [vmem:[%s249 + $0x110] sm:$0xff]
      %v300 = vld [vmem:[%s249 + $0x118] sm:$0xff]
      %v301 = vld [vmem:[%s249 + $0x120] sm:$0xff]
      %v302 = vld [vmem:[%s249 + $0x128] sm:$0xff]
      %v303 = vld [vmem:[%s249 + $0x130] sm:$0xff]
      %v304 = vld [vmem:[%s249 + $0x138] sm:$0xff]
      %v305 = vld [vmem:[%s249 + $0x140] sm:$0xff]
      %v306 = vld [vmem:[%s249 + $0x148] sm:$0xff]
      %v307 = vld [vmem:[%s249 + $0x150] sm:$0x1]
      %v308 = vld [vmem:[%s249 + $0x158] sm:$0x1]
      %v309 = vld [vmem:[%s249 + $0x160] sm:$0x1]
      %v310 = vld [vmem:[%s249 + $0x168] sm:$0x1]
      %v311 = vld [vmem:[%s249 + $0x170] sm:$0x1]
      %v312 = vld [vmem:[%s249 + $0x178] sm:$0x1]
      %v313 = vld [vmem:[%s249 + $0x180] sm:$0x1]
      %v314 = vld [vmem:[%s1] sm:$0xff]
      %v315 = vld [vmem:[%s1 + $0x8] sm:$0xff]
      %v316 = vld [vmem:[%s1 + $0x10] sm:$0xff]
      %v317 = vld [vmem:[%s1 + $0x18] sm:$0xff]
      %v318 = vld [vmem:[%s1 + $0x20] sm:$0xff]
      %v319 = vld [vmem:[%s1 + $0x28] sm:$0xff]
      %v320 = vld [vmem:[%s1 + $0x30] sm:$0xff]
      %v321 = vld [vmem:[%s1 + $0x38] sm:$0xff]
      %v322 = vld [vmem:[%s1 + $0x40] sm:$0xff]
      %v323 = vld [vmem:[%s1 + $0x48] sm:$0xff]
      %v324 = vld [vmem:[%s1 + $0x50] sm:$0xff]
      %v325 = vld [vmem:[%s1 + $0x58] sm:$0xff]
      %v326 = vld [vmem:[%s1 + $0x60] sm:$0xff]
      %v327 = vld [vmem:[%s1 + $0x68] sm:$0xff]
      %v328 = vld [vmem:[%s1 + $0x70] sm:$0xff]
      %v329 = vld [vmem:[%s1 + $0x78] sm:$0xff]
      %v330 = vld [vmem:[%s1 + $0x80] sm:$0xff]
      %v331 = vld [vmem:[%s1 + $0x88] sm:$0xff]
      %v332 = vld [vmem:[%s1 + $0x90] sm:$0xff]
      %v333 = vld [vmem:[%s1 + $0x98] sm:$0xff]
      %v334 = vld [vmem:[%s1 + $0xa0] sm:$0xff]
      %v335 = vld [vmem:[%s1 + $0xa8] sm:$0xff]
      %v336 = vld [vmem:[%s1 + $0xb0] sm:$0xff]
      %v337 = vld [vmem:[%s1 + $0xb8] sm:$0xff]
      %v338 = vld [vmem:[%s1 + $0xc0] sm:$0xff]
      %v339 = vld [vmem:[%s1 + $0xc8] sm:$0xff]
      %v340 = vld [vmem:[%s1 + $0xd0] sm:$0xff]
      %v341 = vld [vmem:[%s1 + $0xd8] sm:$0xff]
      %v342 = vld [vmem:[%s1 + $0xe0] sm:$0xff]
      %v343 = vld [vmem:[%s1 + $0xe8] sm:$0xff]
      %v344 = vld [vmem:[%s1 + $0xf0] sm:$0xff]
      %v345 = vld [vmem:[%s1 + $0xf8] sm:$0xff]
      %v346 = vld [vmem:[%s1 + $0x100] sm:$0xff]
      %v347 = vld [vmem:[%s1 + $0x108] sm:$0xff]
      %v348 = vld [vmem:[%s1 + $0x110] sm:$0xff]
      %v349 = vld [vmem:[%s1 + $0x118] sm:$0xff]
      %v350 = vld [vmem:[%s1 + $0x120] sm:$0xff]
      %v351 = vld [vmem:[%s1 + $0x128] sm:$0xff]
      %v352 = vld [vmem:[%s1 + $0x130] sm:$0xff]
      %v353 = vld [vmem:[%s1 + $0x138] sm:$0xff]
      %v354 = vld [vmem:[%s1 + $0x140] sm:$0xff]
      %v355 = vld [vmem:[%s1 + $0x148] sm:$0xff]
      %v356 = vld [vmem:[%s1 + $0x150] sm:$0xff]
      %v357 = vld [vmem:[%s1 + $0x158] sm:$0xff]
      %v358 = vld [vmem:[%s1 + $0x160] sm:$0xff]
      %v359 = vld [vmem:[%s1 + $0x168] sm:$0xff]
      %v360 = vld [vmem:[%s1 + $0x170] sm:$0xff]
      %v361 = vld [vmem:[%s1 + $0x178] sm:$0xff]
      %v362 = vld [vmem:[%s1 + $0x180] sm:$0xff]
      %v363 = vld [vmem:[%s1 + $0x188] sm:$0xff]
      %v364 = vld [vmem:[%s1 + $0x190] sm:$0xff]
      %v365 = vld [vmem:[%s1 + $0x198] sm:$0xff]
      %v366 = vld [vmem:[%s1 + $0x1a0] sm:$0xff]
      %v367 = vld [vmem:[%s1 + $0x1a8] sm:$0xff]
      %v368 = vld [vmem:[%s1 + $0x1b0] sm:$0xff]
      %v369 = vld [vmem:[%s1 + $0x1b8] sm:$0xff]
      %v370 = vld [vmem:[%s1 + $0x1c0] sm:$0xff]
      %v371 = vld [vmem:[%s1 + $0x1c8] sm:$0xff]
      %v372 = vld [vmem:[%s1 + $0x1d0] sm:$0xff]
      %v373 = vld [vmem:[%s1 + $0x1d8] sm:$0xff]
      %v374 = vld [vmem:[%s1 + $0x1e0] sm:$0xff]
      %v375 = vld [vmem:[%s1 + $0x1e8] sm:$0xff]
      %v376 = vld [vmem:[%s1 + $0x1f0] sm:$0xff]
      %v377 = vld [vmem:[%s1 + $0x1f8] sm:$0xff]
      %v378 = vld [vmem:[%s1 + $0x200] sm:$0xff]
      %v379 = vld [vmem:[%s1 + $0x208] sm:$0xff]
      %v380 = vld [vmem:[%s1 + $0x210] sm:$0xff]
      %v381 = vld [vmem:[%s1 + $0x218] sm:$0xff]
      %v382 = vld [vmem:[%s1 + $0x220] sm:$0xff]
      %v383 = vld [vmem:[%s1 + $0x228] sm:$0xff]
      %v384 = vld [vmem:[%s1 + $0x230] sm:$0xff]
      %v385 = vld [vmem:[%s1 + $0x238] sm:$0xff]
      %v386 = vld [vmem:[%s1 + $0x240] sm:$0xff]
      %v387 = vld [vmem:[%s1 + $0x248] sm:$0xff]
      %v388 = vld [vmem:[%s1 + $0x250] sm:$0xff]
      %v389 = vld [vmem:[%s1 + $0x258] sm:$0xff]
      %v390 = vld [vmem:[%s1 + $0x260] sm:$0xff]
      %v391 = vld [vmem:[%s1 + $0x268] sm:$0xff]
      %v392 = vld [vmem:[%s1 + $0x270] sm:$0xff]
      %v393 = vld [vmem:[%s1 + $0x278] sm:$0xff]
      %v394 = vld [vmem:[%s1 + $0x280] sm:$0xff]
      %v395 = vld [vmem:[%s1 + $0x288] sm:$0xff]
      %v396 = vld [vmem:[%s1 + $0x290] sm:$0xff]
      %v397 = vld [vmem:[%s1 + $0x298] sm:$0xff]
      %v398 = vld [vmem:[%s1 + $0x2a0] sm:$0xff]
      %v399 = vld [vmem:[%s1 + $0x2a8] sm:$0xff]
      %v400 = vld [vmem:[%s1 + $0x2b0] sm:$0xff]
      %v401 = vld [vmem:[%s1 + $0x2b8] sm:$0xff]
      %v402 = vld [vmem:[%s1 + $0x2c0] sm:$0xff]
      %v403 = vld [vmem:[%s1 + $0x2c8] sm:$0xff]
      %v404 = vld [vmem:[%s1 + $0x2d0] sm:$0xff]
      %v405 = vld [vmem:[%s1 + $0x2d8] sm:$0xff]
      %v406 = vld [vmem:[%s1 + $0x2e0] sm:$0xff]
      %v407 = vld [vmem:[%s1 + $0x2e8] sm:$0xff]
      %v408 = vld [vmem:[%s1 + $0x2f0] sm:$0xff]
      %v409 = vld [vmem:[%s1 + $0x2f8] sm:$0xff]
      %v410 = vld [vmem:[%s1 + $0x300] sm:$0xff]
      %v411 = vld [vmem:[%s1 + $0x308] sm:$0xff]
      %v412 = vld [vmem:[%s1 + $0x310] sm:$0xff]
      %v413 = vld [vmem:[%s1 + $0x318] sm:$0xff]
      %v414 = vld [vmem:[%s1 + $0x320] sm:$0xff]
      %v415 = vld [vmem:[%s1 + $0x328] sm:$0xff]
      %v416 = vld [vmem:[%s1 + $0x330] sm:$0xff]
      %v417 = vld [vmem:[%s1 + $0x338] sm:$0xff]
      %v418 = vld [vmem:[%s1 + $0x340] sm:$0xff]
      %v419 = vld [vmem:[%s1 + $0x348] sm:$0xff]
      %v420 = vld [vmem:[%s1 + $0x350] sm:$0xff]
      %v421 = vld [vmem:[%s1 + $0x358] sm:$0xff]
      %v422 = vld [vmem:[%s2] sm:$0x1]
      %v424 = vlaneseq
      %v425 = vshrl.u32 %v424, 7
      %v426 = vsub.s32 0, %v425
      %v427 = vrot.slane %v422, %v426
      %vm429 = vcmask 785408
      %v431 = vsel %vm429, %v271, 0
      %v434 = vsel %vm429, %v278, 0
      %v437 = vsel %vm429, %v285, 0
      %v440 = vsel %vm429, %v292, 0
      %v443 = vsel %vm429, %v299, 0
      %v446 = vsel %vm429, %v306, 0
      %v449 = vsel %vm429, %v313, 0
      %451 = vmatprep.subr.mxu0 0.0
      %452 = vmatpush1.msra.mxu0 %v314
      %453 = vmatprep.subr.mxu0 0.0
      %454 = vmatpush1.msra.mxu0 %v315
      %455 = vmatprep.subr.mxu0 0.0
      %456 = vmatpush1.msra.mxu0 %v316
      %457 = vmatprep.subr.mxu0 0.0
      %458 = vmatpush1.msra.mxu0 %v317
      %459 = vmatprep.subr.mxu0 0.0
      %460 = vmatpush1.msra.mxu0 %v318
      %461 = vmatprep.subr.mxu0 0.0
      %462 = vmatpush1.msra.mxu0 %v319
      %463 = vmatprep.subr.mxu0 0.0
      %464 = vmatpush1.msra.mxu0 %v320
      %465 = vmatprep.subr.mxu0 0.0
      %466 = vmatpush1.msra.mxu0 %v321
      %467 = vmatprep.subr.mxu0 0.0
      %468 = vmatpush1.msra.mxu0 %v322
      %469 = vmatprep.subr.mxu0 0.0
      %470 = vmatpush1.msra.mxu0 %v323
      %471 = vmatprep.subr.mxu0 0.0
      %472 = vmatpush1.msra.mxu0 %v324
      %473 = vmatprep.subr.mxu0 0.0
      %474 = vmatpush1.msra.mxu0 %v325
      %475 = vmatprep.subr.mxu0 0.0
      %476 = vmatpush1.msra.mxu0 %v326
      %477 = vmatprep.subr.mxu0 0.0
      %478 = vmatpush1.msra.mxu0 %v327
      %479 = vmatprep.subr.mxu0 0.0
      %480 = vmatpush1.msra.mxu0 %v328
      %481 = vmatprep.subr.mxu0 0.0
      %482 = vmatpush1.msra.mxu0 %v329
      %483 = vmatprep.subr.mxu0 0.0
      %484 = vmatpush1.msra.mxu0 %v330
      %485 = vmatprep.subr.mxu0 0.0
      %486 = vmatpush1.msra.mxu0 %v331
      %487 = vmatprep.subr.mxu0 0.0
      %488 = vmatpush1.msra.mxu0 %v332
      %489 = vmatprep.subr.mxu0 0.0
      %490 = vmatpush1.msra.mxu0 %v333
      %491 = vmatprep.subr.mxu0 0.0
      %492 = vmatpush1.msra.mxu0 %v334
      %493 = vmatprep.subr.mxu0 0.0
      %494 = vmatpush1.msra.mxu0 %v335
      %495 = vmatprep.subr.mxu0 0.0
      %496 = vmatpush1.msra.mxu0 %v336
      %497 = vmatprep.subr.mxu0 0.0
      %498 = vmatpush1.msra.mxu0 %v337
      %499 = vmatprep.subr.mxu0 0.0
      %500 = vmatpush1.msra.mxu0 %v338
      %501 = vmatprep.subr.mxu0 0.0
      %502 = vmatpush1.msra.mxu0 %v339
      %503 = vmatprep.subr.mxu0 0.0
      %504 = vmatpush1.msra.mxu0 %v340
      %505 = vmatprep.subr.mxu0 0.0
      %506 = vmatpush1.msra.mxu0 %v341
      %507 = vmatprep.subr.mxu0 0.0
      %508 = vmatpush1.msra.mxu0 %v342
      %509 = vmatprep.subr.mxu0 0.0
      %510 = vmatpush1.msra.mxu0 %v343
      %511 = vmatprep.subr.mxu0 0.0
      %512 = vmatpush1.msra.mxu0 %v344
      %513 = vmatprep.subr.mxu0 0.0
      %514 = vmatpush1.msra.mxu0 %v345
      %515 = vmatprep.mubr.f32.mxu0 %v266
      %516 = vmatmul.mubr.f32.gmra.mrb[0].mxu0 %v265
      %v517 = vpop.f32.mrb[0].mxu0
      %v518 = vadd.f32 %v427, %v517
      %v519 = vpop.f32.mrb[0].mxu0
      %520 = vmatprep.mubr.f32.mxu0 %v273
      %521 = vmatmul.mubr.f32.gmra.mrb[0].mxu0 %v272
      %v522 = vpop.f32.mrb[0].mxu0
      %v523 = vadd.f32 %v427, %v522
      %v524 = vpop.f32.mrb[0].mxu0
      %525 = vmatprep.mubr.f32.mxu0 %v280
      %526 = vmatmul.mubr.f32.gmra.mrb[0].mxu0 %v279
      %v527 = vpop.f32.mrb[0].mxu0
      %v528 = vadd.f32 %v427, %v527
      %v529 = vpop.f32.mrb[0].mxu0
      %530 = vmatprep.mubr.f32.mxu0 %v287
      %531 = vmatmul.mubr.f32.gmra.mrb[0].mxu0 %v286
      %v532 = vpop.f32.mrb[0].mxu0
      %v533 = vadd.f32 %v427, %v532
      %v534 = vpop.f32.mrb[0].mxu0
      %535 = vmatprep.mubr.f32.mxu0 %v294
      %536 = vmatmul.mubr.f32.gmra.mrb[0].mxu0 %v293
      %v537 = vpop.f32.mrb[0].mxu0
      %v538 = vadd.f32 %v427, %v537
      %v539 = vpop.f32.mrb[0].mxu0
      %540 = vmatprep.mubr.f32.mxu0 %v301
      %541 = vmatmul.mubr.f32.gmra.mrb[0].mxu0 %v300
      %v542 = vpop.f32.mrb[0].mxu0
      %v543 = vadd.f32 %v427, %v542
      %v544 = vpop.f32.mrb[0].mxu0
      %545 = vmatprep.mubr.f32.mxu0 %v308
      %546 = vmatmul.mubr.f32.gmra.mrb[0].mxu0 %v307
      %v547 = vpop.f32.mrb[0].mxu0
      %v548 = vadd.f32 %v427, %v547
      %v549 = vpop.f32.mrb[0].mxu0
      %550 = vdwg.mxu0
      %551 = vmatprep.subr.mxu0 0.0
      %552 = vmatpush1.msra.mxu0 %v346
      %553 = vmatprep.subr.mxu0 0.0
      %554 = vmatpush1.msra.mxu0 %v347
      %555 = vmatprep.subr.mxu0 0.0
      %556 = vmatpush1.msra.mxu0 %v348
      %557 = vmatprep.subr.mxu0 0.0
      %558 = vmatpush1.msra.mxu0 %v349
      %559 = vmatprep.subr.mxu0 0.0
      %560 = vmatpush1.msra.mxu0 %v350
      %561 = vmatprep.subr.mxu0 0.0
      %562 = vmatpush1.msra.mxu0 %v351
      %563 = vmatprep.subr.mxu0 0.0
      %564 = vmatpush1.msra.mxu0 %v352
      %565 = vmatprep.subr.mxu0 0.0
      %566 = vmatpush1.msra.mxu0 %v353
      %567 = vmatprep.subr.mxu0 0.0
      %568 = vmatpush1.msra.mxu0 %v354
      %569 = vmatprep.subr.mxu0 0.0
      %570 = vmatpush1.msra.mxu0 %v355
      %571 = vmatprep.subr.mxu0 0.0
      %572 = vmatpush1.msra.mxu0 %v356
      %573 = vmatprep.subr.mxu0 0.0
      %574 = vmatpush1.msra.mxu0 %v357
      %575 = vmatprep.subr.mxu0 0.0
      %576 = vmatpush1.msra.mxu0 %v358
      %577 = vmatprep.subr.mxu0 0.0
      %578 = vmatpush1.msra.mxu0 %v359
      %579 = vmatprep.subr.mxu0 0.0
      %580 = vmatpush1.msra.mxu0 %v360
      %581 = vmatprep.subr.mxu0 0.0
      %582 = vmatpush1.msra.mxu0 %v361
      %583 = vmatprep.subr.mxu0 0.0
      %584 = vmatpush1.msra.mxu0 %v362
      %585 = vmatprep.subr.mxu0 0.0
      %586 = vmatpush1.msra.mxu0 %v363
      %587 = vmatprep.subr.mxu0 0.0
      %588 = vmatpush1.msra.mxu0 %v364
      %589 = vmatprep.subr.mxu0 0.0
      %590 = vmatpush1.msra.mxu0 %v365
      %591 = vmatprep.subr.mxu0 0.0
      %592 = vmatpush1.msra.mxu0 %v366
      %593 = vmatprep.subr.mxu0 0.0
      %594 = vmatpush1.msra.mxu0 %v367
      %595 = vmatprep.subr.mxu0 0.0
      %596 = vmatpush1.msra.mxu0 %v368
      %597 = vmatprep.subr.mxu0 0.0
      %598 = vmatpush1.msra.mxu0 %v369
      %599 = vmatprep.subr.mxu0 0.0
      %600 = vmatpush1.msra.mxu0 %v370
      %601 = vmatprep.subr.mxu0 0.0
      %602 = vmatpush1.msra.mxu0 %v371
      %603 = vmatprep.subr.mxu0 0.0
      %604 = vmatpush1.msra.mxu0 %v372
      %605 = vmatprep.subr.mxu0 0.0
      %606 = vmatpush1.msra.mxu0 %v373
      %607 = vmatprep.subr.mxu0 0.0
      %608 = vmatpush1.msra.mxu0 %v374
      %609 = vmatprep.subr.mxu0 0.0
      %610 = vmatpush1.msra.mxu0 %v375
      %611 = vmatprep.subr.mxu0 0.0
      %612 = vmatpush1.msra.mxu0 %v376
      %613 = vmatprep.subr.mxu0 0.0
      %614 = vmatpush1.msra.mxu0 %v377
      %615 = vmatprep.mubr.f32.mxu0 %v268
      %616 = vmatmul.mubr.f32.gmra.mrb[0].mxu0 %v267
      %v617 = vpop.f32.mrb[0].mxu0
      %v618 = vadd.f32 %v518, %v617
      %v619 = vpop.f32.mrb[0].mxu0
      %620 = vmatprep.mubr.f32.mxu0 %v275
      %621 = vmatmul.mubr.f32.gmra.mrb[0].mxu0 %v274
      %v622 = vpop.f32.mrb[0].mxu0
      %v623 = vadd.f32 %v523, %v622
      %v624 = vpop.f32.mrb[0].mxu0
      %625 = vmatprep.mubr.f32.mxu0 %v282
      %626 = vmatmul.mubr.f32.gmra.mrb[0].mxu0 %v281
      %v627 = vpop.f32.mrb[0].mxu0
      %v628 = vadd.f32 %v528, %v627
      %v629 = vpop.f32.mrb[0].mxu0
      %630 = vmatprep.mubr.f32.mxu0 %v289
      %631 = vmatmul.mubr.f32.gmra.mrb[0].mxu0 %v288
      %v632 = vpop.f32.mrb[0].mxu0
      %v633 = vadd.f32 %v533, %v632
      %v634 = vpop.f32.mrb[0].mxu0
      %635 = vmatprep.mubr.f32.mxu0 %v296
      %636 = vmatmul.mubr.f32.gmra.mrb[0].mxu0 %v295
      %v637 = vpop.f32.mrb[0].mxu0
      %v638 = vadd.f32 %v538, %v637
      %v639 = vpop.f32.mrb[0].mxu0
      %640 = vmatprep.mubr.f32.mxu0 %v303
      %641 = vmatmul.mubr.f32.gmra.mrb[0].mxu0 %v302
      %v642 = vpop.f32.mrb[0].mxu0
      %v643 = vadd.f32 %v543, %v642
      %v644 = vpop.f32.mrb[0].mxu0
      %645 = vmatprep.mubr.f32.mxu0 %v310
      %646 = vmatmul.mubr.f32.gmra.mrb[0].mxu0 %v309
      %v647 = vpop.f32.mrb[0].mxu0
      %v648 = vadd.f32 %v548, %v647
      %v649 = vpop.f32.mrb[0].mxu0
      %650 = vdwg.mxu0
      %651 = vmatprep.subr.mxu0 0.0
      %652 = vmatpush1.msra.mxu0 %v378
      %653 = vmatprep.subr.mxu0 0.0
      %654 = vmatpush1.msra.mxu0 %v379
      %655 = vmatprep.subr.mxu0 0.0
      %656 = vmatpush1.msra.mxu0 %v380
      %657 = vmatprep.subr.mxu0 0.0
      %658 = vmatpush1.msra.mxu0 %v381
      %659 = vmatprep.subr.mxu0 0.0
      %660 = vmatpush1.msra.mxu0 %v382
      %661 = vmatprep.subr.mxu0 0.0
      %662 = vmatpush1.msra.mxu0 %v383
      %663 = vmatprep.subr.mxu0 0.0
      %664 = vmatpush1.msra.mxu0 %v384
      %665 = vmatprep.subr.mxu0 0.0
      %666 = vmatpush1.msra.mxu0 %v385
      %667 = vmatprep.subr.mxu0 0.0
      %668 = vmatpush1.msra.mxu0 %v386
      %669 = vmatprep.subr.mxu0 0.0
      %670 = vmatpush1.msra.mxu0 %v387
      %671 = vmatprep.subr.mxu0 0.0
      %672 = vmatpush1.msra.mxu0 %v388
      %673 = vmatprep.subr.mxu0 0.0
      %674 = vmatpush1.msra.mxu0 %v389
      %675 = vmatprep.subr.mxu0 0.0
      %676 = vmatpush1.msra.mxu0 %v390
      %677 = vmatprep.subr.mxu0 0.0
      %678 = vmatpush1.msra.mxu0 %v391
      %679 = vmatprep.subr.mxu0 0.0
      %680 = vmatpush1.msra.mxu0 %v392
      %681 = vmatprep.subr.mxu0 0.0
      %682 = vmatpush1.msra.mxu0 %v393
      %683 = vmatprep.subr.mxu0 0.0
      %684 = vmatpush1.msra.mxu0 %v394
      %685 = vmatprep.subr.mxu0 0.0
      %686 = vmatpush1.msra.mxu0 %v395
      %687 = vmatprep.subr.mxu0 0.0
      %688 = vmatpush1.msra.mxu0 %v396
      %689 = vmatprep.subr.mxu0 0.0
      %690 = vmatpush1.msra.mxu0 %v397
      %691 = vmatprep.subr.mxu0 0.0
      %692 = vmatpush1.msra.mxu0 %v398
      %693 = vmatprep.subr.mxu0 0.0
      %694 = vmatpush1.msra.mxu0 %v399
      %695 = vmatprep.subr.mxu0 0.0
      %696 = vmatpush1.msra.mxu0 %v400
      %697 = vmatprep.subr.mxu0 0.0
      %698 = vmatpush1.msra.mxu0 %v401
      %699 = vmatprep.subr.mxu0 0.0
      %700 = vmatpush1.msra.mxu0 %v402
      %701 = vmatprep.subr.mxu0 0.0
      %702 = vmatpush1.msra.mxu0 %v403
      %703 = vmatprep.subr.mxu0 0.0
      %704 = vmatpush1.msra.mxu0 %v404
      %705 = vmatprep.subr.mxu0 0.0
      %706 = vmatpush1.msra.mxu0 %v405
      %707 = vmatprep.subr.mxu0 0.0
      %708 = vmatpush1.msra.mxu0 %v406
      %709 = vmatprep.subr.mxu0 0.0
      %710 = vmatpush1.msra.mxu0 %v407
      %711 = vmatprep.subr.mxu0 0.0
      %712 = vmatpush1.msra.mxu0 %v408
      %713 = vmatprep.subr.mxu0 0.0
      %714 = vmatpush1.msra.mxu0 %v409
      %715 = vmatprep.mubr.f32.mxu0 %v270
      %716 = vmatmul.mubr.f32.gmra.mrb[0].mxu0 %v269
      %v717 = vpop.f32.mrb[0].mxu0
      %v718 = vadd.f32 %v618, %v717
      %v719 = vpop.f32.mrb[0].mxu0
      %720 = vmatprep.mubr.f32.mxu0 %v277
      %721 = vmatmul.mubr.f32.gmra.mrb[0].mxu0 %v276
      %v722 = vpop.f32.mrb[0].mxu0
      %v723 = vadd.f32 %v623, %v722
      %v724 = vpop.f32.mrb[0].mxu0
      %725 = vmatprep.mubr.f32.mxu0 %v284
      %726 = vmatmul.mubr.f32.gmra.mrb[0].mxu0 %v283
      %v727 = vpop.f32.mrb[0].mxu0
      %v728 = vadd.f32 %v628, %v727
      %v729 = vpop.f32.mrb[0].mxu0
      %730 = vmatprep.mubr.f32.mxu0 %v291
      %731 = vmatmul.mubr.f32.gmra.mrb[0].mxu0 %v290
      %v732 = vpop.f32.mrb[0].mxu0
      %v733 = vadd.f32 %v633, %v732
      %v734 = vpop.f32.mrb[0].mxu0
      %735 = vmatprep.mubr.f32.mxu0 %v298
      %736 = vmatmul.mubr.f32.gmra.mrb[0].mxu0 %v297
      %v737 = vpop.f32.mrb[0].mxu0
      %v738 = vadd.f32 %v638, %v737
      %v739 = vpop.f32.mrb[0].mxu0
      %740 = vmatprep.mubr.f32.mxu0 %v305
      %741 = vmatmul.mubr.f32.gmra.mrb[0].mxu0 %v304
      %v742 = vpop.f32.mrb[0].mxu0
      %v743 = vadd.f32 %v643, %v742
      %v744 = vpop.f32.mrb[0].mxu0
      %745 = vmatprep.mubr.f32.mxu0 %v312
      %746 = vmatmul.mubr.f32.gmra.mrb[0].mxu0 %v311
      %v747 = vpop.f32.mrb[0].mxu0
      %v748 = vadd.f32 %v648, %v747
      %v749 = vpop.f32.mrb[0].mxu0
      %750 = vdwg.mxu0
      %751 = vmatprep.subr.mxu0 0.0
      %752 = vmatpush1.msra.mxu0 %v410
      %753 = vmatprep.subr.mxu0 0.0
      %754 = vmatpush1.msra.mxu0 %v411
      %755 = vmatprep.subr.mxu0 0.0
      %756 = vmatpush1.msra.mxu0 %v412
      %757 = vmatprep.subr.mxu0 0.0
      %758 = vmatpush1.msra.mxu0 %v413
      %759 = vmatprep.subr.mxu0 0.0
      %760 = vmatpush1.msra.mxu0 %v414
      %761 = vmatprep.subr.mxu0 0.0
      %762 = vmatpush1.msra.mxu0 %v415
      %763 = vmatprep.subr.mxu0 0.0
      %764 = vmatpush1.msra.mxu0 %v416
      %765 = vmatprep.subr.mxu0 0.0
      %766 = vmatpush1.msra.mxu0 %v417
      %767 = vmatprep.subr.mxu0 0.0
      %768 = vmatpush1.msra.mxu0 %v418
      %769 = vmatprep.subr.mxu0 0.0
      %770 = vmatpush1.msra.mxu0 %v419
      %771 = vmatprep.subr.mxu0 0.0
      %772 = vmatpush1.msra.mxu0 %v420
      %773 = vmatprep.subr.mxu0 0.0
      %774 = vmatpush1.msra.mxu0 %v421
      %775 = vmatprep.subr.mxu0 0.0
      %776 = vmatpush1.msra.mxu0 0.0
      %777 = vmatprep.subr.mxu0 0.0
      %778 = vmatpush1.msra.mxu0 0.0
      %779 = vmatprep.subr.mxu0 0.0
      %780 = vmatpush1.msra.mxu0 0.0
      %781 = vmatprep.subr.mxu0 0.0
      %782 = vmatpush1.msra.mxu0 0.0
      %783 = vmatprep.subr.mxu0 0.0
      %784 = vmatpush1.msra.mxu0 0.0
      %785 = vmatprep.subr.mxu0 0.0
      %786 = vmatpush1.msra.mxu0 0.0
      %787 = vmatprep.subr.mxu0 0.0
      %788 = vmatpush1.msra.mxu0 0.0
      %789 = vmatprep.subr.mxu0 0.0
      %790 = vmatpush1.msra.mxu0 0.0
      %791 = vmatprep.subr.mxu0 0.0
      %792 = vmatpush1.msra.mxu0 0.0
      %793 = vmatprep.subr.mxu0 0.0
      %794 = vmatpush1.msra.mxu0 0.0
      %795 = vmatprep.subr.mxu0 0.0
      %796 = vmatpush1.msra.mxu0 0.0
      %797 = vmatprep.subr.mxu0 0.0
      %798 = vmatpush1.msra.mxu0 0.0
      %799 = vmatprep.subr.mxu0 0.0
      %800 = vmatpush1.msra.mxu0 0.0
      %801 = vmatprep.subr.mxu0 0.0
      %802 = vmatpush1.msra.mxu0 0.0
      %803 = vmatprep.subr.mxu0 0.0
      %804 = vmatpush1.msra.mxu0 0.0
      %805 = vmatprep.subr.mxu0 0.0
      %806 = vmatpush1.msra.mxu0 0.0
      %807 = vmatprep.subr.mxu0 0.0
      %808 = vmatpush1.msra.mxu0 0.0
      %809 = vmatprep.subr.mxu0 0.0
      %810 = vmatpush1.msra.mxu0 0.0
      %811 = vmatprep.subr.mxu0 0.0
      %812 = vmatpush1.msra.mxu0 0.0
      %813 = vmatprep.subr.mxu0 0.0
      %814 = vmatpush1.msra.mxu0 0.0
      %815 = vmatprep.mubr.f32.mxu0 0.0
      %816 = vmatmul.mubr.f32.gmra.mrb[0].mxu0 %v431
      %v817 = vpop.f32.mrb[0].mxu0
      %v818 = vadd.f32 %v718, %v817
      %v819 = vpop.f32.mrb[0].mxu0
      %820 = vmatprep.mubr.f32.mxu0 0.0
      %821 = vmatmul.mubr.f32.gmra.mrb[0].mxu0 %v434
      %v822 = vpop.f32.mrb[0].mxu0
      %v823 = vadd.f32 %v723, %v822
      %v824 = vpop.f32.mrb[0].mxu0
      %825 = vmatprep.mubr.f32.mxu0 0.0
      %826 = vmatmul.mubr.f32.gmra.mrb[0].mxu0 %v437
      %v827 = vpop.f32.mrb[0].mxu0
      %v828 = vadd.f32 %v728, %v827
      %v829 = vpop.f32.mrb[0].mxu0
      %830 = vmatprep.mubr.f32.mxu0 0.0
      %831 = vmatmul.mubr.f32.gmra.mrb[0].mxu0 %v440
      %v832 = vpop.f32.mrb[0].mxu0
      %v833 = vadd.f32 %v733, %v832
      %v834 = vpop.f32.mrb[0].mxu0
      %835 = vmatprep.mubr.f32.mxu0 0.0
      %836 = vmatmul.mubr.f32.gmra.mrb[0].mxu0 %v443
      %v837 = vpop.f32.mrb[0].mxu0
      %v838 = vadd.f32 %v738, %v837
      %v839 = vpop.f32.mrb[0].mxu0
      %840 = vmatprep.mubr.f32.mxu0 0.0
      %841 = vmatmul.mubr.f32.gmra.mrb[0].mxu0 %v446
      %v842 = vpop.f32.mrb[0].mxu0
      %v843 = vadd.f32 %v743, %v842
      %v844 = vpop.f32.mrb[0].mxu0
      %845 = vmatprep.mubr.f32.mxu0 0.0
      %846 = vmatmul.mubr.f32.gmra.mrb[0].mxu0 %v449
      %v847 = vpop.f32.mrb[0].mxu0
      %v848 = vadd.f32 %v748, %v847
      %v849 = vpop.f32.mrb[0].mxu0
      %850 = vdwg.mxu0
      %v851 = vmax.f32 %v818, 0.0
      %v852 = vmax.f32 %v823, 0.0
      %v853 = vmax.f32 %v828, 0.0
      %v854 = vmax.f32 %v833, 0.0
      %v855 = vmax.f32 %v838, 0.0
      %v856 = vmax.f32 %v843, 0.0
      %v857 = vmax.f32 %v848, 0.0
      %v858 = vld [vmem:[%s254] sm:$0xff]
      %v859 = vld [vmem:[%s254 + $0x8] sm:$0xff]
      %v860 = vld [vmem:[%s254 + $0x10] sm:$0xff]
      %v861 = vld [vmem:[%s254 + $0x18] sm:$0xff]
      %v862 = vld [vmem:[%s254 + $0x20] sm:$0xff]
      %v863 = vld [vmem:[%s254 + $0x28] sm:$0xff]
      %v864 = vld [vmem:[%s254 + $0x30] sm:$0xff]
      %v865 = vld [vmem:[%s254 + $0x38] sm:$0xff]
      %v866 = vld [vmem:[%s254 + $0x40] sm:$0xff]
      %v867 = vld [vmem:[%s254 + $0x48] sm:$0xff]
      %v868 = vld [vmem:[%s254 + $0x50] sm:$0xff]
      %v869 = vld [vmem:[%s254 + $0x58] sm:$0xff]
      %v870 = vld [vmem:[%s254 + $0x60] sm:$0xff]
      %v871 = vld [vmem:[%s254 + $0x68] sm:$0xff]
      %v872 = vld [vmem:[%s254 + $0x70] sm:$0xff]
      %v873 = vld [vmem:[%s254 + $0x78] sm:$0xff]
      %v874 = vld [vmem:[%s254 + $0x80] sm:$0xff]
      %v875 = vld [vmem:[%s254 + $0x88] sm:$0xff]
      %v876 = vld [vmem:[%s254 + $0x90] sm:$0x1]
      %v877 = vld [vmem:[%s254 + $0x98] sm:$0x1]
      %v878 = vld [vmem:[%s254 + $0xa0] sm:$0x1]
      %879 = vst [vmem:[%s264] sm:$0xff] %v858
      %880 = vst [vmem:[%s264 + $0x8] sm:$0xff] %v859
      %881 = vst [vmem:[%s264 + $0x10] sm:$0xff] %v860
      %882 = vst [vmem:[%s264 + $0x20] sm:$0xff] %v861
      %883 = vst [vmem:[%s264 + $0x28] sm:$0xff] %v862
      %884 = vst [vmem:[%s264 + $0x30] sm:$0xff] %v863
      %885 = vst [vmem:[%s264 + $0x40] sm:$0xff] %v864
      %886 = vst [vmem:[%s264 + $0x48] sm:$0xff] %v865
      %887 = vst [vmem:[%s264 + $0x50] sm:$0xff] %v866
      %888 = vst [vmem:[%s264 + $0x60] sm:$0xff] %v867
      %889 = vst [vmem:[%s264 + $0x68] sm:$0xff] %v868
      %890 = vst [vmem:[%s264 + $0x70] sm:$0xff] %v869
      %891 = vst [vmem:[%s264 + $0x80] sm:$0xff] %v870
      %892 = vst [vmem:[%s264 + $0x88] sm:$0xff] %v871
      %893 = vst [vmem:[%s264 + $0x90] sm:$0xff] %v872
      %894 = vst [vmem:[%s264 + $0xa0] sm:$0xff] %v873
      %895 = vst [vmem:[%s264 + $0xa8] sm:$0xff] %v874
      %896 = vst [vmem:[%s264 + $0xb0] sm:$0xff] %v875
      %897 = vst [vmem:[%s264 + $0xc0] sm:$0x1] %v876
      %898 = vst [vmem:[%s264 + $0xc8] sm:$0x1] %v877
      %899 = vst [vmem:[%s264 + $0xd0] sm:$0x1] %v878
      %900 = vst.msk [vmem:[%s264 + $0x18] sm:$0xff] %vm429, %v851
      %901 = vst.msk [vmem:[%s264 + $0x38] sm:$0xff] %vm429, %v852
      %902 = vst.msk [vmem:[%s264 + $0x58] sm:$0xff] %vm429, %v853
      %903 = vst.msk [vmem:[%s264 + $0x78] sm:$0xff] %vm429, %v854
      %904 = vst.msk [vmem:[%s264 + $0x98] sm:$0xff] %vm429, %v855
      %905 = vst.msk [vmem:[%s264 + $0xb8] sm:$0xff] %vm429, %v856
      %vm906 = vcmask 778240
      %907 = vst.msk [vmem:[%s264 + $0xd8] sm:$0x1] %vm906, %v857
      %v908 = vld [vmem:[%s259] sm:$0xff]
      %v909 = vld [vmem:[%s259 + $0x8] sm:$0xff]
      %v910 = vld [vmem:[%s259 + $0x10] sm:$0xff]
      %v911 = vld [vmem:[%s259 + $0x18] sm:$0xff]
      %v912 = vld [vmem:[%s259 + $0x20] sm:$0xff]
      %v913 = vld [vmem:[%s259 + $0x28] sm:$0xff]
      %v914 = vld [vmem:[%s259 + $0x30] sm:$0x1]
      %922 = vrot.lane.b32.xlu0 %v908, 96
      %v923 = vpop.permute.xlu0 %922
      %924 = vrot.lane.b32.xlu0 %v909, 96
      %v925 = vpop.permute.xlu0 %924
      %926 = vrot.lane.b32.xlu0 %v910, 96
      %v927 = vpop.permute.xlu0 %926
      %928 = vrot.lane.b32.xlu0 %v911, 96
      %v929 = vpop.permute.xlu0 %928
      %930 = vrot.lane.b32.xlu0 %v912, 96
      %v931 = vpop.permute.xlu0 %930
      %932 = vrot.lane.b32.xlu0 %v913, 96
      %v933 = vpop.permute.xlu0 %932
      %934 = vrot.lane.b32.xlu0 %v914, 96
      %v935 = vpop.permute.xlu0 %934
      %vm943 = vcmask 818944
      %944 = vst.msk [vmem:[%s264 + $0x18] sm:$0xff] %vm943, %v923
      %945 = vst.msk [vmem:[%s264 + $0x38] sm:$0xff] %vm943, %v925
      %946 = vst.msk [vmem:[%s264 + $0x58] sm:$0xff] %vm943, %v927
      %947 = vst.msk [vmem:[%s264 + $0x78] sm:$0xff] %vm943, %v929
      %948 = vst.msk [vmem:[%s264 + $0x98] sm:$0xff] %vm943, %v931
      %949 = vst.msk [vmem:[%s264 + $0xb8] sm:$0xff] %vm943, %v933
      %vm950 = vcmask 811776
      %951 = vst.msk [vmem:[%s264 + $0xd8] sm:$0x1] %vm950, %v935
      %p952 = scmp.lt.s32.totalorder %s16, 1
      %s953 = scalar_select %p952, %s16, 1
      %s954 = smul.addr %s953, 28
      %s955 = smul.addr %s954, 8
      %s956 = scalar_lea.vmem %s5, %s955
      // Predicated region
      $region41: #{inception_b_forward.5} parent=39 // pred_check
        %p957 = pneg %p154
      $region42: #{inception_b_forward.5} parent=39 // pred_check_branch
        %959 = sbr.rel (%p957) target = $region44
      $region43: #{inception_b_forward.5} parent=39 // pred_region
        _
      $region44: #{inception_b_forward.5} parent=39 // pred_fallthru
        _
    $region40: #{inception_b_forward.5} parent=5 // pred_fallthru
      _
    %p960 = scmp.le.s32.totalorder 2, %s11
    // Predicated region
    $region45: #{inception_b_forward.5} parent=5 // pred_check
      %p961 = pneg %p960
    $region46: #{inception_b_forward.5} parent=5 // pred_check_branch
      %963 = sbr.rel (%p961) target = $region48
    $region47: #{inception_b_forward.5} parent=5 // pred_region
      %s964 = ssub.s32 %s11, 2
      // Predicated region
      $region49: #{inception_b_forward.5} parent=47 // pred_check
        %p965 = pneg %p160
      $region50: #{inception_b_forward.5} parent=47 // pred_check_branch
        %967 = sbr.rel (%p965) target = $region52
      $region51: #{inception_b_forward.5} parent=47 // pred_region
        %p968 = scmp.lt.s32.totalorder %s17, 1
        %s969 = scalar_select %p968, %s17, 1
        %s970 = smul.addr %s969, 28
        %s971 = smul.addr %s970, 8
        %s972 = scalar_lea.vmem %s5, %s971
      $region52: #{inception_b_forward.5} parent=47 // pred_fallthru
        _
    $region48: #{inception_b_forward.5} parent=5 // pred_fallthru
      _
  $region6: #{inception_b_forward.5} parent=0 // loop_footer
    %s15 = sadd.s32 1, %s11
  $region7: #{inception_b_forward.5} parent=0 // loop_footer_branch
    %10 = sbr.rel target = $region3
  $region8: #{inception_b_forward.5} parent=0 // loop_exit
    _

</llo_original>
